<compile_context>
chip_gen: v5e
topology: v5e:2x2
jax: 0.10.0
libtpu: 0.0.40
codegen_flags: <defaults>
</compile_context>

<pallas_src>
import functools

import jax
import jax.numpy as jnp
from jax import lax
from jax.experimental import pallas as pl
from jax.experimental.pallas import tpu as pltpu


# ---------------------------------------------------------------------------
# Fused Pallas kernel: synthetic encoder + cosine scoring for one batch tile
# ---------------------------------------------------------------------------

def _matchsum_fused_kernel(x_ref, mask_ref, w_ref, b_ref, score_ref,
                           pooled_acc, msum_acc, *, group_rows):
    """Grid = (batch_tiles, L_tiles); one batch tile x one L chunk per step.

    x_ref:      (N, LT, H)  bf16  embedded tokens, N = batch_tile * group_rows
                                  (row layout per batch element:
                                   0 = doc, 1 = summary, 2.. = candidates,
                                   trailing rows = all-pad dummies)
    mask_ref:   (N, 1, LT)  bf16  attention-mask chunk (1 = real token)
    w_ref:      (H, H)      bf16  dense weight
    b_ref:      (1, H)      f32   dense bias
    score_ref:  (1, TB, GP) f32   lane-padded cosine scores (GP = 128-multiple)
    pooled_acc: (N, H)      f32   VMEM scratch: masked-sum accumulator over L
    msum_acc:   (N, 1)      f32   VMEM scratch: real-token count accumulator
    """
    lt = pl.program_id(1)

    @pl.when(lt == 0)
    def _():
        pooled_acc[...] = jnp.zeros_like(pooled_acc)
        msum_acc[...] = jnp.zeros_like(msum_acc)

    # --- masked pooling over this L chunk, bf16 on the MXU, f32 accumulate --
    x = x_ref[...]                                        # (N, LT, H) bf16
    m = mask_ref[...]                                     # (N, 1, LT) bf16
    # pooled_acc[n, h] += sum_l m[n, l] * x[n, l, h]   (batched (1,LT)x(LT,H))
    pooled_acc[...] += lax.dot_general(
        m, x, (((2,), (1,)), ((0,), (0,))),
        preferred_element_type=jnp.float32)[:, 0, :]      # (N, H) f32
    msum_acc[...] += jnp.sum(m[:, 0, :].astype(jnp.float32),
                             axis=-1, keepdims=True)      # (N, 1)

    # --- finalize: dense + tanh head, then Gram-based cosine scoring --------
    @pl.when(lt == pl.num_programs(1) - 1)
    def _():
        n, hidden = pooled_acc.shape
        tb = n // group_rows

        # approx=True keeps the divide on the EUP (~2^-12 rel error, harmless
        # for cosine ranking); set approx=False for bit-closeness.
        inv = pl.reciprocal(jnp.maximum(msum_acc[...], 1.0), approx=True)
        pooled = pooled_acc[...] * inv                    # (N, H) f32

        h = jnp.dot(pooled.astype(jnp.bfloat16), w_ref[...],
                    preferred_element_type=jnp.float32) + b_ref[...]
        emb = jnp.tanh(h)                                 # (N, H) f32

        # One Gram matmul per batch element: gram[t, i, j] = emb_i . emb_j.
        # Row 0 is the document, so row 0 of the Gram gives all doc.row dots
        # and the diagonal gives every squared norm -> no emb*emb VPU pass.
        emb3 = emb.reshape(tb, group_rows, hidden)        # tile-aligned split
        gram = lax.dot_general(
            emb3, emb3, (((2,), (2,)), ((0,), (0,))),
            preferred_element_type=jnp.float32)           # (TB, GR, GR)
        dots = gram[:, 0, :]                              # doc . row_g
        doc_nsq = dots[:, 0:1]                            # ||doc||^2
        g = group_rows
        eye = (lax.broadcasted_iota(jnp.int32, (g, g), 0) ==
               lax.broadcasted_iota(jnp.int32, (g, g), 1)).astype(jnp.float32)
        nsq = jnp.sum(gram * eye[None, :, :], axis=-1)    # ||row_g||^2

        # torch.cosine_similarity: dot / max(||a||*||b||, eps), eps = 1e-8.
        cos = dots * lax.rsqrt(jnp.maximum(doc_nsq * nsq, 1e-16))  # (TB, GR)

        gp = score_ref.shape[-1]
        if gp > g:                                        # lane-dense store
            cos = jnp.concatenate(
                [cos, jnp.zeros((tb, gp - g), jnp.float32)], axis=-1)
        score_ref[0] = cos


# ---------------------------------------------------------------------------
# MatchSum forward (glue in plain JAX, everything else in one Pallas call)
# ---------------------------------------------------------------------------

def init_params(key, vocab_size, hidden_size):
    k1, k2, k3 = jax.random.split(key, 3)
    return {
        # bf16 table / weight: halves the dominant HBM stream, native MXU dtype.
        "embed": (jax.random.normal(k1, (vocab_size, hidden_size), jnp.float32)
                  * 0.1).astype(jnp.bfloat16),
        "w": (jax.random.normal(k2, (hidden_size, hidden_size), jnp.float32)
              * 0.1).astype(jnp.bfloat16),
        "b": jax.random.normal(k3, (1, hidden_size), jnp.float32) * 0.1,
    }


def _round_up(x, m):
    return (x + m - 1) // m * m


def matchsum_forward(params, text_id, candidate_id, summary_id,
                     *, batch_tile=None, l_tile=None):
    batch_size, seq_len = text_id.shape
    candidate_num = candidate_id.shape[1]
    hidden = params["w"].shape[0]
    group = 2 + candidate_num                # doc, summary, candidates
    group_rows = _round_up(group, 8)         # sublane-aligned rows per element
    group_pad = _round_up(group, 128)        # lane-dense score block width

    # ---- tiling choices ----------------------------------------------------
    if l_tile is None:
        l_tile = 128 if seq_len % 128 == 0 else seq_len
    assert seq_len % l_tile == 0
    assert l_tile == seq_len or l_tile % 128 == 0
    num_lt = seq_len // l_tile

    if batch_tile is None:
        # Aim for ~256 MXU rows per step (v6e/v7x 256-wide MXU, fine on v5e)
        # while keeping >= 2 parallel grid steps so both v7x TCs get work.
        target = max(1, 256 // group_rows)
        batch_tile = 1
        for d in range(1, batch_size + 1):
            if (batch_size % d == 0 and d <= target
                    and batch_size // d >= min(2, batch_size)):
                batch_tile = d
    assert batch_size % batch_tile == 0
    num_bt = batch_size // batch_tile
    rows_tile = batch_tile * group_rows

    # ---- build the (doc, summary, candidates, dummy-pad) row groups --------
    pad_id = jnp.where(text_id[0, 0] == 0, 1, 0).astype(text_id.dtype)
    ids = jnp.concatenate(
        [text_id[:, None, :], summary_id[:, None, :], candidate_id], axis=1)
    if group_rows > group:                   # all-pad dummy rows -> mask == 0
        pad_rows = jnp.full((batch_size, group_rows - group, seq_len), pad_id,
                            dtype=ids.dtype)
        ids = jnp.concatenate([ids, pad_rows], axis=1)           # (B, GR, L)
    mask = (ids != pad_id).astype(jnp.bfloat16)                  # (B, GR, L)

    # TODO(synk): the pretrained BERT/RoBERTa encoder has no Pallas equivalent
    # (synthetic encoder used instead); the embedding row-gather also stays in
    # XLA — at real vocab/seq sizes an in-kernel DMA gather (ids via scalar
    # prefetch + HBM-resident table) would remove this (B,GR,L,H) round trip.
    x = jnp.take(params["embed"], ids, axis=0)                   # (B,GR,L,H) bf16

    # Pre-shaped so the kernel needs no unaligned reshapes.
    x = x.reshape(batch_size * group_rows, seq_len, hidden)      # (B*GR, L, H)
    mask = mask.reshape(batch_size * group_rows, 1, seq_len)     # (B*GR, 1, L)

    scores = pl.pallas_call(
        functools.partial(_matchsum_fused_kernel, group_rows=group_rows),
        out_shape=jax.ShapeDtypeStruct((num_bt, batch_tile, group_pad),
                                       jnp.float32),
        grid=(num_bt, num_lt),
        in_specs=[
            pl.BlockSpec((rows_tile, l_tile, hidden), lambda t, l: (t, l, 0)),
            pl.BlockSpec((rows_tile, 1, l_tile), lambda t, l: (t, 0, l)),
            # W / b: constant index map -> fetched once per core.
            # (On v7x, pl.Buffered(1) here would also drop their 2nd buffer.)
            pl.BlockSpec((hidden, hidden), lambda t, l: (0, 0)),
            pl.BlockSpec((1, hidden), lambda t, l: (0, 0)),
        ],
        out_specs=pl.BlockSpec((1, batch_tile, group_pad),
                               lambda t, l: (t, 0, 0)),
        scratch_shapes=[
            pltpu.VMEM((rows_tile, hidden), jnp.float32),   # pooled-sum acc
            pltpu.VMEM((rows_tile, 1), jnp.float32),        # token-count acc
        ],
        compiler_params=pltpu.CompilerParams(
            dimension_semantics=("parallel", "arbitrary"),
            vmem_limit_bytes=64 * 1024 * 1024),
    )(x, mask, params["w"], params["b"])

    scores = scores.reshape(batch_size, group_pad)[:, :group]    # (B, G)
    return {"score": scores[:, 2:], "summary_score": scores[:, 1]}


# ---------------------------------------------------------------------------
# Pure-JAX reference (same synthetic encoder) for correctness checking
# ---------------------------------------------------------------------------

def matchsum_reference(params, text_id, candidate_id, summary_id):
    pad_id = jnp.where(text_id[0, 0] == 0, 1, 0).astype(text_id.dtype)
    ids = jnp.concatenate(
        [text_id[:, None, :], summary_id[:, None, :], candidate_id], axis=1)
    mask = (ids != pad_id).astype(jnp.float32)                   # (B, G, L)
    x = jnp.take(params["embed"], ids, axis=0).astype(jnp.float32)
    msum = jnp.maximum(jnp.sum(mask, axis=-1, keepdims=True), 1.0)
    pooled = jnp.sum(x * mask[..., None], axis=2) / msum         # (B, G, H)
    emb = jnp.tanh(jnp.dot(pooled.astype(jnp.bfloat16), params["w"],
                           preferred_element_type=jnp.float32) + params["b"])
    doc = emb[:, 0:1, :]
    dots = jnp.sum(doc * emb, axis=-1)
    norms = jnp.sqrt(jnp.sum(emb * emb, axis=-1))
    cos = dots / jnp.maximum(norms[:, 0:1] * norms, 1e-8)
    return {"score": cos[:, 2:], "summary_score": cos[:, 1]}


# ---------------------------------------------------------------------------
# Main
# ---------------------------------------------------------------------------

if __name__ == "__main__":
    key = jax.random.PRNGKey(0)

    batch = 4
    candidate_num = 4
    seq_len = 256          # 2 L-tiles of 128 -> exercises the accumulator path
    hidden = 128           # lane-dense (multiple of 128)
    vocab = 64

    kp, kt, kc, ks = jax.random.split(key, 4)
    params = init_params(kp, vocab, hidden)

    # Token ids in [2, vocab); pad_id resolves to 0 since text_id[0,0] != 0.
    text_id = jax.random.randint(kt, (batch, seq_len), 2, vocab, dtype=jnp.int32)
    candidate_id = jax.random.randint(kc, (batch, candidate_num, seq_len), 2,
                                      vocab, dtype=jnp.int32)
    summary_id = jax.random.randint(ks, (batch, seq_len), 2, vocab,
                                    dtype=jnp.int32)
    # Trailing pads of different lengths to exercise the masking.
    text_id = text_id.at[:, -32:].set(0)
    summary_id = summary_id.at[:, -192:].set(0)
    candidate_id = candidate_id.at[:, :, -64:].set(0)

    forward = jax.jit(matchsum_forward)
    out = forward(params, text_id, candidate_id, summary_id)
    out = jax.tree_util.tree_map(jax.block_until_ready, out)

    ref = jax.jit(matchsum_reference)(params, text_id, candidate_id, summary_id)

    assert out["score"].shape == (batch, candidate_num)
    assert out["summary_score"].shape == (batch,)
    assert bool(jnp.all(jnp.isfinite(out["score"])))
    assert bool(jnp.all(jnp.isfinite(out["summary_score"])))
    assert bool(jnp.allclose(out["score"], ref["score"], atol=2e-2, rtol=2e-2))
    assert bool(jnp.allclose(out["summary_score"], ref["summary_score"],
                             atol=2e-2, rtol=2e-2))

    print("KERNEL_OK")
</pallas_src>

<mosaic_0001>
module attributes {stable_mosaic.version = 11 : i64} {
  func.func @_matchsum_fused_kernel(%arg0: i32, %arg1: i32, %arg2: memref<16x128x128xbf16, #tpu.memory_space<vmem>>, %arg3: memref<16x1x128xbf16, #tpu.memory_space<vmem>>, %arg4: memref<128x128xbf16, #tpu.memory_space<vmem>>, %arg5: memref<1x128xf32, #tpu.memory_space<vmem>>, %arg6: memref<1x2x128xf32, #tpu.memory_space<vmem>>, %arg7: memref<16x128xf32, #tpu.memory_space<vmem>>, %arg8: memref<16x1xf32, #tpu.memory_space<vmem>>) attributes {dimension_semantics = [#tpu.dimension_semantics<parallel>, #tpu.dimension_semantics<arbitrary>], iteration_bounds = array<i64: 2, 2>, scalar_prefetch = 0 : i64, scratch_operands = 2 : i64, tpu.core_type = #tpu.core_type<tc>, window_params = [{transform_indices = @transform_0, window_bounds = array<i64: 16, 128, 128>}, {transform_indices = @transform_1, window_bounds = array<i64: 16, 1, 128>}, {pipeline_mode = #tpu.pipeline_mode<synchronous>, transform_indices = @transform_2, window_bounds = array<i64: 128, 128>}, {pipeline_mode = #tpu.pipeline_mode<synchronous>, transform_indices = @transform_3, window_bounds = array<i64: 1, 128>}, {transform_indices = @transform_4, window_bounds = array<i64: 1, 2, 128>}]} {
    %c0_i32 = arith.constant 0 : i32
    %0 = arith.cmpi eq, %arg1, %c0_i32 : i32
    %1 = arith.extui %0 : i1 to i32
    %c0_i32_0 = arith.constant 0 : i32
    %2 = arith.cmpi ne, %1, %c0_i32_0 : i32
    scf.if %2 {
      %cst_16 = arith.constant 0.000000e+00 : f32
      %20 = vector.broadcast %cst_16 : f32 to vector<16x128xf32>
      %c0_17 = arith.constant 0 : index
      %c0_18 = arith.constant 0 : index
      %21 = vector.load %arg7[%c0_17, %c0_18] : memref<16x128xf32, #tpu.memory_space<vmem>>, vector<16x128xf32>
      tpu.vector_store %arg7[%c0_17, %c0_18], %20 {strides = array<i32>} : memref<16x128xf32, #tpu.memory_space<vmem>>, vector<16x128xf32>,
      %cst_19 = arith.constant 0.000000e+00 : f32
      %22 = vector.broadcast %cst_19 : f32 to vector<16x1xf32>
      %c0_20 = arith.constant 0 : index
      %c0_21 = arith.constant 0 : index
      %23 = vector.load %arg8[%c0_20, %c0_21] : memref<16x1xf32, #tpu.memory_space<vmem>>, vector<16x1xf32>
      tpu.vector_store %arg8[%c0_20, %c0_21], %22 {strides = array<i32>} : memref<16x1xf32, #tpu.memory_space<vmem>>, vector<16x1xf32>,
    } else {
    }
    %c0 = arith.constant 0 : index
    %c0_1 = arith.constant 0 : index
    %c0_2 = arith.constant 0 : index
    %3 = vector.load %arg2[%c0, %c0_1, %c0_2] : memref<16x128x128xbf16, #tpu.memory_space<vmem>>, vector<16x128x128xbf16>
    %c0_3 = arith.constant 0 : index
    %c0_4 = arith.constant 0 : index
    %c0_5 = arith.constant 0 : index
    %4 = vector.load %arg3[%c0_3, %c0_4, %c0_5] : memref<16x1x128xbf16, #tpu.memory_space<vmem>>, vector<16x1x128xbf16>
    %c0_6 = arith.constant 0 : index
    %c0_7 = arith.constant 0 : index
    %5 = vector.load %arg7[%c0_6, %c0_7] : memref<16x128xf32, #tpu.memory_space<vmem>>, vector<16x128xf32>
    %cst = arith.constant dense<0.000000e+00> : vector<16x1x128xf32>
    %6 = tpu.matmul %4, %3, %cst {dimension_numbers = #tpu.dot_dimension_numbers<[2], [1], [1], [2], [0, 0, 0, 1, 1, 2], [0], [0]>} : vector<16x1x128xbf16>, vector<16x128x128xbf16>, vector<16x1x128xf32> -> vector<16x1x128xf32>
    %7 = vector.shape_cast %6 : vector<16x1x128xf32> to vector<16x128xf32>
    %8 = arith.addf %5, %7 : vector<16x128xf32>
    %c0_8 = arith.constant 0 : index
    %c0_9 = arith.constant 0 : index
    %9 = vector.load %arg7[%c0_8, %c0_9] : memref<16x128xf32, #tpu.memory_space<vmem>>, vector<16x128xf32>
    tpu.vector_store %arg7[%c0_8, %c0_9], %8 {strides = array<i32>} : memref<16x128xf32, #tpu.memory_space<vmem>>, vector<16x128xf32>,
    %c0_10 = arith.constant 0 : index
    %c0_11 = arith.constant 0 : index
    %10 = vector.load %arg8[%c0_10, %c0_11] : memref<16x1xf32, #tpu.memory_space<vmem>>, vector<16x1xf32>
    %11 = vector.shape_cast %4 : vector<16x1x128xbf16> to vector<16x128xbf16>
    %12 = arith.extf %11 : vector<16x128xbf16> to vector<16x128xf32>
    %cst_12 = arith.constant dense<0.000000e+00> : vector<16xf32>
    %13 = vector.multi_reduction <add>, %12, %cst_12 [1] : vector<16x128xf32> to vector<16xf32>
    %14 = vector.shape_cast %13 : vector<16xf32> to vector<16x1xf32>
    %15 = arith.addf %10, %14 : vector<16x1xf32>
    %c0_13 = arith.constant 0 : index
    %c0_14 = arith.constant 0 : index
    %16 = vector.load %arg8[%c0_13, %c0_14] : memref<16x1xf32, #tpu.memory_space<vmem>>, vector<16x1xf32>
    tpu.vector_store %arg8[%c0_13, %c0_14], %15 {strides = array<i32>} : memref<16x1xf32, #tpu.memory_space<vmem>>, vector<16x1xf32>,
    %c1_i32 = arith.constant 1 : i32
    %17 = arith.cmpi eq, %arg1, %c1_i32 : i32
    %18 = arith.extui %17 : i1 to i32
    %c0_i32_15 = arith.constant 0 : i32
    %19 = arith.cmpi ne, %18, %c0_i32_15 : i32
    scf.if %19 {
      %c0_16 = arith.constant 0 : index
      %c0_17 = arith.constant 0 : index
      %20 = vector.load %arg8[%c0_16, %c0_17] : memref<16x1xf32, #tpu.memory_space<vmem>>, vector<16x1xf32>
      %cst_18 = arith.constant 1.000000e+00 : f32
      %21 = vector.broadcast %cst_18 : f32 to vector<16x1xf32>
      %22 = arith.maximumf %20, %21 : vector<16x1xf32>
      %23 = tpu.reciprocal %22 {approx = true} : vector<16x1xf32> -> vector<16x1xf32>
      %c0_19 = arith.constant 0 : index
      %c0_20 = arith.constant 0 : index
      %24 = vector.load %arg7[%c0_19, %c0_20] : memref<16x128xf32, #tpu.memory_space<vmem>>, vector<16x128xf32>
      %25 = vector.broadcast %23 : vector<16x1xf32> to vector<16x128xf32>
      %26 = arith.mulf %24, %25 : vector<16x128xf32>
      %27 = arith.truncf %26 : vector<16x128xf32> to vector<16x128xbf16>
      %c0_21 = arith.constant 0 : index
      %c0_22 = arith.constant 0 : index
      %28 = vector.load %arg4[%c0_21, %c0_22] : memref<128x128xbf16, #tpu.memory_space<vmem>>, vector<128x128xbf16>
      %cst_23 = arith.constant dense<0.000000e+00> : vector<16x128xf32>
      %29 = tpu.matmul %27, %28, %cst_23 {dimension_numbers = #tpu.dot_dimension_numbers<[1], [0], [0], [1], [0, 0, 1, 1], [], []>} : vector<16x128xbf16>, vector<128x128xbf16>, vector<16x128xf32> -> vector<16x128xf32>
      %c0_24 = arith.constant 0 : index
      %c0_25 = arith.constant 0 : index
      %30 = vector.load %arg5[%c0_24, %c0_25] : memref<1x128xf32, #tpu.memory_space<vmem>>, vector<1x128xf32>
      %31 = vector.broadcast %30 : vector<1x128xf32> to vector<16x128xf32>
      %32 = arith.addf %29, %31 : vector<16x128xf32>
      %33 = math.tanh %32 : vector<16x128xf32>
      %34 = vector.shape_cast %33 : vector<16x128xf32> to vector<2x8x128xf32>
      %cst_26 = arith.constant dense<0.000000e+00> : vector<2x8x8xf32>
      %35 = tpu.matmul %34, %34, %cst_26 {dimension_numbers = #tpu.dot_dimension_numbers<[2], [2], [1], [1], [0, 0, 0, 1, 1, 1], [0], [0]>} : vector<2x8x128xf32>, vector<2x8x128xf32>, vector<2x8x8xf32> -> vector<2x8x8xf32>
      %36 = vector.extract_strided_slice %35 {offsets = [0, 0, 0], sizes = [2, 1, 8], strides = [1, 1, 1]} : vector<2x8x8xf32> to vector<2x1x8xf32>
      %37 = vector.shape_cast %36 : vector<2x1x8xf32> to vector<2x8xf32>
      %38 = vector.extract_strided_slice %37 {offsets = [0, 0], sizes = [2, 1], strides = [1, 1]} : vector<2x8xf32> to vector<2x1xf32>
      %39 = tpu.iota {dimensions = array<i32: 0>} : vector<8x8xi32>
      %40 = tpu.iota {dimensions = array<i32: 1>} : vector<8x8xi32>
      %41 = arith.cmpi eq, %39, %40 : vector<8x8xi32>
      %42 = arith.extui %41 : vector<8x8xi1> to vector<8x8xi32>
      %43 = arith.sitofp %42 : vector<8x8xi32> to vector<8x8xf32>
      %44 = vector.shape_cast %43 : vector<8x8xf32> to vector<1x8x8xf32>
      %45 = vector.broadcast %44 : vector<1x8x8xf32> to vector<2x8x8xf32>
      %46 = arith.mulf %35, %45 : vector<2x8x8xf32>
      %cst_27 = arith.constant dense<0.000000e+00> : vector<2x8xf32>
      %47 = vector.multi_reduction <add>, %46, %cst_27 [2] : vector<2x8x8xf32> to vector<2x8xf32>
      %48 = vector.broadcast %38 : vector<2x1xf32> to vector<2x8xf32>
      %49 = arith.mulf %48, %47 : vector<2x8xf32>
      %cst_28 = arith.constant 1.000000e-16 : f32
      %50 = vector.broadcast %cst_28 : f32 to vector<2x8xf32>
      %51 = arith.maximumf %49, %50 : vector<2x8xf32>
      %52 = math.rsqrt %51 : vector<2x8xf32>
      %53 = arith.mulf %37, %52 : vector<2x8xf32>
      %cst_29 = arith.constant 0.000000e+00 : f32
      %54 = vector.broadcast %cst_29 : f32 to vector<2x120xf32>
      %55 = tpu.concatenate %53, %54 in 1 : vector<2x8xf32>, vector<2x120xf32> -> vector<2x128xf32>
      %c0_30 = arith.constant 0 : index
      %c0_31 = arith.constant 0 : index
      %c0_32 = arith.constant 0 : index
      %56 = vector.load %arg6[%c0_30, %c0_31, %c0_32] : memref<1x2x128xf32, #tpu.memory_space<vmem>>, vector<1x2x128xf32>
      %57 = vector.shape_cast %56 : vector<1x2x128xf32> to vector<2x128xf32>
      %58 = vector.shape_cast %55 : vector<2x128xf32> to vector<1x2x128xf32>
      tpu.vector_store %arg6[%c0_30, %c0_31, %c0_32], %58 {strides = array<i32>} : memref<1x2x128xf32, #tpu.memory_space<vmem>>, vector<1x2x128xf32>,
    } else {
    }
    return
  }
  func.func @transform_0(%arg0: i32, %arg1: i32) -> (i32, i32, i32) {
    %c0_i32 = arith.constant 0 : i32
    %c0_i32_0 = arith.constant 0 : i32
    return %arg0, %arg1, %c0_i32 : i32, i32, i32
  }
  func.func @transform_1(%arg0: i32, %arg1: i32) -> (i32, i32, i32) {
    %c0_i32 = arith.constant 0 : i32
    %c0_i32_0 = arith.constant 0 : i32
    return %arg0, %c0_i32, %arg1 : i32, i32, i32
  }
  func.func @transform_2(%arg0: i32, %arg1: i32) -> (i32, i32) {
    %c0_i32 = arith.constant 0 : i32
    %c0_i32_0 = arith.constant 0 : i32
    %c0_i32_1 = arith.constant 0 : i32
    return %c0_i32, %c0_i32_0 : i32, i32
  }
  func.func @transform_3(%arg0: i32, %arg1: i32) -> (i32, i32) {
    %c0_i32 = arith.constant 0 : i32
    %c0_i32_0 = arith.constant 0 : i32
    %c0_i32_1 = arith.constant 0 : i32
    return %c0_i32, %c0_i32_0 : i32, i32
  }
  func.func @transform_4(%arg0: i32, %arg1: i32) -> (i32, i32, i32) {
    %c0_i32 = arith.constant 0 : i32
    %c0_i32_0 = arith.constant 0 : i32
    %c0_i32_1 = arith.constant 0 : i32
    return %arg0, %c0_i32, %c0_i32_0 : i32, i32, i32
  }
}

</mosaic_0001>

<llo_original>
// kernel: matchsum_forward.1
$region0: #{matchsum_forward.1}
  #allocation0 [shape = 'u32[]', space=smem, size = 0x4, offset = 0x4, fixed_abs, tag = 'smem constant byte address 0x4 - core index']
  #allocation1 [shape = 'u32[72,128]{1,0:T(1,128)}', space=vmem, size = 0x9000, scoped, tag = 'internal scratch']
  #allocation2 [shape = 'f32[16,128]{1,0:T(8,128)}', space=vmem, size = 0x2000, scoped, tag = 'scratch operand']
  #allocation3 [shape = 'f32[16,1]{1,0:T(8,128)}', space=vmem, size = 0x2000, scoped, tag = 'scratch operand']
  %s0 = inlined_call_operand.vmem [shape: bf16[32,256,128], index: 0, kind: input, shape index: {}]
  %s1 = inlined_call_operand.vmem [shape: bf16[32,1,256], index: 1, kind: input, shape index: {}]
  %s2 = inlined_call_operand.vmem [shape: bf16[128,128], index: 2, kind: input, shape index: {}]
  %s3 = inlined_call_operand.vmem [shape: f32[1,128], index: 3, kind: input, shape index: {}]
  %s4 = inlined_call_operand.vmem [shape: f32[2,2,128], index: 4, kind: output, shape index: {}]
  %s5 = sld [smem:[#allocation0]]
  $region150: #{matchsum_forward.1} parent=0
    _
  %s7 = ssub.s32 1, %s5
  %s8 = scalar_select 0, %s7, %s5
  $region1: #{matchsum_forward.1} parent=0
    #allocation4 [shape = 'u8[1048576]{0}', space=vmem, size = 0x100000, scoped, tag = 'input window, operand 0']
    #allocation5 [shape = 'u8[16384]{0}', space=vmem, size = 0x4000, scoped, tag = 'input window, operand 1']
    loop: start=0, step=1, limit=6
    $region2: #{matchsum_forward.1} parent=1 // loop_pre_header
      _
    $region3: #{matchsum_forward.1} parent=1 // loop_header
      %s10 = sphi 0, %s14
      %p11 = scmp.ge.s32.totalorder %s10, 6
      %s17 = sphi 0, %s29
      %s18 = sphi 0, %s25
      %s19 = sphi 0, %s17
      %s20 = sphi 0, %s18
      %s21 = sphi 0, %s19
      %s22 = sphi 0, %s20
      %s34 = sphi 0, %s36
      %s37 = sphi 0, %s34
      %s38 = sphi 0, %s37
      %s54 = sphi 0, %s38
      %s62 = sphi 0, %s64
      %s65 = sphi 0, %s62
      %s66 = sphi 0, %s65
      %s82 = sphi 0, %s66
      %s86 = sphi 0, %s86
      %s88 = sphi 0, %s86
      %s89 = sphi 0, %s88
      %s103 = sphi 0, %s89
      %s107 = sphi 0, %s107
      %s109 = sphi 0, %s107
      %s110 = sphi 0, %s109
      %s124 = sphi 0, %s110
      %s130 = sphi 0, %s132
      %s133 = sphi 0, %s130
      %s134 = sphi 0, %s133
      %s150 = sphi 0, %s134
    $region4: #{matchsum_forward.1} parent=1 // loop_header_branch
      %13 = sbr.rel (%p11) target = $region8
    $region5: #{matchsum_forward.1} parent=1 // loop_body
      %s15 = ssub.s32 %s10, 1
      %s16 = ssub.s32 %s10, 2
      %s23 = sadd.s32 1, %s18
      %p24 = scmp.ge.s32.totalorder %s23, 2
      %s25 = scalar_select %p24, 0, %s23
      %s26 = sadd.s32 1, %s17
      %s27 = scalar_select %p24, %s26, %s17
      %p28 = scmp.ge.s32.totalorder %s27, 2
      %s29 = scalar_select %p28, 0, %s27
      %s30 = ssub.s32 %s17, %s29
      %s31 = ssub.s32 %s18, %s25
      %s32 = sor.u32 %s30, %s31
      %p33 = scmp.eq.s32.totalorder %s32, 0
      %s35 = sadd.s32 %s34, 1
      %s36 = scalar_select %p33, %s34, %s35
      %p39 = pneg %p33
      %p40 = scmp.eq.s32.totalorder %s10, 3
      %p41 = por %p39, %p40
      %p42 = scmp.ne.s32.totalorder %s34, %s37
      %p43 = scmp.eq.s32.totalorder %s10, 0
      %p44 = por %p42, %p43
      %p45 = scmp.ne.s32.totalorder %s34, %s37
      %p46 = scmp.eq.s32.totalorder %s15, 3
      %p47 = por %p45, %p46
      %p48 = scmp.ne.s32.totalorder %s37, %s38
      %p49 = scmp.eq.s32.totalorder %s15, 0
      %p50 = por %p48, %p49
      %p51 = scmp.ne.s32.totalorder %s37, %s38
      %p52 = scmp.eq.s32.totalorder %s16, 3
      %p53 = por %p51, %p52
      %p55 = scmp.ne.s32.totalorder %s38, %s54
      %p56 = scmp.eq.s32.totalorder %s16, 0
      %p57 = por %p55, %p56
      %s58 = ssub.s32 %s17, %s29
      %s59 = ssub.s32 %s18, %s25
      %s60 = sor.u32 %s58, %s59
      %p61 = scmp.eq.s32.totalorder %s60, 0
      %s63 = sadd.s32 %s62, 1
      %s64 = scalar_select %p61, %s62, %s63
      %p67 = pneg %p61
      %p68 = scmp.eq.s32.totalorder %s10, 3
      %p69 = por %p67, %p68
      %p70 = scmp.ne.s32.totalorder %s62, %s65
      %p71 = scmp.eq.s32.totalorder %s10, 0
      %p72 = por %p70, %p71
      %p73 = scmp.ne.s32.totalorder %s62, %s65
      %p74 = scmp.eq.s32.totalorder %s15, 3
      %p75 = por %p73, %p74
      %p76 = scmp.ne.s32.totalorder %s65, %s66
      %p77 = scmp.eq.s32.totalorder %s15, 0
      %p78 = por %p76, %p77
      %p79 = scmp.ne.s32.totalorder %s65, %s66
      %p80 = scmp.eq.s32.totalorder %s16, 3
      %p81 = por %p79, %p80
      %p83 = scmp.ne.s32.totalorder %s66, %s82
      %p84 = scmp.eq.s32.totalorder %s16, 0
      %p85 = por %p83, %p84
      %s87 = sadd.s32 %s86, 1
      %p90 = scmp.eq.s32.totalorder %s10, 3
      %p91 = scmp.ne.s32.totalorder %s86, %s88
      %p92 = scmp.eq.s32.totalorder %s10, 0
      %p93 = por %p91, %p92
      %p94 = scmp.ne.s32.totalorder %s86, %s88
      %p95 = scmp.eq.s32.totalorder %s15, 3
      %p96 = por %p94, %p95
      %p97 = scmp.ne.s32.totalorder %s88, %s89
      %p98 = scmp.eq.s32.totalorder %s15, 0
      %p99 = por %p97, %p98
      %p100 = scmp.ne.s32.totalorder %s88, %s89
      %p101 = scmp.eq.s32.totalorder %s16, 3
      %p102 = por %p100, %p101
      %p104 = scmp.ne.s32.totalorder %s89, %s103
      %p105 = scmp.eq.s32.totalorder %s16, 0
      %p106 = por %p104, %p105
      %s108 = sadd.s32 %s107, 1
      %p111 = scmp.eq.s32.totalorder %s10, 3
      %p112 = scmp.ne.s32.totalorder %s107, %s109
      %p113 = scmp.eq.s32.totalorder %s10, 0
      %p114 = por %p112, %p113
      %p115 = scmp.ne.s32.totalorder %s107, %s109
      %p116 = scmp.eq.s32.totalorder %s15, 3
      %p117 = por %p115, %p116
      %p118 = scmp.ne.s32.totalorder %s109, %s110
      %p119 = scmp.eq.s32.totalorder %s15, 0
      %p120 = por %p118, %p119
      %p121 = scmp.ne.s32.totalorder %s109, %s110
      %p122 = scmp.eq.s32.totalorder %s16, 3
      %p123 = por %p121, %p122
      %p125 = scmp.ne.s32.totalorder %s110, %s124
      %p126 = scmp.eq.s32.totalorder %s16, 0
      %p127 = por %p125, %p126
      %s128 = ssub.s32 %s17, %s29
      %p129 = scmp.eq.s32.totalorder %s128, 0
      %s131 = sadd.s32 %s130, 1
      %s132 = scalar_select %p129, %s130, %s131
      %p135 = pneg %p129
      %p136 = scmp.eq.s32.totalorder %s10, 3
      %p137 = por %p135, %p136
      %p138 = scmp.ne.s32.totalorder %s130, %s133
      %p139 = scmp.eq.s32.totalorder %s10, 0
      %p140 = por %p138, %p139
      %p141 = scmp.ne.s32.totalorder %s130, %s133
      %p142 = scmp.eq.s32.totalorder %s15, 3
      %p143 = por %p141, %p142
      %p144 = scmp.ne.s32.totalorder %s133, %s134
      %p145 = scmp.eq.s32.totalorder %s15, 0
      %p146 = por %p144, %p145
      %p147 = scmp.ne.s32.totalorder %s133, %s134
      %p148 = scmp.eq.s32.totalorder %s16, 3
      %p149 = por %p147, %p148
      %p151 = scmp.ne.s32.totalorder %s134, %s150
      %p152 = scmp.eq.s32.totalorder %s16, 0
      %p153 = por %p151, %p152
      %p154 = scmp.le.s32.totalorder 1, %s10
      %p155 = scmp.lt.s32.totalorder %s10, 5
      %p156 = pnand %p154, %p155
      %p157 = pneg %p156
      // Predicated region
      $region9: #{matchsum_forward.1} parent=5 // pred_check
        _
      $region10: #{matchsum_forward.1} parent=5 // pred_check_branch
        %159 = sbr.rel (%p156) target = $region12
      $region11: #{matchsum_forward.1} parent=5 // pred_region
        %s160 = ssub.s32 %s10, 1
        // Predicated region
        $region13: #{matchsum_forward.1} parent=11 // pred_check
          %p161 = pneg %p99
        $region14: #{matchsum_forward.1} parent=11 // pred_check_branch
          %163 = sbr.rel (%p161) target = $region16
        $region15: #{matchsum_forward.1} parent=11 // pred_region
          _
        $region16: #{matchsum_forward.1} parent=11 // pred_fallthru
          _
        // Predicated region
        $region17: #{matchsum_forward.1} parent=11 // pred_check
          %p164 = pneg %p120
        $region18: #{matchsum_forward.1} parent=11 // pred_check_branch
          %166 = sbr.rel (%p164) target = $region20
        $region19: #{matchsum_forward.1} parent=11 // pred_region
          _
        $region20: #{matchsum_forward.1} parent=11 // pred_fallthru
          _
      $region12: #{matchsum_forward.1} parent=5 // pred_fallthru
        _
      %p167 = scmp.lt.s32.totalorder %s10, 4
      // Predicated region
      $region21: #{matchsum_forward.1} parent=5 // pred_check
        %p168 = pneg %p167
      $region22: #{matchsum_forward.1} parent=5 // pred_check_branch
        %170 = sbr.rel (%p168) target = $region24
      $region23: #{matchsum_forward.1} parent=5 // pred_region
        // Predicated region
        $region25: #{matchsum_forward.1} parent=23 // pred_check
          %p171 = pneg %p44
        $region26: #{matchsum_forward.1} parent=23 // pred_check_branch
          %173 = sbr.rel (%p171) target = $region28
        $region27: #{matchsum_forward.1} parent=23 // pred_region
          %s174 = sand.u32 %s34, 1
          %s175 = sand.u32 %s34, 1
          %s176 = smul.addr %s175, 1024
          %s177 = scalar_lea.vmem [#allocation4], %s176
          %s178 = smul.u32 16, %s17
          %s179 = smul.u32 16, %s18
          %s180 = smul.addr %s178, 32
          %s181 = sadd.s32 %s179, %s180
          %s182 = smul.addr %s181, 4
          %s183 = scalar_lea.vmem %s0, %s182
          // Predicated region
          $region29: #{matchsum_forward.1} parent=27 // pred_check
            _
          $region30: #{matchsum_forward.1} parent=27 // pred_check_branch
            %185 = sbr.rel (0) target = $region32
          $region31: #{matchsum_forward.1} parent=27 // pred_region
            // Predicated region
            $region33: #{matchsum_forward.1} parent=31 // pred_check
              _
            $region34: #{matchsum_forward.1} parent=31 // pred_check_branch
              %187 = sbr.rel target = $region36
            $region35: #{matchsum_forward.1} parent=31 // pred_region
              // Predicated region
              $region48: #{matchsum_forward.1} parent=35 // pred_check
                _
              $region49: #{matchsum_forward.1} parent=35 // pred_check_branch
                %713 = sbr.rel target = $region51
              $region50: #{matchsum_forward.1} parent=35 // pred_region
                loop: start=0, step=1, limit=0
                $region52: #{matchsum_forward.1} parent=50 // loop_pre_header
                  _
                $region53: #{matchsum_forward.1} parent=50 // loop_header
                  %s715 = sphi 0, %s719
                  %p716 = scmp.ge.s32.totalorder %s715, 0
                  %s720 = sphi 0, %s1237
                  %s721 = sphi %s183, %s1240
                  %s722 = sphi %s177, %s1241
                $region54: #{matchsum_forward.1} parent=50 // loop_header_branch
                  %718 = sbr.rel (%p716) target = $region58
                $region55: #{matchsum_forward.1} parent=50 // loop_body
                  %v723 = vld [vmem:[%s721] sm:$0xff]
                  %724 = vst [vmem:[%s722] sm:$0xff] %v723
                  %v725 = vld [vmem:[%s721 + $0x4] sm:$0xff]
                  %726 = vst [vmem:[%s722 + $0x4] sm:$0xff] %v725
                  %v727 = vld [vmem:[%s721 + $0x8] sm:$0xff]
                  %728 = vst [vmem:[%s722 + $0x8] sm:$0xff] %v727
                  %v729 = vld [vmem:[%s721 + $0xc] sm:$0xff]
                  %730 = vst [vmem:[%s722 + $0xc] sm:$0xff] %v729
                  %v731 = vld [vmem:[%s721 + $0x10] sm:$0xff]
                  %732 = vst [vmem:[%s722 + $0x10] sm:$0xff] %v731
                  %v733 = vld [vmem:[%s721 + $0x14] sm:$0xff]
                  %734 = vst [vmem:[%s722 + $0x14] sm:$0xff] %v733
                  %v735 = vld [vmem:[%s721 + $0x18] sm:$0xff]
                  %736 = vst [vmem:[%s722 + $0x18] sm:$0xff] %v735
                  %v737 = vld [vmem:[%s721 + $0x1c] sm:$0xff]
                  %738 = vst [vmem:[%s722 + $0x1c] sm:$0xff] %v737
                  %v739 = vld [vmem:[%s721 + $0x20] sm:$0xff]
                  %740 = vst [vmem:[%s722 + $0x20] sm:$0xff] %v739
                  %v741 = vld [vmem:[%s721 + $0x24] sm:$0xff]
                  %742 = vst [vmem:[%s722 + $0x24] sm:$0xff] %v741
                  %v743 = vld [vmem:[%s721 + $0x28] sm:$0xff]
                  %744 = vst [vmem:[%s722 + $0x28] sm:$0xff] %v743
                  %v745 = vld [vmem:[%s721 + $0x2c] sm:$0xff]
                  %746 = vst [vmem:[%s722 + $0x2c] sm:$0xff] %v745
                  %v747 = vld [vmem:[%s721 + $0x30] sm:$0xff]
                  %748 = vst [vmem:[%s722 + $0x30] sm:$0xff] %v747
                  %v749 = vld [vmem:[%s721 + $0x34] sm:$0xff]
                  %750 = vst [vmem:[%s722 + $0x34] sm:$0xff] %v749
                  %v751 = vld [vmem:[%s721 + $0x38] sm:$0xff]
                  %752 = vst [vmem:[%s722 + $0x38] sm:$0xff] %v751
                  %v753 = vld [vmem:[%s721 + $0x3c] sm:$0xff]
                  %754 = vst [vmem:[%s722 + $0x3c] sm:$0xff] %v753
                  %v755 = vld [vmem:[%s721 + $0x80] sm:$0xff]
                  %756 = vst [vmem:[%s722 + $0x40] sm:$0xff] %v755
                  %v757 = vld [vmem:[%s721 + $0x84] sm:$0xff]
                  %758 = vst [vmem:[%s722 + $0x44] sm:$0xff] %v757
                  %v759 = vld [vmem:[%s721 + $0x88] sm:$0xff]
                  %760 = vst [vmem:[%s722 + $0x48] sm:$0xff] %v759
                  %v761 = vld [vmem:[%s721 + $0x8c] sm:$0xff]
                  %762 = vst [vmem:[%s722 + $0x4c] sm:$0xff] %v761
                  %v763 = vld [vmem:[%s721 + $0x90] sm:$0xff]
                  %764 = vst [vmem:[%s722 + $0x50] sm:$0xff] %v763
                  %v765 = vld [vmem:[%s721 + $0x94] sm:$0xff]
                  %766 = vst [vmem:[%s722 + $0x54] sm:$0xff] %v765
                  %v767 = vld [vmem:[%s721 + $0x98] sm:$0xff]
                  %768 = vst [vmem:[%s722 + $0x58] sm:$0xff] %v767
                  %v769 = vld [vmem:[%s721 + $0x9c] sm:$0xff]
                  %770 = vst [vmem:[%s722 + $0x5c] sm:$0xff] %v769
                  %v771 = vld [vmem:[%s721 + $0xa0] sm:$0xff]
                  %772 = vst [vmem:[%s722 + $0x60] sm:$0xff] %v771
                  %v773 = vld [vmem:[%s721 + $0xa4] sm:$0xff]
                  %774 = vst [vmem:[%s722 + $0x64] sm:$0xff] %v773
                  %v775 = vld [vmem:[%s721 + $0xa8] sm:$0xff]
                  %776 = vst [vmem:[%s722 + $0x68] sm:$0xff] %v775
                  %v777 = vld [vmem:[%s721 + $0xac] sm:$0xff]
                  %778 = vst [vmem:[%s722 + $0x6c] sm:$0xff] %v777
                  %v779 = vld [vmem:[%s721 + $0xb0] sm:$0xff]
                  %780 = vst [vmem:[%s722 + $0x70] sm:$0xff] %v779
                  %v781 = vld [vmem:[%s721 + $0xb4] sm:$0xff]
                  %782 = vst [vmem:[%s722 + $0x74] sm:$0xff] %v781
                  %v783 = vld [vmem:[%s721 + $0xb8] sm:$0xff]
                  %784 = vst [vmem:[%s722 + $0x78] sm:$0xff] %v783
                  %v785 = vld [vmem:[%s721 + $0xbc] sm:$0xff]
                  %786 = vst [vmem:[%s722 + $0x7c] sm:$0xff] %v785
                  %v787 = vld [vmem:[%s721 + $0x100] sm:$0xff]
                  %788 = vst [vmem:[%s722 + $0x80] sm:$0xff] %v787
                  %v789 = vld [vmem:[%s721 + $0x104] sm:$0xff]
                  %790 = vst [vmem:[%s722 + $0x84] sm:$0xff] %v789
                  %v791 = vld [vmem:[%s721 + $0x108] sm:$0xff]
                  %792 = vst [vmem:[%s722 + $0x88] sm:$0xff] %v791
                  %v793 = vld [vmem:[%s721 + $0x10c] sm:$0xff]
                  %794 = vst [vmem:[%s722 + $0x8c] sm:$0xff] %v793
                  %v795 = vld [vmem:[%s721 + $0x110] sm:$0xff]
                  %796 = vst [vmem:[%s722 + $0x90] sm:$0xff] %v795
                  %v797 = vld [vmem:[%s721 + $0x114] sm:$0xff]
                  %798 = vst [vmem:[%s722 + $0x94] sm:$0xff] %v797
                  %v799 = vld [vmem:[%s721 + $0x118] sm:$0xff]
                  %800 = vst [vmem:[%s722 + $0x98] sm:$0xff] %v799
                  %v801 = vld [vmem:[%s721 + $0x11c] sm:$0xff]
                  %802 = vst [vmem:[%s722 + $0x9c] sm:$0xff] %v801
                  %v803 = vld [vmem:[%s721 + $0x120] sm:$0xff]
                  %804 = vst [vmem:[%s722 + $0xa0] sm:$0xff] %v803
                  %v805 = vld [vmem:[%s721 + $0x124] sm:$0xff]
                  %806 = vst [vmem:[%s722 + $0xa4] sm:$0xff] %v805
                  %v807 = vld [vmem:[%s721 + $0x128] sm:$0xff]
                  %808 = vst [vmem:[%s722 + $0xa8] sm:$0xff] %v807
                  %v809 = vld [vmem:[%s721 + $0x12c] sm:$0xff]
                  %810 = vst [vmem:[%s722 + $0xac] sm:$0xff] %v809
                  %v811 = vld [vmem:[%s721 + $0x130] sm:$0xff]
                  %812 = vst [vmem:[%s722 + $0xb0] sm:$0xff] %v811
                  %v813 = vld [vmem:[%s721 + $0x134] sm:$0xff]
                  %814 = vst [vmem:[%s722 + $0xb4] sm:$0xff] %v813
                  %v815 = vld [vmem:[%s721 + $0x138] sm:$0xff]
                  %816 = vst [vmem:[%s722 + $0xb8] sm:$0xff] %v815
                  %v817 = vld [vmem:[%s721 + $0x13c] sm:$0xff]
                  %818 = vst [vmem:[%s722 + $0xbc] sm:$0xff] %v817
                  %v819 = vld [vmem:[%s721 + $0x180] sm:$0xff]
                  %820 = vst [vmem:[%s722 + $0xc0] sm:$0xff] %v819
                  %v821 = vld [vmem:[%s721 + $0x184] sm:$0xff]
                  %822 = vst [vmem:[%s722 + $0xc4] sm:$0xff] %v821
                  %v823 = vld [vmem:[%s721 + $0x188] sm:$0xff]
                  %824 = vst [vmem:[%s722 + $0xc8] sm:$0xff] %v823
                  %v825 = vld [vmem:[%s721 + $0x18c] sm:$0xff]
                  %826 = vst [vmem:[%s722 + $0xcc] sm:$0xff] %v825
                  %v827 = vld [vmem:[%s721 + $0x190] sm:$0xff]
                  %828 = vst [vmem:[%s722 + $0xd0] sm:$0xff] %v827
                  %v829 = vld [vmem:[%s721 + $0x194] sm:$0xff]
                  %830 = vst [vmem:[%s722 + $0xd4] sm:$0xff] %v829
                  %v831 = vld [vmem:[%s721 + $0x198] sm:$0xff]
                  %832 = vst [vmem:[%s722 + $0xd8] sm:$0xff] %v831
                  %v833 = vld [vmem:[%s721 + $0x19c] sm:$0xff]
                  %834 = vst [vmem:[%s722 + $0xdc] sm:$0xff] %v833
                  %v835 = vld [vmem:[%s721 + $0x1a0] sm:$0xff]
                  %836 = vst [vmem:[%s722 + $0xe0] sm:$0xff] %v835
                  %v837 = vld [vmem:[%s721 + $0x1a4] sm:$0xff]
                  %838 = vst [vmem:[%s722 + $0xe4] sm:$0xff] %v837
                  %v839 = vld [vmem:[%s721 + $0x1a8] sm:$0xff]
                  %840 = vst [vmem:[%s722 + $0xe8] sm:$0xff] %v839
                  %v841 = vld [vmem:[%s721 + $0x1ac] sm:$0xff]
                  %842 = vst [vmem:[%s722 + $0xec] sm:$0xff] %v841
                  %v843 = vld [vmem:[%s721 + $0x1b0] sm:$0xff]
                  %844 = vst [vmem:[%s722 + $0xf0] sm:$0xff] %v843
                  %v845 = vld [vmem:[%s721 + $0x1b4] sm:$0xff]
                  %846 = vst [vmem:[%s722 + $0xf4] sm:$0xff] %v845
                  %v847 = vld [vmem:[%s721 + $0x1b8] sm:$0xff]
                  %848 = vst [vmem:[%s722 + $0xf8] sm:$0xff] %v847
                  %v849 = vld [vmem:[%s721 + $0x1bc] sm:$0xff]
                  %850 = vst [vmem:[%s722 + $0xfc] sm:$0xff] %v849
                  %v851 = vld [vmem:[%s721 + $0x200] sm:$0xff]
                  %852 = vst [vmem:[%s722 + $0x100] sm:$0xff] %v851
                  %v853 = vld [vmem:[%s721 + $0x204] sm:$0xff]
                  %854 = vst [vmem:[%s722 + $0x104] sm:$0xff] %v853
                  %v855 = vld [vmem:[%s721 + $0x208] sm:$0xff]
                  %856 = vst [vmem:[%s722 + $0x108] sm:$0xff] %v855
                  %v857 = vld [vmem:[%s721 + $0x20c] sm:$0xff]
                  %858 = vst [vmem:[%s722 + $0x10c] sm:$0xff] %v857
                  %v859 = vld [vmem:[%s721 + $0x210] sm:$0xff]
                  %860 = vst [vmem:[%s722 + $0x110] sm:$0xff] %v859
                  %v861 = vld [vmem:[%s721 + $0x214] sm:$0xff]
                  %862 = vst [vmem:[%s722 + $0x114] sm:$0xff] %v861
                  %v863 = vld [vmem:[%s721 + $0x218] sm:$0xff]
                  %864 = vst [vmem:[%s722 + $0x118] sm:$0xff] %v863
                  %v865 = vld [vmem:[%s721 + $0x21c] sm:$0xff]
                  %866 = vst [vmem:[%s722 + $0x11c] sm:$0xff] %v865
                  %v867 = vld [vmem:[%s721 + $0x220] sm:$0xff]
                  %868 = vst [vmem:[%s722 + $0x120] sm:$0xff] %v867
                  %v869 = vld [vmem:[%s721 + $0x224] sm:$0xff]
                  %870 = vst [vmem:[%s722 + $0x124] sm:$0xff] %v869
                  %v871 = vld [vmem:[%s721 + $0x228] sm:$0xff]
                  %872 = vst [vmem:[%s722 + $0x128] sm:$0xff] %v871
                  %v873 = vld [vmem:[%s721 + $0x22c] sm:$0xff]
                  %874 = vst [vmem:[%s722 + $0x12c] sm:$0xff] %v873
                  %v875 = vld [vmem:[%s721 + $0x230] sm:$0xff]
                  %876 = vst [vmem:[%s722 + $0x130] sm:$0xff] %v875
                  %v877 = vld [vmem:[%s721 + $0x234] sm:$0xff]
                  %878 = vst [vmem:[%s722 + $0x134] sm:$0xff] %v877
                  %v879 = vld [vmem:[%s721 + $0x238] sm:$0xff]
                  %880 = vst [vmem:[%s722 + $0x138] sm:$0xff] %v879
                  %v881 = vld [vmem:[%s721 + $0x23c] sm:$0xff]
                  %882 = vst [vmem:[%s722 + $0x13c] sm:$0xff] %v881
                  %v883 = vld [vmem:[%s721 + $0x280] sm:$0xff]
                  %884 = vst [vmem:[%s722 + $0x140] sm:$0xff] %v883
                  %v885 = vld [vmem:[%s721 + $0x284] sm:$0xff]
                  %886 = vst [vmem:[%s722 + $0x144] sm:$0xff] %v885
                  %v887 = vld [vmem:[%s721 + $0x288] sm:$0xff]
                  %888 = vst [vmem:[%s722 + $0x148] sm:$0xff] %v887
                  %v889 = vld [vmem:[%s721 + $0x28c] sm:$0xff]
                  %890 = vst [vmem:[%s722 + $0x14c] sm:$0xff] %v889
                  %v891 = vld [vmem:[%s721 + $0x290] sm:$0xff]
                  %892 = vst [vmem:[%s722 + $0x150] sm:$0xff] %v891
                  %v893 = vld [vmem:[%s721 + $0x294] sm:$0xff]
                  %894 = vst [vmem:[%s722 + $0x154] sm:$0xff] %v893
                  %v895 = vld [vmem:[%s721 + $0x298] sm:$0xff]
                  %896 = vst [vmem:[%s722 + $0x158] sm:$0xff] %v895
                  %v897 = vld [vmem:[%s721 + $0x29c] sm:$0xff]
                  %898 = vst [vmem:[%s722 + $0x15c] sm:$0xff] %v897
                  %v899 = vld [vmem:[%s721 + $0x2a0] sm:$0xff]
                  %900 = vst [vmem:[%s722 + $0x160] sm:$0xff] %v899
                  %v901 = vld [vmem:[%s721 + $0x2a4] sm:$0xff]
                  %902 = vst [vmem:[%s722 + $0x164] sm:$0xff] %v901
                  %v903 = vld [vmem:[%s721 + $0x2a8] sm:$0xff]
                  %904 = vst [vmem:[%s722 + $0x168] sm:$0xff] %v903
                  %v905 = vld [vmem:[%s721 + $0x2ac] sm:$0xff]
                  %906 = vst [vmem:[%s722 + $0x16c] sm:$0xff] %v905
                  %v907 = vld [vmem:[%s721 + $0x2b0] sm:$0xff]
                  %908 = vst [vmem:[%s722 + $0x170] sm:$0xff] %v907
                  %v909 = vld [vmem:[%s721 + $0x2b4] sm:$0xff]
                  %910 = vst [vmem:[%s722 + $0x174] sm:$0xff] %v909
                  %v911 = vld [vmem:[%s721 + $0x2b8] sm:$0xff]
                  %912 = vst [vmem:[%s722 + $0x178] sm:$0xff] %v911
                  %v913 = vld [vmem:[%s721 + $0x2bc] sm:$0xff]
                  %914 = vst [vmem:[%s722 + $0x17c] sm:$0xff] %v913
                  %v915 = vld [vmem:[%s721 + $0x300] sm:$0xff]
                  %916 = vst [vmem:[%s722 + $0x180] sm:$0xff] %v915
                  %v917 = vld [vmem:[%s721 + $0x304] sm:$0xff]
                  %918 = vst [vmem:[%s722 + $0x184] sm:$0xff] %v917
                  %v919 = vld [vmem:[%s721 + $0x308] sm:$0xff]
                  %920 = vst [vmem:[%s722 + $0x188] sm:$0xff] %v919
                  %v921 = vld [vmem:[%s721 + $0x30c] sm:$0xff]
                  %922 = vst [vmem:[%s722 + $0x18c] sm:$0xff] %v921
                  %v923 = vld [vmem:[%s721 + $0x310] sm:$0xff]
                  %924 = vst [vmem:[%s722 + $0x190] sm:$0xff] %v923
                  %v925 = vld [vmem:[%s721 + $0x314] sm:$0xff]
                  %926 = vst [vmem:[%s722 + $0x194] sm:$0xff] %v925
                  %v927 = vld [vmem:[%s721 + $0x318] sm:$0xff]
                  %928 = vst [vmem:[%s722 + $0x198] sm:$0xff] %v927
                  %v929 = vld [vmem:[%s721 + $0x31c] sm:$0xff]
                  %930 = vst [vmem:[%s722 + $0x19c] sm:$0xff] %v929
                  %v931 = vld [vmem:[%s721 + $0x320] sm:$0xff]
                  %932 = vst [vmem:[%s722 + $0x1a0] sm:$0xff] %v931
                  %v933 = vld [vmem:[%s721 + $0x324] sm:$0xff]
                  %934 = vst [vmem:[%s722 + $0x1a4] sm:$0xff] %v933
                  %v935 = vld [vmem:[%s721 + $0x328] sm:$0xff]
                  %936 = vst [vmem:[%s722 + $0x1a8] sm:$0xff] %v935
                  %v937 = vld [vmem:[%s721 + $0x32c] sm:$0xff]
                  %938 = vst [vmem:[%s722 + $0x1ac] sm:$0xff] %v937
                  %v939 = vld [vmem:[%s721 + $0x330] sm:$0xff]
                  %940 = vst [vmem:[%s722 + $0x1b0] sm:$0xff] %v939
                  %v941 = vld [vmem:[%s721 + $0x334] sm:$0xff]
                  %942 = vst [vmem:[%s722 + $0x1b4] sm:$0xff] %v941
                  %v943 = vld [vmem:[%s721 + $0x338] sm:$0xff]
                  %944 = vst [vmem:[%s722 + $0x1b8] sm:$0xff] %v943
                  %v945 = vld [vmem:[%s721 + $0x33c] sm:$0xff]
                  %946 = vst [vmem:[%s722 + $0x1bc] sm:$0xff] %v945
                  %v947 = vld [vmem:[%s721 + $0x380] sm:$0xff]
                  %948 = vst [vmem:[%s722 + $0x1c0] sm:$0xff] %v947
                  %v949 = vld [vmem:[%s721 + $0x384] sm:$0xff]
                  %950 = vst [vmem:[%s722 + $0x1c4] sm:$0xff] %v949
                  %v951 = vld [vmem:[%s721 + $0x388] sm:$0xff]
                  %952 = vst [vmem:[%s722 + $0x1c8] sm:$0xff] %v951
                  %v953 = vld [vmem:[%s721 + $0x38c] sm:$0xff]
                  %954 = vst [vmem:[%s722 + $0x1cc] sm:$0xff] %v953
                  %v955 = vld [vmem:[%s721 + $0x390] sm:$0xff]
                  %956 = vst [vmem:[%s722 + $0x1d0] sm:$0xff] %v955
                  %v957 = vld [vmem:[%s721 + $0x394] sm:$0xff]
                  %958 = vst [vmem:[%s722 + $0x1d4] sm:$0xff] %v957
                  %v959 = vld [vmem:[%s721 + $0x398] sm:$0xff]
                  %960 = vst [vmem:[%s722 + $0x1d8] sm:$0xff] %v959
                  %v961 = vld [vmem:[%s721 + $0x39c] sm:$0xff]
                  %962 = vst [vmem:[%s722 + $0x1dc] sm:$0xff] %v961
                  %v963 = vld [vmem:[%s721 + $0x3a0] sm:$0xff]
                  %964 = vst [vmem:[%s722 + $0x1e0] sm:$0xff] %v963
                  %v965 = vld [vmem:[%s721 + $0x3a4] sm:$0xff]
                  %966 = vst [vmem:[%s722 + $0x1e4] sm:$0xff] %v965
                  %v967 = vld [vmem:[%s721 + $0x3a8] sm:$0xff]
                  %968 = vst [vmem:[%s722 + $0x1e8] sm:$0xff] %v967
                  %v969 = vld [vmem:[%s721 + $0x3ac] sm:$0xff]
                  %970 = vst [vmem:[%s722 + $0x1ec] sm:$0xff] %v969
                  %v971 = vld [vmem:[%s721 + $0x3b0] sm:$0xff]
                  %972 = vst [vmem:[%s722 + $0x1f0] sm:$0xff] %v971
                  %v973 = vld [vmem:[%s721 + $0x3b4] sm:$0xff]
                  %974 = vst [vmem:[%s722 + $0x1f4] sm:$0xff] %v973
                  %v975 = vld [vmem:[%s721 + $0x3b8] sm:$0xff]
                  %976 = vst [vmem:[%s722 + $0x1f8] sm:$0xff] %v975
                  %v977 = vld [vmem:[%s721 + $0x3bc] sm:$0xff]
                  %978 = vst [vmem:[%s722 + $0x1fc] sm:$0xff] %v977
                  %v979 = vld [vmem:[%s721 + $0x400] sm:$0xff]
                  %980 = vst [vmem:[%s722 + $0x200] sm:$0xff] %v979
                  %v981 = vld [vmem:[%s721 + $0x404] sm:$0xff]
                  %982 = vst [vmem:[%s722 + $0x204] sm:$0xff] %v981
                  %v983 = vld [vmem:[%s721 + $0x408] sm:$0xff]
                  %984 = vst [vmem:[%s722 + $0x208] sm:$0xff] %v983
                  %v985 = vld [vmem:[%s721 + $0x40c] sm:$0xff]
                  %986 = vst [vmem:[%s722 + $0x20c] sm:$0xff] %v985
                  %v987 = vld [vmem:[%s721 + $0x410] sm:$0xff]
                  %988 = vst [vmem:[%s722 + $0x210] sm:$0xff] %v987
                  %v989 = vld [vmem:[%s721 + $0x414] sm:$0xff]
                  %990 = vst [vmem:[%s722 + $0x214] sm:$0xff] %v989
                  %v991 = vld [vmem:[%s721 + $0x418] sm:$0xff]
                  %992 = vst [vmem:[%s722 + $0x218] sm:$0xff] %v991
                  %v993 = vld [vmem:[%s721 + $0x41c] sm:$0xff]
                  %994 = vst [vmem:[%s722 + $0x21c] sm:$0xff] %v993
                  %v995 = vld [vmem:[%s721 + $0x420] sm:$0xff]
                  %996 = vst [vmem:[%s722 + $0x220] sm:$0xff] %v995
                  %v997 = vld [vmem:[%s721 + $0x424] sm:$0xff]
                  %998 = vst [vmem:[%s722 + $0x224] sm:$0xff] %v997
                  %v999 = vld [vmem:[%s721 + $0x428] sm:$0xff]
                  %1000 = vst [vmem:[%s722 + $0x228] sm:$0xff] %v999
                  %v1001 = vld [vmem:[%s721 + $0x42c] sm:$0xff]
                  %1002 = vst [vmem:[%s722 + $0x22c] sm:$0xff] %v1001
                  %v1003 = vld [vmem:[%s721 + $0x430] sm:$0xff]
                  %1004 = vst [vmem:[%s722 + $0x230] sm:$0xff] %v1003
                  %v1005 = vld [vmem:[%s721 + $0x434] sm:$0xff]
                  %1006 = vst [vmem:[%s722 + $0x234] sm:$0xff] %v1005
                  %v1007 = vld [vmem:[%s721 + $0x438] sm:$0xff]
                  %1008 = vst [vmem:[%s722 + $0x238] sm:$0xff] %v1007
                  %v1009 = vld [vmem:[%s721 + $0x43c] sm:$0xff]
                  %1010 = vst [vmem:[%s722 + $0x23c] sm:$0xff] %v1009
                  %v1011 = vld [vmem:[%s721 + $0x480] sm:$0xff]
                  %1012 = vst [vmem:[%s722 + $0x240] sm:$0xff] %v1011
                  %v1013 = vld [vmem:[%s721 + $0x484] sm:$0xff]
                  %1014 = vst [vmem:[%s722 + $0x244] sm:$0xff] %v1013
                  %v1015 = vld [vmem:[%s721 + $0x488] sm:$0xff]
                  %1016 = vst [vmem:[%s722 + $0x248] sm:$0xff] %v1015
                  %v1017 = vld [vmem:[%s721 + $0x48c] sm:$0xff]
                  %1018 = vst [vmem:[%s722 + $0x24c] sm:$0xff] %v1017
                  %v1019 = vld [vmem:[%s721 + $0x490] sm:$0xff]
                  %1020 = vst [vmem:[%s722 + $0x250] sm:$0xff] %v1019
                  %v1021 = vld [vmem:[%s721 + $0x494] sm:$0xff]
                  %1022 = vst [vmem:[%s722 + $0x254] sm:$0xff] %v1021
                  %v1023 = vld [vmem:[%s721 + $0x498] sm:$0xff]
                  %1024 = vst [vmem:[%s722 + $0x258] sm:$0xff] %v1023
                  %v1025 = vld [vmem:[%s721 + $0x49c] sm:$0xff]
                  %1026 = vst [vmem:[%s722 + $0x25c] sm:$0xff] %v1025
                  %v1027 = vld [vmem:[%s721 + $0x4a0] sm:$0xff]
                  %1028 = vst [vmem:[%s722 + $0x260] sm:$0xff] %v1027
                  %v1029 = vld [vmem:[%s721 + $0x4a4] sm:$0xff]
                  %1030 = vst [vmem:[%s722 + $0x264] sm:$0xff] %v1029
                  %v1031 = vld [vmem:[%s721 + $0x4a8] sm:$0xff]
                  %1032 = vst [vmem:[%s722 + $0x268] sm:$0xff] %v1031
                  %v1033 = vld [vmem:[%s721 + $0x4ac] sm:$0xff]
                  %1034 = vst [vmem:[%s722 + $0x26c] sm:$0xff] %v1033
                  %v1035 = vld [vmem:[%s721 + $0x4b0] sm:$0xff]
                  %1036 = vst [vmem:[%s722 + $0x270] sm:$0xff] %v1035
                  %v1037 = vld [vmem:[%s721 + $0x4b4] sm:$0xff]
                  %1038 = vst [vmem:[%s722 + $0x274] sm:$0xff] %v1037
                  %v1039 = vld [vmem:[%s721 + $0x4b8] sm:$0xff]
                  %1040 = vst [vmem:[%s722 + $0x278] sm:$0xff] %v1039
                  %v1041 = vld [vmem:[%s721 + $0x4bc] sm:$0xff]
                  %1042 = vst [vmem:[%s722 + $0x27c] sm:$0xff] %v1041
                  %v1043 = vld [vmem:[%s721 + $0x500] sm:$0xff]
                  %1044 = vst [vmem:[%s722 + $0x280] sm:$0xff] %v1043
                  %v1045 = vld [vmem:[%s721 + $0x504] sm:$0xff]
                  %1046 = vst [vmem:[%s722 + $0x284] sm:$0xff] %v1045
                  %v1047 = vld [vmem:[%s721 + $0x508] sm:$0xff]
                  %1048 = vst [vmem:[%s722 + $0x288] sm:$0xff] %v1047
                  %v1049 = vld [vmem:[%s721 + $0x50c] sm:$0xff]
                  %1050 = vst [vmem:[%s722 + $0x28c] sm:$0xff] %v1049
                  %v1051 = vld [vmem:[%s721 + $0x510] sm:$0xff]
                  %1052 = vst [vmem:[%s722 + $0x290] sm:$0xff] %v1051
                  %v1053 = vld [vmem:[%s721 + $0x514] sm:$0xff]
                  %1054 = vst [vmem:[%s722 + $0x294] sm:$0xff] %v1053
                  %v1055 = vld [vmem:[%s721 + $0x518] sm:$0xff]
                  %1056 = vst [vmem:[%s722 + $0x298] sm:$0xff] %v1055
                  %v1057 = vld [vmem:[%s721 + $0x51c] sm:$0xff]
                  %1058 = vst [vmem:[%s722 + $0x29c] sm:$0xff] %v1057
                  %v1059 = vld [vmem:[%s721 + $0x520] sm:$0xff]
                  %1060 = vst [vmem:[%s722 + $0x2a0] sm:$0xff] %v1059
                  %v1061 = vld [vmem:[%s721 + $0x524] sm:$0xff]
                  %1062 = vst [vmem:[%s722 + $0x2a4] sm:$0xff] %v1061
                  %v1063 = vld [vmem:[%s721 + $0x528] sm:$0xff]
                  %1064 = vst [vmem:[%s722 + $0x2a8] sm:$0xff] %v1063
                  %v1065 = vld [vmem:[%s721 + $0x52c] sm:$0xff]
                  %1066 = vst [vmem:[%s722 + $0x2ac] sm:$0xff] %v1065
                  %v1067 = vld [vmem:[%s721 + $0x530] sm:$0xff]
                  %1068 = vst [vmem:[%s722 + $0x2b0] sm:$0xff] %v1067
                  %v1069 = vld [vmem:[%s721 + $0x534] sm:$0xff]
                  %1070 = vst [vmem:[%s722 + $0x2b4] sm:$0xff] %v1069
                  %v1071 = vld [vmem:[%s721 + $0x538] sm:$0xff]
                  %1072 = vst [vmem:[%s722 + $0x2b8] sm:$0xff] %v1071
                  %v1073 = vld [vmem:[%s721 + $0x53c] sm:$0xff]
                  %1074 = vst [vmem:[%s722 + $0x2bc] sm:$0xff] %v1073
                  %v1075 = vld [vmem:[%s721 + $0x580] sm:$0xff]
                  %1076 = vst [vmem:[%s722 + $0x2c0] sm:$0xff] %v1075
                  %v1077 = vld [vmem:[%s721 + $0x584] sm:$0xff]
                  %1078 = vst [vmem:[%s722 + $0x2c4] sm:$0xff] %v1077
                  %v1079 = vld [vmem:[%s721 + $0x588] sm:$0xff]
                  %1080 = vst [vmem:[%s722 + $0x2c8] sm:$0xff] %v1079
                  %v1081 = vld [vmem:[%s721 + $0x58c] sm:$0xff]
                  %1082 = vst [vmem:[%s722 + $0x2cc] sm:$0xff] %v1081
                  %v1083 = vld [vmem:[%s721 + $0x590] sm:$0xff]
                  %1084 = vst [vmem:[%s722 + $0x2d0] sm:$0xff] %v1083
                  %v1085 = vld [vmem:[%s721 + $0x594] sm:$0xff]
                  %1086 = vst [vmem:[%s722 + $0x2d4] sm:$0xff] %v1085
                  %v1087 = vld [vmem:[%s721 + $0x598] sm:$0xff]
                  %1088 = vst [vmem:[%s722 + $0x2d8] sm:$0xff] %v1087
                  %v1089 = vld [vmem:[%s721 + $0x59c] sm:$0xff]
                  %1090 = vst [vmem:[%s722 + $0x2dc] sm:$0xff] %v1089
                  %v1091 = vld [vmem:[%s721 + $0x5a0] sm:$0xff]
                  %1092 = vst [vmem:[%s722 + $0x2e0] sm:$0xff] %v1091
                  %v1093 = vld [vmem:[%s721 + $0x5a4] sm:$0xff]
                  %1094 = vst [vmem:[%s722 + $0x2e4] sm:$0xff] %v1093
                  %v1095 = vld [vmem:[%s721 + $0x5a8] sm:$0xff]
                  %1096 = vst [vmem:[%s722 + $0x2e8] sm:$0xff] %v1095
                  %v1097 = vld [vmem:[%s721 + $0x5ac] sm:$0xff]
                  %1098 = vst [vmem:[%s722 + $0x2ec] sm:$0xff] %v1097
                  %v1099 = vld [vmem:[%s721 + $0x5b0] sm:$0xff]
                  %1100 = vst [vmem:[%s722 + $0x2f0] sm:$0xff] %v1099
                  %v1101 = vld [vmem:[%s721 + $0x5b4] sm:$0xff]
                  %1102 = vst [vmem:[%s722 + $0x2f4] sm:$0xff] %v1101
                  %v1103 = vld [vmem:[%s721 + $0x5b8] sm:$0xff]
                  %1104 = vst [vmem:[%s722 + $0x2f8] sm:$0xff] %v1103
                  %v1105 = vld [vmem:[%s721 + $0x5bc] sm:$0xff]
                  %1106 = vst [vmem:[%s722 + $0x2fc] sm:$0xff] %v1105
                  %v1107 = vld [vmem:[%s721 + $0x600] sm:$0xff]
                  %1108 = vst [vmem:[%s722 + $0x300] sm:$0xff] %v1107
                  %v1109 = vld [vmem:[%s721 + $0x604] sm:$0xff]
                  %1110 = vst [vmem:[%s722 + $0x304] sm:$0xff] %v1109
                  %v1111 = vld [vmem:[%s721 + $0x608] sm:$0xff]
                  %1112 = vst [vmem:[%s722 + $0x308] sm:$0xff] %v1111
                  %v1113 = vld [vmem:[%s721 + $0x60c] sm:$0xff]
                  %1114 = vst [vmem:[%s722 + $0x30c] sm:$0xff] %v1113
                  %v1115 = vld [vmem:[%s721 + $0x610] sm:$0xff]
                  %1116 = vst [vmem:[%s722 + $0x310] sm:$0xff] %v1115
                  %v1117 = vld [vmem:[%s721 + $0x614] sm:$0xff]
                  %1118 = vst [vmem:[%s722 + $0x314] sm:$0xff] %v1117
                  %v1119 = vld [vmem:[%s721 + $0x618] sm:$0xff]
                  %1120 = vst [vmem:[%s722 + $0x318] sm:$0xff] %v1119
                  %v1121 = vld [vmem:[%s721 + $0x61c] sm:$0xff]
                  %1122 = vst [vmem:[%s722 + $0x31c] sm:$0xff] %v1121
                  %v1123 = vld [vmem:[%s721 + $0x620] sm:$0xff]
                  %1124 = vst [vmem:[%s722 + $0x320] sm:$0xff] %v1123
                  %v1125 = vld [vmem:[%s721 + $0x624] sm:$0xff]
                  %1126 = vst [vmem:[%s722 + $0x324] sm:$0xff] %v1125
                  %v1127 = vld [vmem:[%s721 + $0x628] sm:$0xff]
                  %1128 = vst [vmem:[%s722 + $0x328] sm:$0xff] %v1127
                  %v1129 = vld [vmem:[%s721 + $0x62c] sm:$0xff]
                  %1130 = vst [vmem:[%s722 + $0x32c] sm:$0xff] %v1129
                  %v1131 = vld [vmem:[%s721 + $0x630] sm:$0xff]
                  %1132 = vst [vmem:[%s722 + $0x330] sm:$0xff] %v1131
                  %v1133 = vld [vmem:[%s721 + $0x634] sm:$0xff]
                  %1134 = vst [vmem:[%s722 + $0x334] sm:$0xff] %v1133
                  %v1135 = vld [vmem:[%s721 + $0x638] sm:$0xff]
                  %1136 = vst [vmem:[%s722 + $0x338] sm:$0xff] %v1135
                  %v1137 = vld [vmem:[%s721 + $0x63c] sm:$0xff]
                  %1138 = vst [vmem:[%s722 + $0x33c] sm:$0xff] %v1137
                  %v1139 = vld [vmem:[%s721 + $0x680] sm:$0xff]
                  %1140 = vst [vmem:[%s722 + $0x340] sm:$0xff] %v1139
                  %v1141 = vld [vmem:[%s721 + $0x684] sm:$0xff]
                  %1142 = vst [vmem:[%s722 + $0x344] sm:$0xff] %v1141
                  %v1143 = vld [vmem:[%s721 + $0x688] sm:$0xff]
                  %1144 = vst [vmem:[%s722 + $0x348] sm:$0xff] %v1143
                  %v1145 = vld [vmem:[%s721 + $0x68c] sm:$0xff]
                  %1146 = vst [vmem:[%s722 + $0x34c] sm:$0xff] %v1145
                  %v1147 = vld [vmem:[%s721 + $0x690] sm:$0xff]
                  %1148 = vst [vmem:[%s722 + $0x350] sm:$0xff] %v1147
                  %v1149 = vld [vmem:[%s721 + $0x694] sm:$0xff]
                  %1150 = vst [vmem:[%s722 + $0x354] sm:$0xff] %v1149
                  %v1151 = vld [vmem:[%s721 + $0x698] sm:$0xff]
                  %1152 = vst [vmem:[%s722 + $0x358] sm:$0xff] %v1151
                  %v1153 = vld [vmem:[%s721 + $0x69c] sm:$0xff]
                  %1154 = vst [vmem:[%s722 + $0x35c] sm:$0xff] %v1153
                  %v1155 = vld [vmem:[%s721 + $0x6a0] sm:$0xff]
                  %1156 = vst [vmem:[%s722 + $0x360] sm:$0xff] %v1155
                  %v1157 = vld [vmem:[%s721 + $0x6a4] sm:$0xff]
                  %1158 = vst [vmem:[%s722 + $0x364] sm:$0xff] %v1157
                  %v1159 = vld [vmem:[%s721 + $0x6a8] sm:$0xff]
                  %1160 = vst [vmem:[%s722 + $0x368] sm:$0xff] %v1159
                  %v1161 = vld [vmem:[%s721 + $0x6ac] sm:$0xff]
                  %1162 = vst [vmem:[%s722 + $0x36c] sm:$0xff] %v1161
                  %v1163 = vld [vmem:[%s721 + $0x6b0] sm:$0xff]
                  %1164 = vst [vmem:[%s722 + $0x370] sm:$0xff] %v1163
                  %v1165 = vld [vmem:[%s721 + $0x6b4] sm:$0xff]
                  %1166 = vst [vmem:[%s722 + $0x374] sm:$0xff] %v1165
                  %v1167 = vld [vmem:[%s721 + $0x6b8] sm:$0xff]
                  %1168 = vst [vmem:[%s722 + $0x378] sm:$0xff] %v1167
                  %v1169 = vld [vmem:[%s721 + $0x6bc] sm:$0xff]
                  %1170 = vst [vmem:[%s722 + $0x37c] sm:$0xff] %v1169
                  %v1171 = vld [vmem:[%s721 + $0x700] sm:$0xff]
                  %1172 = vst [vmem:[%s722 + $0x380] sm:$0xff] %v1171
                  %v1173 = vld [vmem:[%s721 + $0x704] sm:$0xff]
                  %1174 = vst [vmem:[%s722 + $0x384] sm:$0xff] %v1173
                  %v1175 = vld [vmem:[%s721 + $0x708] sm:$0xff]
                  %1176 = vst [vmem:[%s722 + $0x388] sm:$0xff] %v1175
                  %v1177 = vld [vmem:[%s721 + $0x70c] sm:$0xff]
                  %1178 = vst [vmem:[%s722 + $0x38c] sm:$0xff] %v1177
                  %v1179 = vld [vmem:[%s721 + $0x710] sm:$0xff]
                  %1180 = vst [vmem:[%s722 + $0x390] sm:$0xff] %v1179
                  %v1181 = vld [vmem:[%s721 + $0x714] sm:$0xff]
                  %1182 = vst [vmem:[%s722 + $0x394] sm:$0xff] %v1181
                  %v1183 = vld [vmem:[%s721 + $0x718] sm:$0xff]
                  %1184 = vst [vmem:[%s722 + $0x398] sm:$0xff] %v1183
                  %v1185 = vld [vmem:[%s721 + $0x71c] sm:$0xff]
                  %1186 = vst [vmem:[%s722 + $0x39c] sm:$0xff] %v1185
                  %v1187 = vld [vmem:[%s721 + $0x720] sm:$0xff]
                  %1188 = vst [vmem:[%s722 + $0x3a0] sm:$0xff] %v1187
                  %v1189 = vld [vmem:[%s721 + $0x724] sm:$0xff]
                  %1190 = vst [vmem:[%s722 + $0x3a4] sm:$0xff] %v1189
                  %v1191 = vld [vmem:[%s721 + $0x728] sm:$0xff]
                  %1192 = vst [vmem:[%s722 + $0x3a8] sm:$0xff] %v1191
                  %v1193 = vld [vmem:[%s721 + $0x72c] sm:$0xff]
                  %1194 = vst [vmem:[%s722 + $0x3ac] sm:$0xff] %v1193
                  %v1195 = vld [vmem:[%s721 + $0x730] sm:$0xff]
                  %1196 = vst [vmem:[%s722 + $0x3b0] sm:$0xff] %v1195
                  %v1197 = vld [vmem:[%s721 + $0x734] sm:$0xff]
                  %1198 = vst [vmem:[%s722 + $0x3b4] sm:$0xff] %v1197
                  %v1199 = vld [vmem:[%s721 + $0x738] sm:$0xff]
                  %1200 = vst [vmem:[%s722 + $0x3b8] sm:$0xff] %v1199
                  %v1201 = vld [vmem:[%s721 + $0x73c] sm:$0xff]
                  %1202 = vst [vmem:[%s722 + $0x3bc] sm:$0xff] %v1201
                  %v1203 = vld [vmem:[%s721 + $0x780] sm:$0xff]
                  %1204 = vst [vmem:[%s722 + $0x3c0] sm:$0xff] %v1203
                  %v1205 = vld [vmem:[%s721 + $0x784] sm:$0xff]
                  %1206 = vst [vmem:[%s722 + $0x3c4] sm:$0xff] %v1205
                  %v1207 = vld [vmem:[%s721 + $0x788] sm:$0xff]
                  %1208 = vst [vmem:[%s722 + $0x3c8] sm:$0xff] %v1207
                  %v1209 = vld [vmem:[%s721 + $0x78c] sm:$0xff]
                  %1210 = vst [vmem:[%s722 + $0x3cc] sm:$0xff] %v1209
                  %v1211 = vld [vmem:[%s721 + $0x790] sm:$0xff]
                  %1212 = vst [vmem:[%s722 + $0x3d0] sm:$0xff] %v1211
                  %v1213 = vld [vmem:[%s721 + $0x794] sm:$0xff]
                  %1214 = vst [vmem:[%s722 + $0x3d4] sm:$0xff] %v1213
                  %v1215 = vld [vmem:[%s721 + $0x798] sm:$0xff]
                  %1216 = vst [vmem:[%s722 + $0x3d8] sm:$0xff] %v1215
                  %v1217 = vld [vmem:[%s721 + $0x79c] sm:$0xff]
                  %1218 = vst [vmem:[%s722 + $0x3dc] sm:$0xff] %v1217
                  %v1219 = vld [vmem:[%s721 + $0x7a0] sm:$0xff]
                  %1220 = vst [vmem:[%s722 + $0x3e0] sm:$0xff] %v1219
                  %v1221 = vld [vmem:[%s721 + $0x7a4] sm:$0xff]
                  %1222 = vst [vmem:[%s722 + $0x3e4] sm:$0xff] %v1221
                  %v1223 = vld [vmem:[%s721 + $0x7a8] sm:$0xff]
                  %1224 = vst [vmem:[%s722 + $0x3e8] sm:$0xff] %v1223
                  %v1225 = vld [vmem:[%s721 + $0x7ac] sm:$0xff]
                  %1226 = vst [vmem:[%s722 + $0x3ec] sm:$0xff] %v1225
                  %v1227 = vld [vmem:[%s721 + $0x7b0] sm:$0xff]
                  %1228 = vst [vmem:[%s722 + $0x3f0] sm:$0xff] %v1227
                  %v1229 = vld [vmem:[%s721 + $0x7b4] sm:$0xff]
                  %1230 = vst [vmem:[%s722 + $0x3f4] sm:$0xff] %v1229
                  %v1231 = vld [vmem:[%s721 + $0x7b8] sm:$0xff]
                  %1232 = vst [vmem:[%s722 + $0x3f8] sm:$0xff] %v1231
                  %v1233 = vld [vmem:[%s721 + $0x7bc] sm:$0xff]
                  %1234 = vst [vmem:[%s722 + $0x3fc] sm:$0xff] %v1233
                  %s1235 = sadd.s32 1, %s720
                  %p1236 = scmp.ge.s32.totalorder %s1235, 0
                  %s1237 = scalar_select %p1236, 0, %s1235
                  %s1238 = smul.u32 %s1237, 8
                  %s1239 = smul.u32 %s1237, 8
                  %s1240 = scalar_lea.vmem %s183, %s1238
                  %s1241 = scalar_lea.vmem %s177, %s1239 [#allocation4]
                $region56: #{matchsum_forward.1} parent=50 // loop_footer
                  %s719 = sadd.s32 1, %s715
                $region57: #{matchsum_forward.1} parent=50 // loop_footer_branch
                  %714 = sbr.rel target = $region53
                $region58: #{matchsum_forward.1} parent=50 // loop_exit
                  _
              $region51: #{matchsum_forward.1} parent=35 // pred_fallthru
                _
              // Predicated region
              $region59: #{matchsum_forward.1} parent=35 // pred_check
                _
              $region60: #{matchsum_forward.1} parent=35 // pred_check_branch
                %1243 = sbr.rel (0) target = $region62
              $region61: #{matchsum_forward.1} parent=35 // pred_region
                loop: start=0, step=1, limit=0
                $region63: #{matchsum_forward.1} parent=61 // loop_pre_header
                  _
                $region64: #{matchsum_forward.1} parent=61 // loop_header
                  %s1245 = sphi 0, %s1249
                  %p1246 = scmp.ge.s32.totalorder %s1245, 0
                  %s1250 = sphi 0, %s1767
                  %s1251 = sphi %s183, %s1770
                  %s1252 = sphi %s177, %s1771
                $region65: #{matchsum_forward.1} parent=61 // loop_header_branch
                  %1248 = sbr.rel (%p1246) target = $region69
                $region66: #{matchsum_forward.1} parent=61 // loop_body
                  %v1253 = vld [vmem:[%s1251] sm:$0xff]
                  %1254 = vst [vmem:[%s1252] sm:$0xff] %v1253
                  %v1255 = vld [vmem:[%s1251 + $0x4] sm:$0xff]
                  %1256 = vst [vmem:[%s1252 + $0x4] sm:$0xff] %v1255
                  %v1257 = vld [vmem:[%s1251 + $0x8] sm:$0xff]
                  %1258 = vst [vmem:[%s1252 + $0x8] sm:$0xff] %v1257
                  %v1259 = vld [vmem:[%s1251 + $0xc] sm:$0xff]
                  %1260 = vst [vmem:[%s1252 + $0xc] sm:$0xff] %v1259
                  %v1261 = vld [vmem:[%s1251 + $0x10] sm:$0xff]
                  %1262 = vst [vmem:[%s1252 + $0x10] sm:$0xff] %v1261
                  %v1263 = vld [vmem:[%s1251 + $0x14] sm:$0xff]
                  %1264 = vst [vmem:[%s1252 + $0x14] sm:$0xff] %v1263
                  %v1265 = vld [vmem:[%s1251 + $0x18] sm:$0xff]
                  %1266 = vst [vmem:[%s1252 + $0x18] sm:$0xff] %v1265
                  %v1267 = vld [vmem:[%s1251 + $0x1c] sm:$0xff]
                  %1268 = vst [vmem:[%s1252 + $0x1c] sm:$0xff] %v1267
                  %v1269 = vld [vmem:[%s1251 + $0x20] sm:$0xff]
                  %1270 = vst [vmem:[%s1252 + $0x20] sm:$0xff] %v1269
                  %v1271 = vld [vmem:[%s1251 + $0x24] sm:$0xff]
                  %1272 = vst [vmem:[%s1252 + $0x24] sm:$0xff] %v1271
                  %v1273 = vld [vmem:[%s1251 + $0x28] sm:$0xff]
                  %1274 = vst [vmem:[%s1252 + $0x28] sm:$0xff] %v1273
                  %v1275 = vld [vmem:[%s1251 + $0x2c] sm:$0xff]
                  %1276 = vst [vmem:[%s1252 + $0x2c] sm:$0xff] %v1275
                  %v1277 = vld [vmem:[%s1251 + $0x30] sm:$0xff]
                  %1278 = vst [vmem:[%s1252 + $0x30] sm:$0xff] %v1277
                  %v1279 = vld [vmem:[%s1251 + $0x34] sm:$0xff]
                  %1280 = vst [vmem:[%s1252 + $0x34] sm:$0xff] %v1279
                  %v1281 = vld [vmem:[%s1251 + $0x38] sm:$0xff]
                  %1282 = vst [vmem:[%s1252 + $0x38] sm:$0xff] %v1281
                  %v1283 = vld [vmem:[%s1251 + $0x3c] sm:$0xff]
                  %1284 = vst [vmem:[%s1252 + $0x3c] sm:$0xff] %v1283
                  %v1285 = vld [vmem:[%s1251 + $0x80] sm:$0xff]
                  %1286 = vst [vmem:[%s1252 + $0x40] sm:$0xff] %v1285
                  %v1287 = vld [vmem:[%s1251 + $0x84] sm:$0xff]
                  %1288 = vst [vmem:[%s1252 + $0x44] sm:$0xff] %v1287
                  %v1289 = vld [vmem:[%s1251 + $0x88] sm:$0xff]
                  %1290 = vst [vmem:[%s1252 + $0x48] sm:$0xff] %v1289
                  %v1291 = vld [vmem:[%s1251 + $0x8c] sm:$0xff]
                  %1292 = vst [vmem:[%s1252 + $0x4c] sm:$0xff] %v1291
                  %v1293 = vld [vmem:[%s1251 + $0x90] sm:$0xff]
                  %1294 = vst [vmem:[%s1252 + $0x50] sm:$0xff] %v1293
                  %v1295 = vld [vmem:[%s1251 + $0x94] sm:$0xff]
                  %1296 = vst [vmem:[%s1252 + $0x54] sm:$0xff] %v1295
                  %v1297 = vld [vmem:[%s1251 + $0x98] sm:$0xff]
                  %1298 = vst [vmem:[%s1252 + $0x58] sm:$0xff] %v1297
                  %v1299 = vld [vmem:[%s1251 + $0x9c] sm:$0xff]
                  %1300 = vst [vmem:[%s1252 + $0x5c] sm:$0xff] %v1299
                  %v1301 = vld [vmem:[%s1251 + $0xa0] sm:$0xff]
                  %1302 = vst [vmem:[%s1252 + $0x60] sm:$0xff] %v1301
                  %v1303 = vld [vmem:[%s1251 + $0xa4] sm:$0xff]
                  %1304 = vst [vmem:[%s1252 + $0x64] sm:$0xff] %v1303
                  %v1305 = vld [vmem:[%s1251 + $0xa8] sm:$0xff]
                  %1306 = vst [vmem:[%s1252 + $0x68] sm:$0xff] %v1305
                  %v1307 = vld [vmem:[%s1251 + $0xac] sm:$0xff]
                  %1308 = vst [vmem:[%s1252 + $0x6c] sm:$0xff] %v1307
                  %v1309 = vld [vmem:[%s1251 + $0xb0] sm:$0xff]
                  %1310 = vst [vmem:[%s1252 + $0x70] sm:$0xff] %v1309
                  %v1311 = vld [vmem:[%s1251 + $0xb4] sm:$0xff]
                  %1312 = vst [vmem:[%s1252 + $0x74] sm:$0xff] %v1311
                  %v1313 = vld [vmem:[%s1251 + $0xb8] sm:$0xff]
                  %1314 = vst [vmem:[%s1252 + $0x78] sm:$0xff] %v1313
                  %v1315 = vld [vmem:[%s1251 + $0xbc] sm:$0xff]
                  %1316 = vst [vmem:[%s1252 + $0x7c] sm:$0xff] %v1315
                  %v1317 = vld [vmem:[%s1251 + $0x100] sm:$0xff]
                  %1318 = vst [vmem:[%s1252 + $0x80] sm:$0xff] %v1317
                  %v1319 = vld [vmem:[%s1251 + $0x104] sm:$0xff]
                  %1320 = vst [vmem:[%s1252 + $0x84] sm:$0xff] %v1319
                  %v1321 = vld [vmem:[%s1251 + $0x108] sm:$0xff]
                  %1322 = vst [vmem:[%s1252 + $0x88] sm:$0xff] %v1321
                  %v1323 = vld [vmem:[%s1251 + $0x10c] sm:$0xff]
                  %1324 = vst [vmem:[%s1252 + $0x8c] sm:$0xff] %v1323
                  %v1325 = vld [vmem:[%s1251 + $0x110] sm:$0xff]
                  %1326 = vst [vmem:[%s1252 + $0x90] sm:$0xff] %v1325
                  %v1327 = vld [vmem:[%s1251 + $0x114] sm:$0xff]
                  %1328 = vst [vmem:[%s1252 + $0x94] sm:$0xff] %v1327
                  %v1329 = vld [vmem:[%s1251 + $0x118] sm:$0xff]
                  %1330 = vst [vmem:[%s1252 + $0x98] sm:$0xff] %v1329
                  %v1331 = vld [vmem:[%s1251 + $0x11c] sm:$0xff]
                  %1332 = vst [vmem:[%s1252 + $0x9c] sm:$0xff] %v1331
                  %v1333 = vld [vmem:[%s1251 + $0x120] sm:$0xff]
                  %1334 = vst [vmem:[%s1252 + $0xa0] sm:$0xff] %v1333
                  %v1335 = vld [vmem:[%s1251 + $0x124] sm:$0xff]
                  %1336 = vst [vmem:[%s1252 + $0xa4] sm:$0xff] %v1335
                  %v1337 = vld [vmem:[%s1251 + $0x128] sm:$0xff]
                  %1338 = vst [vmem:[%s1252 + $0xa8] sm:$0xff] %v1337
                  %v1339 = vld [vmem:[%s1251 + $0x12c] sm:$0xff]
                  %1340 = vst [vmem:[%s1252 + $0xac] sm:$0xff] %v1339
                  %v1341 = vld [vmem:[%s1251 + $0x130] sm:$0xff]
                  %1342 = vst [vmem:[%s1252 + $0xb0] sm:$0xff] %v1341
                  %v1343 = vld [vmem:[%s1251 + $0x134] sm:$0xff]
                  %1344 = vst [vmem:[%s1252 + $0xb4] sm:$0xff] %v1343
                  %v1345 = vld [vmem:[%s1251 + $0x138] sm:$0xff]
                  %1346 = vst [vmem:[%s1252 + $0xb8] sm:$0xff] %v1345
                  %v1347 = vld [vmem:[%s1251 + $0x13c] sm:$0xff]
                  %1348 = vst [vmem:[%s1252 + $0xbc] sm:$0xff] %v1347
                  %v1349 = vld [vmem:[%s1251 + $0x180] sm:$0xff]
                  %1350 = vst [vmem:[%s1252 + $0xc0] sm:$0xff] %v1349
                  %v1351 = vld [vmem:[%s1251 + $0x184] sm:$0xff]
                  %1352 = vst [vmem:[%s1252 + $0xc4] sm:$0xff] %v1351
                  %v1353 = vld [vmem:[%s1251 + $0x188] sm:$0xff]
                  %1354 = vst [vmem:[%s1252 + $0xc8] sm:$0xff] %v1353
                  %v1355 = vld [vmem:[%s1251 + $0x18c] sm:$0xff]
                  %1356 = vst [vmem:[%s1252 + $0xcc] sm:$0xff] %v1355
                  %v1357 = vld [vmem:[%s1251 + $0x190] sm:$0xff]
                  %1358 = vst [vmem:[%s1252 + $0xd0] sm:$0xff] %v1357
                  %v1359 = vld [vmem:[%s1251 + $0x194] sm:$0xff]
                  %1360 = vst [vmem:[%s1252 + $0xd4] sm:$0xff] %v1359
                  %v1361 = vld [vmem:[%s1251 + $0x198] sm:$0xff]
                  %1362 = vst [vmem:[%s1252 + $0xd8] sm:$0xff] %v1361
                  %v1363 = vld [vmem:[%s1251 + $0x19c] sm:$0xff]
                  %1364 = vst [vmem:[%s1252 + $0xdc] sm:$0xff] %v1363
                  %v1365 = vld [vmem:[%s1251 + $0x1a0] sm:$0xff]
                  %1366 = vst [vmem:[%s1252 + $0xe0] sm:$0xff] %v1365
                  %v1367 = vld [vmem:[%s1251 + $0x1a4] sm:$0xff]
                  %1368 = vst [vmem:[%s1252 + $0xe4] sm:$0xff] %v1367
                  %v1369 = vld [vmem:[%s1251 + $0x1a8] sm:$0xff]
                  %1370 = vst [vmem:[%s1252 + $0xe8] sm:$0xff] %v1369
                  %v1371 = vld [vmem:[%s1251 + $0x1ac] sm:$0xff]
                  %1372 = vst [vmem:[%s1252 + $0xec] sm:$0xff] %v1371
                  %v1373 = vld [vmem:[%s1251 + $0x1b0] sm:$0xff]
                  %1374 = vst [vmem:[%s1252 + $0xf0] sm:$0xff] %v1373
                  %v1375 = vld [vmem:[%s1251 + $0x1b4] sm:$0xff]
                  %1376 = vst [vmem:[%s1252 + $0xf4] sm:$0xff] %v1375
                  %v1377 = vld [vmem:[%s1251 + $0x1b8] sm:$0xff]
                  %1378 = vst [vmem:[%s1252 + $0xf8] sm:$0xff] %v1377
                  %v1379 = vld [vmem:[%s1251 + $0x1bc] sm:$0xff]
                  %1380 = vst [vmem:[%s1252 + $0xfc] sm:$0xff] %v1379
                  %v1381 = vld [vmem:[%s1251 + $0x200] sm:$0xff]
                  %1382 = vst [vmem:[%s1252 + $0x100] sm:$0xff] %v1381
                  %v1383 = vld [vmem:[%s1251 + $0x204] sm:$0xff]
                  %1384 = vst [vmem:[%s1252 + $0x104] sm:$0xff] %v1383
                  %v1385 = vld [vmem:[%s1251 + $0x208] sm:$0xff]
                  %1386 = vst [vmem:[%s1252 + $0x108] sm:$0xff] %v1385
                  %v1387 = vld [vmem:[%s1251 + $0x20c] sm:$0xff]
                  %1388 = vst [vmem:[%s1252 + $0x10c] sm:$0xff] %v1387
                  %v1389 = vld [vmem:[%s1251 + $0x210] sm:$0xff]
                  %1390 = vst [vmem:[%s1252 + $0x110] sm:$0xff] %v1389
                  %v1391 = vld [vmem:[%s1251 + $0x214] sm:$0xff]
                  %1392 = vst [vmem:[%s1252 + $0x114] sm:$0xff] %v1391
                  %v1393 = vld [vmem:[%s1251 + $0x218] sm:$0xff]
                  %1394 = vst [vmem:[%s1252 + $0x118] sm:$0xff] %v1393
                  %v1395 = vld [vmem:[%s1251 + $0x21c] sm:$0xff]
                  %1396 = vst [vmem:[%s1252 + $0x11c] sm:$0xff] %v1395
                  %v1397 = vld [vmem:[%s1251 + $0x220] sm:$0xff]
                  %1398 = vst [vmem:[%s1252 + $0x120] sm:$0xff] %v1397
                  %v1399 = vld [vmem:[%s1251 + $0x224] sm:$0xff]
                  %1400 = vst [vmem:[%s1252 + $0x124] sm:$0xff] %v1399
                  %v1401 = vld [vmem:[%s1251 + $0x228] sm:$0xff]
                  %1402 = vst [vmem:[%s1252 + $0x128] sm:$0xff] %v1401
                  %v1403 = vld [vmem:[%s1251 + $0x22c] sm:$0xff]
                  %1404 = vst [vmem:[%s1252 + $0x12c] sm:$0xff] %v1403
                  %v1405 = vld [vmem:[%s1251 + $0x230] sm:$0xff]
                  %1406 = vst [vmem:[%s1252 + $0x130] sm:$0xff] %v1405
                  %v1407 = vld [vmem:[%s1251 + $0x234] sm:$0xff]
                  %1408 = vst [vmem:[%s1252 + $0x134] sm:$0xff] %v1407
                  %v1409 = vld [vmem:[%s1251 + $0x238] sm:$0xff]
                  %1410 = vst [vmem:[%s1252 + $0x138] sm:$0xff] %v1409
                  %v1411 = vld [vmem:[%s1251 + $0x23c] sm:$0xff]
                  %1412 = vst [vmem:[%s1252 + $0x13c] sm:$0xff] %v1411
                  %v1413 = vld [vmem:[%s1251 + $0x280] sm:$0xff]
                  %1414 = vst [vmem:[%s1252 + $0x140] sm:$0xff] %v1413
                  %v1415 = vld [vmem:[%s1251 + $0x284] sm:$0xff]
                  %1416 = vst [vmem:[%s1252 + $0x144] sm:$0xff] %v1415
                  %v1417 = vld [vmem:[%s1251 + $0x288] sm:$0xff]
                  %1418 = vst [vmem:[%s1252 + $0x148] sm:$0xff] %v1417
                  %v1419 = vld [vmem:[%s1251 + $0x28c] sm:$0xff]
                  %1420 = vst [vmem:[%s1252 + $0x14c] sm:$0xff] %v1419
                  %v1421 = vld [vmem:[%s1251 + $0x290] sm:$0xff]
                  %1422 = vst [vmem:[%s1252 + $0x150] sm:$0xff] %v1421
                  %v1423 = vld [vmem:[%s1251 + $0x294] sm:$0xff]
                  %1424 = vst [vmem:[%s1252 + $0x154] sm:$0xff] %v1423
                  %v1425 = vld [vmem:[%s1251 + $0x298] sm:$0xff]
                  %1426 = vst [vmem:[%s1252 + $0x158] sm:$0xff] %v1425
                  %v1427 = vld [vmem:[%s1251 + $0x29c] sm:$0xff]
                  %1428 = vst [vmem:[%s1252 + $0x15c] sm:$0xff] %v1427
                  %v1429 = vld [vmem:[%s1251 + $0x2a0] sm:$0xff]
                  %1430 = vst [vmem:[%s1252 + $0x160] sm:$0xff] %v1429
                  %v1431 = vld [vmem:[%s1251 + $0x2a4] sm:$0xff]
                  %1432 = vst [vmem:[%s1252 + $0x164] sm:$0xff] %v1431
                  %v1433 = vld [vmem:[%s1251 + $0x2a8] sm:$0xff]
                  %1434 = vst [vmem:[%s1252 + $0x168] sm:$0xff] %v1433
                  %v1435 = vld [vmem:[%s1251 + $0x2ac] sm:$0xff]
                  %1436 = vst [vmem:[%s1252 + $0x16c] sm:$0xff] %v1435
                  %v1437 = vld [vmem:[%s1251 + $0x2b0] sm:$0xff]
                  %1438 = vst [vmem:[%s1252 + $0x170] sm:$0xff] %v1437
                  %v1439 = vld [vmem:[%s1251 + $0x2b4] sm:$0xff]
                  %1440 = vst [vmem:[%s1252 + $0x174] sm:$0xff] %v1439
                  %v1441 = vld [vmem:[%s1251 + $0x2b8] sm:$0xff]
                  %1442 = vst [vmem:[%s1252 + $0x178] sm:$0xff] %v1441
                  %v1443 = vld [vmem:[%s1251 + $0x2bc] sm:$0xff]
                  %1444 = vst [vmem:[%s1252 + $0x17c] sm:$0xff] %v1443
                  %v1445 = vld [vmem:[%s1251 + $0x300] sm:$0xff]
                  %1446 = vst [vmem:[%s1252 + $0x180] sm:$0xff] %v1445
                  %v1447 = vld [vmem:[%s1251 + $0x304] sm:$0xff]
                  %1448 = vst [vmem:[%s1252 + $0x184] sm:$0xff] %v1447
                  %v1449 = vld [vmem:[%s1251 + $0x308] sm:$0xff]
                  %1450 = vst [vmem:[%s1252 + $0x188] sm:$0xff] %v1449
                  %v1451 = vld [vmem:[%s1251 + $0x30c] sm:$0xff]
                  %1452 = vst [vmem:[%s1252 + $0x18c] sm:$0xff] %v1451
                  %v1453 = vld [vmem:[%s1251 + $0x310] sm:$0xff]
                  %1454 = vst [vmem:[%s1252 + $0x190] sm:$0xff] %v1453
                  %v1455 = vld [vmem:[%s1251 + $0x314] sm:$0xff]
                  %1456 = vst [vmem:[%s1252 + $0x194] sm:$0xff] %v1455
                  %v1457 = vld [vmem:[%s1251 + $0x318] sm:$0xff]
                  %1458 = vst [vmem:[%s1252 + $0x198] sm:$0xff] %v1457
                  %v1459 = vld [vmem:[%s1251 + $0x31c] sm:$0xff]
                  %1460 = vst [vmem:[%s1252 + $0x19c] sm:$0xff] %v1459
                  %v1461 = vld [vmem:[%s1251 + $0x320] sm:$0xff]
                  %1462 = vst [vmem:[%s1252 + $0x1a0] sm:$0xff] %v1461
                  %v1463 = vld [vmem:[%s1251 + $0x324] sm:$0xff]
                  %1464 = vst [vmem:[%s1252 + $0x1a4] sm:$0xff] %v1463
                  %v1465 = vld [vmem:[%s1251 + $0x328] sm:$0xff]
                  %1466 = vst [vmem:[%s1252 + $0x1a8] sm:$0xff] %v1465
                  %v1467 = vld [vmem:[%s1251 + $0x32c] sm:$0xff]
                  %1468 = vst [vmem:[%s1252 + $0x1ac] sm:$0xff] %v1467
                  %v1469 = vld [vmem:[%s1251 + $0x330] sm:$0xff]
                  %1470 = vst [vmem:[%s1252 + $0x1b0] sm:$0xff] %v1469
                  %v1471 = vld [vmem:[%s1251 + $0x334] sm:$0xff]
                  %1472 = vst [vmem:[%s1252 + $0x1b4] sm:$0xff] %v1471
                  %v1473 = vld [vmem:[%s1251 + $0x338] sm:$0xff]
                  %1474 = vst [vmem:[%s1252 + $0x1b8] sm:$0xff] %v1473
                  %v1475 = vld [vmem:[%s1251 + $0x33c] sm:$0xff]
                  %1476 = vst [vmem:[%s1252 + $0x1bc] sm:$0xff] %v1475
                  %v1477 = vld [vmem:[%s1251 + $0x380] sm:$0xff]
                  %1478 = vst [vmem:[%s1252 + $0x1c0] sm:$0xff] %v1477
                  %v1479 = vld [vmem:[%s1251 + $0x384] sm:$0xff]
                  %1480 = vst [vmem:[%s1252 + $0x1c4] sm:$0xff] %v1479
                  %v1481 = vld [vmem:[%s1251 + $0x388] sm:$0xff]
                  %1482 = vst [vmem:[%s1252 + $0x1c8] sm:$0xff] %v1481
                  %v1483 = vld [vmem:[%s1251 + $0x38c] sm:$0xff]
                  %1484 = vst [vmem:[%s1252 + $0x1cc] sm:$0xff] %v1483
                  %v1485 = vld [vmem:[%s1251 + $0x390] sm:$0xff]
                  %1486 = vst [vmem:[%s1252 + $0x1d0] sm:$0xff] %v1485
                  %v1487 = vld [vmem:[%s1251 + $0x394] sm:$0xff]
                  %1488 = vst [vmem:[%s1252 + $0x1d4] sm:$0xff] %v1487
                  %v1489 = vld [vmem:[%s1251 + $0x398] sm:$0xff]
                  %1490 = vst [vmem:[%s1252 + $0x1d8] sm:$0xff] %v1489
                  %v1491 = vld [vmem:[%s1251 + $0x39c] sm:$0xff]
                  %1492 = vst [vmem:[%s1252 + $0x1dc] sm:$0xff] %v1491
                  %v1493 = vld [vmem:[%s1251 + $0x3a0] sm:$0xff]
                  %1494 = vst [vmem:[%s1252 + $0x1e0] sm:$0xff] %v1493
                  %v1495 = vld [vmem:[%s1251 + $0x3a4] sm:$0xff]
                  %1496 = vst [vmem:[%s1252 + $0x1e4] sm:$0xff] %v1495
                  %v1497 = vld [vmem:[%s1251 + $0x3a8] sm:$0xff]
                  %1498 = vst [vmem:[%s1252 + $0x1e8] sm:$0xff] %v1497
                  %v1499 = vld [vmem:[%s1251 + $0x3ac] sm:$0xff]
                  %1500 = vst [vmem:[%s1252 + $0x1ec] sm:$0xff] %v1499
                  %v1501 = vld [vmem:[%s1251 + $0x3b0] sm:$0xff]
                  %1502 = vst [vmem:[%s1252 + $0x1f0] sm:$0xff] %v1501
                  %v1503 = vld [vmem:[%s1251 + $0x3b4] sm:$0xff]
                  %1504 = vst [vmem:[%s1252 + $0x1f4] sm:$0xff] %v1503
                  %v1505 = vld [vmem:[%s1251 + $0x3b8] sm:$0xff]
                  %1506 = vst [vmem:[%s1252 + $0x1f8] sm:$0xff] %v1505
                  %v1507 = vld [vmem:[%s1251 + $0x3bc] sm:$0xff]
                  %1508 = vst [vmem:[%s1252 + $0x1fc] sm:$0xff] %v1507
                  %v1509 = vld [vmem:[%s1251 + $0x400] sm:$0xff]
                  %1510 = vst [vmem:[%s1252 + $0x200] sm:$0xff] %v1509
                  %v1511 = vld [vmem:[%s1251 + $0x404] sm:$0xff]
                  %1512 = vst [vmem:[%s1252 + $0x204] sm:$0xff] %v1511
                  %v1513 = vld [vmem:[%s1251 + $0x408] sm:$0xff]
                  %1514 = vst [vmem:[%s1252 + $0x208] sm:$0xff] %v1513
                  %v1515 = vld [vmem:[%s1251 + $0x40c] sm:$0xff]
                  %1516 = vst [vmem:[%s1252 + $0x20c] sm:$0xff] %v1515
                  %v1517 = vld [vmem:[%s1251 + $0x410] sm:$0xff]
                  %1518 = vst [vmem:[%s1252 + $0x210] sm:$0xff] %v1517
                  %v1519 = vld [vmem:[%s1251 + $0x414] sm:$0xff]
                  %1520 = vst [vmem:[%s1252 + $0x214] sm:$0xff] %v1519
                  %v1521 = vld [vmem:[%s1251 + $0x418] sm:$0xff]
                  %1522 = vst [vmem:[%s1252 + $0x218] sm:$0xff] %v1521
                  %v1523 = vld [vmem:[%s1251 + $0x41c] sm:$0xff]
                  %1524 = vst [vmem:[%s1252 + $0x21c] sm:$0xff] %v1523
                  %v1525 = vld [vmem:[%s1251 + $0x420] sm:$0xff]
                  %1526 = vst [vmem:[%s1252 + $0x220] sm:$0xff] %v1525
                  %v1527 = vld [vmem:[%s1251 + $0x424] sm:$0xff]
                  %1528 = vst [vmem:[%s1252 + $0x224] sm:$0xff] %v1527
                  %v1529 = vld [vmem:[%s1251 + $0x428] sm:$0xff]
                  %1530 = vst [vmem:[%s1252 + $0x228] sm:$0xff] %v1529
                  %v1531 = vld [vmem:[%s1251 + $0x42c] sm:$0xff]
                  %1532 = vst [vmem:[%s1252 + $0x22c] sm:$0xff] %v1531
                  %v1533 = vld [vmem:[%s1251 + $0x430] sm:$0xff]
                  %1534 = vst [vmem:[%s1252 + $0x230] sm:$0xff] %v1533
                  %v1535 = vld [vmem:[%s1251 + $0x434] sm:$0xff]
                  %1536 = vst [vmem:[%s1252 + $0x234] sm:$0xff] %v1535
                  %v1537 = vld [vmem:[%s1251 + $0x438] sm:$0xff]
                  %1538 = vst [vmem:[%s1252 + $0x238] sm:$0xff] %v1537
                  %v1539 = vld [vmem:[%s1251 + $0x43c] sm:$0xff]
                  %1540 = vst [vmem:[%s1252 + $0x23c] sm:$0xff] %v1539
                  %v1541 = vld [vmem:[%s1251 + $0x480] sm:$0xff]
                  %1542 = vst [vmem:[%s1252 + $0x240] sm:$0xff] %v1541
                  %v1543 = vld [vmem:[%s1251 + $0x484] sm:$0xff]
                  %1544 = vst [vmem:[%s1252 + $0x244] sm:$0xff] %v1543
                  %v1545 = vld [vmem:[%s1251 + $0x488] sm:$0xff]
                  %1546 = vst [vmem:[%s1252 + $0x248] sm:$0xff] %v1545
                  %v1547 = vld [vmem:[%s1251 + $0x48c] sm:$0xff]
                  %1548 = vst [vmem:[%s1252 + $0x24c] sm:$0xff] %v1547
                  %v1549 = vld [vmem:[%s1251 + $0x490] sm:$0xff]
                  %1550 = vst [vmem:[%s1252 + $0x250] sm:$0xff] %v1549
                  %v1551 = vld [vmem:[%s1251 + $0x494] sm:$0xff]
                  %1552 = vst [vmem:[%s1252 + $0x254] sm:$0xff] %v1551
                  %v1553 = vld [vmem:[%s1251 + $0x498] sm:$0xff]
                  %1554 = vst [vmem:[%s1252 + $0x258] sm:$0xff] %v1553
                  %v1555 = vld [vmem:[%s1251 + $0x49c] sm:$0xff]
                  %1556 = vst [vmem:[%s1252 + $0x25c] sm:$0xff] %v1555
                  %v1557 = vld [vmem:[%s1251 + $0x4a0] sm:$0xff]
                  %1558 = vst [vmem:[%s1252 + $0x260] sm:$0xff] %v1557
                  %v1559 = vld [vmem:[%s1251 + $0x4a4] sm:$0xff]
                  %1560 = vst [vmem:[%s1252 + $0x264] sm:$0xff] %v1559
                  %v1561 = vld [vmem:[%s1251 + $0x4a8] sm:$0xff]
                  %1562 = vst [vmem:[%s1252 + $0x268] sm:$0xff] %v1561
                  %v1563 = vld [vmem:[%s1251 + $0x4ac] sm:$0xff]
                  %1564 = vst [vmem:[%s1252 + $0x26c] sm:$0xff] %v1563
                  %v1565 = vld [vmem:[%s1251 + $0x4b0] sm:$0xff]
                  %1566 = vst [vmem:[%s1252 + $0x270] sm:$0xff] %v1565
                  %v1567 = vld [vmem:[%s1251 + $0x4b4] sm:$0xff]
                  %1568 = vst [vmem:[%s1252 + $0x274] sm:$0xff] %v1567
                  %v1569 = vld [vmem:[%s1251 + $0x4b8] sm:$0xff]
                  %1570 = vst [vmem:[%s1252 + $0x278] sm:$0xff] %v1569
                  %v1571 = vld [vmem:[%s1251 + $0x4bc] sm:$0xff]
                  %1572 = vst [vmem:[%s1252 + $0x27c] sm:$0xff] %v1571
                  %v1573 = vld [vmem:[%s1251 + $0x500] sm:$0xff]
                  %1574 = vst [vmem:[%s1252 + $0x280] sm:$0xff] %v1573
                  %v1575 = vld [vmem:[%s1251 + $0x504] sm:$0xff]
                  %1576 = vst [vmem:[%s1252 + $0x284] sm:$0xff] %v1575
                  %v1577 = vld [vmem:[%s1251 + $0x508] sm:$0xff]
                  %1578 = vst [vmem:[%s1252 + $0x288] sm:$0xff] %v1577
                  %v1579 = vld [vmem:[%s1251 + $0x50c] sm:$0xff]
                  %1580 = vst [vmem:[%s1252 + $0x28c] sm:$0xff] %v1579
                  %v1581 = vld [vmem:[%s1251 + $0x510] sm:$0xff]
                  %1582 = vst [vmem:[%s1252 + $0x290] sm:$0xff] %v1581
                  %v1583 = vld [vmem:[%s1251 + $0x514] sm:$0xff]
                  %1584 = vst [vmem:[%s1252 + $0x294] sm:$0xff] %v1583
                  %v1585 = vld [vmem:[%s1251 + $0x518] sm:$0xff]
                  %1586 = vst [vmem:[%s1252 + $0x298] sm:$0xff] %v1585
                  %v1587 = vld [vmem:[%s1251 + $0x51c] sm:$0xff]
                  %1588 = vst [vmem:[%s1252 + $0x29c] sm:$0xff] %v1587
                  %v1589 = vld [vmem:[%s1251 + $0x520] sm:$0xff]
                  %1590 = vst [vmem:[%s1252 + $0x2a0] sm:$0xff] %v1589
                  %v1591 = vld [vmem:[%s1251 + $0x524] sm:$0xff]
                  %1592 = vst [vmem:[%s1252 + $0x2a4] sm:$0xff] %v1591
                  %v1593 = vld [vmem:[%s1251 + $0x528] sm:$0xff]
                  %1594 = vst [vmem:[%s1252 + $0x2a8] sm:$0xff] %v1593
                  %v1595 = vld [vmem:[%s1251 + $0x52c] sm:$0xff]
                  %1596 = vst [vmem:[%s1252 + $0x2ac] sm:$0xff] %v1595
                  %v1597 = vld [vmem:[%s1251 + $0x530] sm:$0xff]
                  %1598 = vst [vmem:[%s1252 + $0x2b0] sm:$0xff] %v1597
                  %v1599 = vld [vmem:[%s1251 + $0x534] sm:$0xff]
                  %1600 = vst [vmem:[%s1252 + $0x2b4] sm:$0xff] %v1599
                  %v1601 = vld [vmem:[%s1251 + $0x538] sm:$0xff]
                  %1602 = vst [vmem:[%s1252 + $0x2b8] sm:$0xff] %v1601
                  %v1603 = vld [vmem:[%s1251 + $0x53c] sm:$0xff]
                  %1604 = vst [vmem:[%s1252 + $0x2bc] sm:$0xff] %v1603
                  %v1605 = vld [vmem:[%s1251 + $0x580] sm:$0xff]
                  %1606 = vst [vmem:[%s1252 + $0x2c0] sm:$0xff] %v1605
                  %v1607 = vld [vmem:[%s1251 + $0x584] sm:$0xff]
                  %1608 = vst [vmem:[%s1252 + $0x2c4] sm:$0xff] %v1607
                  %v1609 = vld [vmem:[%s1251 + $0x588] sm:$0xff]
                  %1610 = vst [vmem:[%s1252 + $0x2c8] sm:$0xff] %v1609
                  %v1611 = vld [vmem:[%s1251 + $0x58c] sm:$0xff]
                  %1612 = vst [vmem:[%s1252 + $0x2cc] sm:$0xff] %v1611
                  %v1613 = vld [vmem:[%s1251 + $0x590] sm:$0xff]
                  %1614 = vst [vmem:[%s1252 + $0x2d0] sm:$0xff] %v1613
                  %v1615 = vld [vmem:[%s1251 + $0x594] sm:$0xff]
                  %1616 = vst [vmem:[%s1252 + $0x2d4] sm:$0xff] %v1615
                  %v1617 = vld [vmem:[%s1251 + $0x598] sm:$0xff]
                  %1618 = vst [vmem:[%s1252 + $0x2d8] sm:$0xff] %v1617
                  %v1619 = vld [vmem:[%s1251 + $0x59c] sm:$0xff]
                  %1620 = vst [vmem:[%s1252 + $0x2dc] sm:$0xff] %v1619
                  %v1621 = vld [vmem:[%s1251 + $0x5a0] sm:$0xff]
                  %1622 = vst [vmem:[%s1252 + $0x2e0] sm:$0xff] %v1621
                  %v1623 = vld [vmem:[%s1251 + $0x5a4] sm:$0xff]
                  %1624 = vst [vmem:[%s1252 + $0x2e4] sm:$0xff] %v1623
                  %v1625 = vld [vmem:[%s1251 + $0x5a8] sm:$0xff]
                  %1626 = vst [vmem:[%s1252 + $0x2e8] sm:$0xff] %v1625
                  %v1627 = vld [vmem:[%s1251 + $0x5ac] sm:$0xff]
                  %1628 = vst [vmem:[%s1252 + $0x2ec] sm:$0xff] %v1627
                  %v1629 = vld [vmem:[%s1251 + $0x5b0] sm:$0xff]
                  %1630 = vst [vmem:[%s1252 + $0x2f0] sm:$0xff] %v1629
                  %v1631 = vld [vmem:[%s1251 + $0x5b4] sm:$0xff]
                  %1632 = vst [vmem:[%s1252 + $0x2f4] sm:$0xff] %v1631
                  %v1633 = vld [vmem:[%s1251 + $0x5b8] sm:$0xff]
                  %1634 = vst [vmem:[%s1252 + $0x2f8] sm:$0xff] %v1633
                  %v1635 = vld [vmem:[%s1251 + $0x5bc] sm:$0xff]
                  %1636 = vst [vmem:[%s1252 + $0x2fc] sm:$0xff] %v1635
                  %v1637 = vld [vmem:[%s1251 + $0x600] sm:$0xff]
                  %1638 = vst [vmem:[%s1252 + $0x300] sm:$0xff] %v1637
                  %v1639 = vld [vmem:[%s1251 + $0x604] sm:$0xff]
                  %1640 = vst [vmem:[%s1252 + $0x304] sm:$0xff] %v1639
                  %v1641 = vld [vmem:[%s1251 + $0x608] sm:$0xff]
                  %1642 = vst [vmem:[%s1252 + $0x308] sm:$0xff] %v1641
                  %v1643 = vld [vmem:[%s1251 + $0x60c] sm:$0xff]
                  %1644 = vst [vmem:[%s1252 + $0x30c] sm:$0xff] %v1643
                  %v1645 = vld [vmem:[%s1251 + $0x610] sm:$0xff]
                  %1646 = vst [vmem:[%s1252 + $0x310] sm:$0xff] %v1645
                  %v1647 = vld [vmem:[%s1251 + $0x614] sm:$0xff]
                  %1648 = vst [vmem:[%s1252 + $0x314] sm:$0xff] %v1647
                  %v1649 = vld [vmem:[%s1251 + $0x618] sm:$0xff]
                  %1650 = vst [vmem:[%s1252 + $0x318] sm:$0xff] %v1649
                  %v1651 = vld [vmem:[%s1251 + $0x61c] sm:$0xff]
                  %1652 = vst [vmem:[%s1252 + $0x31c] sm:$0xff] %v1651
                  %v1653 = vld [vmem:[%s1251 + $0x620] sm:$0xff]
                  %1654 = vst [vmem:[%s1252 + $0x320] sm:$0xff] %v1653
                  %v1655 = vld [vmem:[%s1251 + $0x624] sm:$0xff]
                  %1656 = vst [vmem:[%s1252 + $0x324] sm:$0xff] %v1655
                  %v1657 = vld [vmem:[%s1251 + $0x628] sm:$0xff]
                  %1658 = vst [vmem:[%s1252 + $0x328] sm:$0xff] %v1657
                  %v1659 = vld [vmem:[%s1251 + $0x62c] sm:$0xff]
                  %1660 = vst [vmem:[%s1252 + $0x32c] sm:$0xff] %v1659
                  %v1661 = vld [vmem:[%s1251 + $0x630] sm:$0xff]
                  %1662 = vst [vmem:[%s1252 + $0x330] sm:$0xff] %v1661
                  %v1663 = vld [vmem:[%s1251 + $0x634] sm:$0xff]
                  %1664 = vst [vmem:[%s1252 + $0x334] sm:$0xff] %v1663
                  %v1665 = vld [vmem:[%s1251 + $0x638] sm:$0xff]
                  %1666 = vst [vmem:[%s1252 + $0x338] sm:$0xff] %v1665
                  %v1667 = vld [vmem:[%s1251 + $0x63c] sm:$0xff]
                  %1668 = vst [vmem:[%s1252 + $0x33c] sm:$0xff] %v1667
                  %v1669 = vld [vmem:[%s1251 + $0x680] sm:$0xff]
                  %1670 = vst [vmem:[%s1252 + $0x340] sm:$0xff] %v1669
                  %v1671 = vld [vmem:[%s1251 + $0x684] sm:$0xff]
                  %1672 = vst [vmem:[%s1252 + $0x344] sm:$0xff] %v1671
                  %v1673 = vld [vmem:[%s1251 + $0x688] sm:$0xff]
                  %1674 = vst [vmem:[%s1252 + $0x348] sm:$0xff] %v1673
                  %v1675 = vld [vmem:[%s1251 + $0x68c] sm:$0xff]
                  %1676 = vst [vmem:[%s1252 + $0x34c] sm:$0xff] %v1675
                  %v1677 = vld [vmem:[%s1251 + $0x690] sm:$0xff]
                  %1678 = vst [vmem:[%s1252 + $0x350] sm:$0xff] %v1677
                  %v1679 = vld [vmem:[%s1251 + $0x694] sm:$0xff]
                  %1680 = vst [vmem:[%s1252 + $0x354] sm:$0xff] %v1679
                  %v1681 = vld [vmem:[%s1251 + $0x698] sm:$0xff]
                  %1682 = vst [vmem:[%s1252 + $0x358] sm:$0xff] %v1681
                  %v1683 = vld [vmem:[%s1251 + $0x69c] sm:$0xff]
                  %1684 = vst [vmem:[%s1252 + $0x35c] sm:$0xff] %v1683
                  %v1685 = vld [vmem:[%s1251 + $0x6a0] sm:$0xff]
                  %1686 = vst [vmem:[%s1252 + $0x360] sm:$0xff] %v1685
                  %v1687 = vld [vmem:[%s1251 + $0x6a4] sm:$0xff]
                  %1688 = vst [vmem:[%s1252 + $0x364] sm:$0xff] %v1687
                  %v1689 = vld [vmem:[%s1251 + $0x6a8] sm:$0xff]
                  %1690 = vst [vmem:[%s1252 + $0x368] sm:$0xff] %v1689
                  %v1691 = vld [vmem:[%s1251 + $0x6ac] sm:$0xff]
                  %1692 = vst [vmem:[%s1252 + $0x36c] sm:$0xff] %v1691
                  %v1693 = vld [vmem:[%s1251 + $0x6b0] sm:$0xff]
                  %1694 = vst [vmem:[%s1252 + $0x370] sm:$0xff] %v1693
                  %v1695 = vld [vmem:[%s1251 + $0x6b4] sm:$0xff]
                  %1696 = vst [vmem:[%s1252 + $0x374] sm:$0xff] %v1695
                  %v1697 = vld [vmem:[%s1251 + $0x6b8] sm:$0xff]
                  %1698 = vst [vmem:[%s1252 + $0x378] sm:$0xff] %v1697
                  %v1699 = vld [vmem:[%s1251 + $0x6bc] sm:$0xff]
                  %1700 = vst [vmem:[%s1252 + $0x37c] sm:$0xff] %v1699
                  %v1701 = vld [vmem:[%s1251 + $0x700] sm:$0xff]
                  %1702 = vst [vmem:[%s1252 + $0x380] sm:$0xff] %v1701
                  %v1703 = vld [vmem:[%s1251 + $0x704] sm:$0xff]
                  %1704 = vst [vmem:[%s1252 + $0x384] sm:$0xff] %v1703
                  %v1705 = vld [vmem:[%s1251 + $0x708] sm:$0xff]
                  %1706 = vst [vmem:[%s1252 + $0x388] sm:$0xff] %v1705
                  %v1707 = vld [vmem:[%s1251 + $0x70c] sm:$0xff]
                  %1708 = vst [vmem:[%s1252 + $0x38c] sm:$0xff] %v1707
                  %v1709 = vld [vmem:[%s1251 + $0x710] sm:$0xff]
                  %1710 = vst [vmem:[%s1252 + $0x390] sm:$0xff] %v1709
                  %v1711 = vld [vmem:[%s1251 + $0x714] sm:$0xff]
                  %1712 = vst [vmem:[%s1252 + $0x394] sm:$0xff] %v1711
                  %v1713 = vld [vmem:[%s1251 + $0x718] sm:$0xff]
                  %1714 = vst [vmem:[%s1252 + $0x398] sm:$0xff] %v1713
                  %v1715 = vld [vmem:[%s1251 + $0x71c] sm:$0xff]
                  %1716 = vst [vmem:[%s1252 + $0x39c] sm:$0xff] %v1715
                  %v1717 = vld [vmem:[%s1251 + $0x720] sm:$0xff]
                  %1718 = vst [vmem:[%s1252 + $0x3a0] sm:$0xff] %v1717
                  %v1719 = vld [vmem:[%s1251 + $0x724] sm:$0xff]
                  %1720 = vst [vmem:[%s1252 + $0x3a4] sm:$0xff] %v1719
                  %v1721 = vld [vmem:[%s1251 + $0x728] sm:$0xff]
                  %1722 = vst [vmem:[%s1252 + $0x3a8] sm:$0xff] %v1721
                  %v1723 = vld [vmem:[%s1251 + $0x72c] sm:$0xff]
                  %1724 = vst [vmem:[%s1252 + $0x3ac] sm:$0xff] %v1723
                  %v1725 = vld [vmem:[%s1251 + $0x730] sm:$0xff]
                  %1726 = vst [vmem:[%s1252 + $0x3b0] sm:$0xff] %v1725
                  %v1727 = vld [vmem:[%s1251 + $0x734] sm:$0xff]
                  %1728 = vst [vmem:[%s1252 + $0x3b4] sm:$0xff] %v1727
                  %v1729 = vld [vmem:[%s1251 + $0x738] sm:$0xff]
                  %1730 = vst [vmem:[%s1252 + $0x3b8] sm:$0xff] %v1729
                  %v1731 = vld [vmem:[%s1251 + $0x73c] sm:$0xff]
                  %1732 = vst [vmem:[%s1252 + $0x3bc] sm:$0xff] %v1731
                  %v1733 = vld [vmem:[%s1251 + $0x780] sm:$0xff]
                  %1734 = vst [vmem:[%s1252 + $0x3c0] sm:$0xff] %v1733
                  %v1735 = vld [vmem:[%s1251 + $0x784] sm:$0xff]
                  %1736 = vst [vmem:[%s1252 + $0x3c4] sm:$0xff] %v1735
                  %v1737 = vld [vmem:[%s1251 + $0x788] sm:$0xff]
                  %1738 = vst [vmem:[%s1252 + $0x3c8] sm:$0xff] %v1737
                  %v1739 = vld [vmem:[%s1251 + $0x78c] sm:$0xff]
                  %1740 = vst [vmem:[%s1252 + $0x3cc] sm:$0xff] %v1739
                  %v1741 = vld [vmem:[%s1251 + $0x790] sm:$0xff]
                  %1742 = vst [vmem:[%s1252 + $0x3d0] sm:$0xff] %v1741
                  %v1743 = vld [vmem:[%s1251 + $0x794] sm:$0xff]
                  %1744 = vst [vmem:[%s1252 + $0x3d4] sm:$0xff] %v1743
                  %v1745 = vld [vmem:[%s1251 + $0x798] sm:$0xff]
                  %1746 = vst [vmem:[%s1252 + $0x3d8] sm:$0xff] %v1745
                  %v1747 = vld [vmem:[%s1251 + $0x79c] sm:$0xff]
                  %1748 = vst [vmem:[%s1252 + $0x3dc] sm:$0xff] %v1747
                  %v1749 = vld [vmem:[%s1251 + $0x7a0] sm:$0xff]
                  %1750 = vst [vmem:[%s1252 + $0x3e0] sm:$0xff] %v1749
                  %v1751 = vld [vmem:[%s1251 + $0x7a4] sm:$0xff]
                  %1752 = vst [vmem:[%s1252 + $0x3e4] sm:$0xff] %v1751
                  %v1753 = vld [vmem:[%s1251 + $0x7a8] sm:$0xff]
                  %1754 = vst [vmem:[%s1252 + $0x3e8] sm:$0xff] %v1753
                  %v1755 = vld [vmem:[%s1251 + $0x7ac] sm:$0xff]
                  %1756 = vst [vmem:[%s1252 + $0x3ec] sm:$0xff] %v1755
                  %v1757 = vld [vmem:[%s1251 + $0x7b0] sm:$0xff]
                  %1758 = vst [vmem:[%s1252 + $0x3f0] sm:$0xff] %v1757
                  %v1759 = vld [vmem:[%s1251 + $0x7b4] sm:$0xff]
                  %1760 = vst [vmem:[%s1252 + $0x3f4] sm:$0xff] %v1759
                  %v1761 = vld [vmem:[%s1251 + $0x7b8] sm:$0xff]
                  %1762 = vst [vmem:[%s1252 + $0x3f8] sm:$0xff] %v1761
                  %v1763 = vld [vmem:[%s1251 + $0x7bc] sm:$0xff]
                  %1764 = vst [vmem:[%s1252 + $0x3fc] sm:$0xff] %v1763
                  %s1765 = sadd.s32 1, %s1250
                  %p1766 = scmp.ge.s32.totalorder %s1765, 0
                  %s1767 = scalar_select %p1766, 0, %s1765
                  %s1768 = smul.u32 %s1767, 8
                  %s1769 = smul.u32 %s1767, 8
                  %s1770 = scalar_lea.vmem %s183, %s1768
                  %s1771 = scalar_lea.vmem %s177, %s1769 [#allocation4]
                $region67: #{matchsum_forward.1} parent=61 // loop_footer
                  %s1249 = sadd.s32 1, %s1245
                $region68: #{matchsum_forward.1} parent=61 // loop_footer_branch
                  %1244 = sbr.rel target = $region64
                $region69: #{matchsum_forward.1} parent=61 // loop_exit
                  _
                %s1773 = ssub.s32 16, 1
                loop: start=0, step=1, limit=1
                $region70: #{matchsum_forward.1} parent=61 // loop_pre_header
                  _
                $region71: #{matchsum_forward.1} parent=61 // loop_header
                  %s1775 = sphi 0, %s1779
                  %p1776 = scmp.ge.s32.totalorder %s1775, 1
                  %s1780 = sphi %s183, %s183
                  %s1781 = sphi %s177, %s177
                $region72: #{matchsum_forward.1} parent=61 // loop_header_branch
                  %1778 = sbr.rel (%p1776) target = $region76
                $region73: #{matchsum_forward.1} parent=61 // loop_body
                  %v1782 = vld [vmem:[%s1780] sm:%s1773]
                  %1783 = vst [vmem:[%s1781] sm:%s1773] %v1782
                  %v1784 = vld [vmem:[%s1780 + $0x4] sm:%s1773]
                  %1785 = vst [vmem:[%s1781 + $0x4] sm:%s1773] %v1784
                  %v1786 = vld [vmem:[%s1780 + $0x8] sm:%s1773]
                  %1787 = vst [vmem:[%s1781 + $0x8] sm:%s1773] %v1786
                  %v1788 = vld [vmem:[%s1780 + $0xc] sm:%s1773]
                  %1789 = vst [vmem:[%s1781 + $0xc] sm:%s1773] %v1788
                  %v1790 = vld [vmem:[%s1780 + $0x10] sm:%s1773]
                  %1791 = vst [vmem:[%s1781 + $0x10] sm:%s1773] %v1790
                  %v1792 = vld [vmem:[%s1780 + $0x14] sm:%s1773]
                  %1793 = vst [vmem:[%s1781 + $0x14] sm:%s1773] %v1792
                  %v1794 = vld [vmem:[%s1780 + $0x18] sm:%s1773]
                  %1795 = vst [vmem:[%s1781 + $0x18] sm:%s1773] %v1794
                  %v1796 = vld [vmem:[%s1780 + $0x1c] sm:%s1773]
                  %1797 = vst [vmem:[%s1781 + $0x1c] sm:%s1773] %v1796
                  %v1798 = vld [vmem:[%s1780 + $0x20] sm:%s1773]
                  %1799 = vst [vmem:[%s1781 + $0x20] sm:%s1773] %v1798
                  %v1800 = vld [vmem:[%s1780 + $0x24] sm:%s1773]
                  %1801 = vst [vmem:[%s1781 + $0x24] sm:%s1773] %v1800
                  %v1802 = vld [vmem:[%s1780 + $0x28] sm:%s1773]
                  %1803 = vst [vmem:[%s1781 + $0x28] sm:%s1773] %v1802
                  %v1804 = vld [vmem:[%s1780 + $0x2c] sm:%s1773]
                  %1805 = vst [vmem:[%s1781 + $0x2c] sm:%s1773] %v1804
                  %v1806 = vld [vmem:[%s1780 + $0x30] sm:%s1773]
                  %1807 = vst [vmem:[%s1781 + $0x30] sm:%s1773] %v1806
                  %v1808 = vld [vmem:[%s1780 + $0x34] sm:%s1773]
                  %1809 = vst [vmem:[%s1781 + $0x34] sm:%s1773] %v1808
                  %v1810 = vld [vmem:[%s1780 + $0x38] sm:%s1773]
                  %1811 = vst [vmem:[%s1781 + $0x38] sm:%s1773] %v1810
                  %v1812 = vld [vmem:[%s1780 + $0x3c] sm:%s1773]
                  %1813 = vst [vmem:[%s1781 + $0x3c] sm:%s1773] %v1812
                  %v1814 = vld [vmem:[%s1780 + $0x80] sm:%s1773]
                  %1815 = vst [vmem:[%s1781 + $0x40] sm:%s1773] %v1814
                  %v1816 = vld [vmem:[%s1780 + $0x84] sm:%s1773]
                  %1817 = vst [vmem:[%s1781 + $0x44] sm:%s1773] %v1816
                  %v1818 = vld [vmem:[%s1780 + $0x88] sm:%s1773]
                  %1819 = vst [vmem:[%s1781 + $0x48] sm:%s1773] %v1818
                  %v1820 = vld [vmem:[%s1780 + $0x8c] sm:%s1773]
                  %1821 = vst [vmem:[%s1781 + $0x4c] sm:%s1773] %v1820
                  %v1822 = vld [vmem:[%s1780 + $0x90] sm:%s1773]
                  %1823 = vst [vmem:[%s1781 + $0x50] sm:%s1773] %v1822
                  %v1824 = vld [vmem:[%s1780 + $0x94] sm:%s1773]
                  %1825 = vst [vmem:[%s1781 + $0x54] sm:%s1773] %v1824
                  %v1826 = vld [vmem:[%s1780 + $0x98] sm:%s1773]
                  %1827 = vst [vmem:[%s1781 + $0x58] sm:%s1773] %v1826
                  %v1828 = vld [vmem:[%s1780 + $0x9c] sm:%s1773]
                  %1829 = vst [vmem:[%s1781 + $0x5c] sm:%s1773] %v1828
                  %v1830 = vld [vmem:[%s1780 + $0xa0] sm:%s1773]
                  %1831 = vst [vmem:[%s1781 + $0x60] sm:%s1773] %v1830
                  %v1832 = vld [vmem:[%s1780 + $0xa4] sm:%s1773]
                  %1833 = vst [vmem:[%s1781 + $0x64] sm:%s1773] %v1832
                  %v1834 = vld [vmem:[%s1780 + $0xa8] sm:%s1773]
                  %1835 = vst [vmem:[%s1781 + $0x68] sm:%s1773] %v1834
                  %v1836 = vld [vmem:[%s1780 + $0xac] sm:%s1773]
                  %1837 = vst [vmem:[%s1781 + $0x6c] sm:%s1773] %v1836
                  %v1838 = vld [vmem:[%s1780 + $0xb0] sm:%s1773]
                  %1839 = vst [vmem:[%s1781 + $0x70] sm:%s1773] %v1838
                  %v1840 = vld [vmem:[%s1780 + $0xb4] sm:%s1773]
                  %1841 = vst [vmem:[%s1781 + $0x74] sm:%s1773] %v1840
                  %v1842 = vld [vmem:[%s1780 + $0xb8] sm:%s1773]
                  %1843 = vst [vmem:[%s1781 + $0x78] sm:%s1773] %v1842
                  %v1844 = vld [vmem:[%s1780 + $0xbc] sm:%s1773]
                  %1845 = vst [vmem:[%s1781 + $0x7c] sm:%s1773] %v1844
                  %v1846 = vld [vmem:[%s1780 + $0x100] sm:%s1773]
                  %1847 = vst [vmem:[%s1781 + $0x80] sm:%s1773] %v1846
                  %v1848 = vld [vmem:[%s1780 + $0x104] sm:%s1773]
                  %1849 = vst [vmem:[%s1781 + $0x84] sm:%s1773] %v1848
                  %v1850 = vld [vmem:[%s1780 + $0x108] sm:%s1773]
                  %1851 = vst [vmem:[%s1781 + $0x88] sm:%s1773] %v1850
                  %v1852 = vld [vmem:[%s1780 + $0x10c] sm:%s1773]
                  %1853 = vst [vmem:[%s1781 + $0x8c] sm:%s1773] %v1852
                  %v1854 = vld [vmem:[%s1780 + $0x110] sm:%s1773]
                  %1855 = vst [vmem:[%s1781 + $0x90] sm:%s1773] %v1854
                  %v1856 = vld [vmem:[%s1780 + $0x114] sm:%s1773]
                  %1857 = vst [vmem:[%s1781 + $0x94] sm:%s1773] %v1856
                  %v1858 = vld [vmem:[%s1780 + $0x118] sm:%s1773]
                  %1859 = vst [vmem:[%s1781 + $0x98] sm:%s1773] %v1858
                  %v1860 = vld [vmem:[%s1780 + $0x11c] sm:%s1773]
                  %1861 = vst [vmem:[%s1781 + $0x9c] sm:%s1773] %v1860
                  %v1862 = vld [vmem:[%s1780 + $0x120] sm:%s1773]
                  %1863 = vst [vmem:[%s1781 + $0xa0] sm:%s1773] %v1862
                  %v1864 = vld [vmem:[%s1780 + $0x124] sm:%s1773]
                  %1865 = vst [vmem:[%s1781 + $0xa4] sm:%s1773] %v1864
                  %v1866 = vld [vmem:[%s1780 + $0x128] sm:%s1773]
                  %1867 = vst [vmem:[%s1781 + $0xa8] sm:%s1773] %v1866
                  %v1868 = vld [vmem:[%s1780 + $0x12c] sm:%s1773]
                  %1869 = vst [vmem:[%s1781 + $0xac] sm:%s1773] %v1868
                  %v1870 = vld [vmem:[%s1780 + $0x130] sm:%s1773]
                  %1871 = vst [vmem:[%s1781 + $0xb0] sm:%s1773] %v1870
                  %v1872 = vld [vmem:[%s1780 + $0x134] sm:%s1773]
                  %1873 = vst [vmem:[%s1781 + $0xb4] sm:%s1773] %v1872
                  %v1874 = vld [vmem:[%s1780 + $0x138] sm:%s1773]
                  %1875 = vst [vmem:[%s1781 + $0xb8] sm:%s1773] %v1874
                  %v1876 = vld [vmem:[%s1780 + $0x13c] sm:%s1773]
                  %1877 = vst [vmem:[%s1781 + $0xbc] sm:%s1773] %v1876
                  %v1878 = vld [vmem:[%s1780 + $0x180] sm:%s1773]
                  %1879 = vst [vmem:[%s1781 + $0xc0] sm:%s1773] %v1878
                  %v1880 = vld [vmem:[%s1780 + $0x184] sm:%s1773]
                  %1881 = vst [vmem:[%s1781 + $0xc4] sm:%s1773] %v1880
                  %v1882 = vld [vmem:[%s1780 + $0x188] sm:%s1773]
                  %1883 = vst [vmem:[%s1781 + $0xc8] sm:%s1773] %v1882
                  %v1884 = vld [vmem:[%s1780 + $0x18c] sm:%s1773]
                  %1885 = vst [vmem:[%s1781 + $0xcc] sm:%s1773] %v1884
                  %v1886 = vld [vmem:[%s1780 + $0x190] sm:%s1773]
                  %1887 = vst [vmem:[%s1781 + $0xd0] sm:%s1773] %v1886
                  %v1888 = vld [vmem:[%s1780 + $0x194] sm:%s1773]
                  %1889 = vst [vmem:[%s1781 + $0xd4] sm:%s1773] %v1888
                  %v1890 = vld [vmem:[%s1780 + $0x198] sm:%s1773]
                  %1891 = vst [vmem:[%s1781 + $0xd8] sm:%s1773] %v1890
                  %v1892 = vld [vmem:[%s1780 + $0x19c] sm:%s1773]
                  %1893 = vst [vmem:[%s1781 + $0xdc] sm:%s1773] %v1892
                  %v1894 = vld [vmem:[%s1780 + $0x1a0] sm:%s1773]
                  %1895 = vst [vmem:[%s1781 + $0xe0] sm:%s1773] %v1894
                  %v1896 = vld [vmem:[%s1780 + $0x1a4] sm:%s1773]
                  %1897 = vst [vmem:[%s1781 + $0xe4] sm:%s1773] %v1896
                  %v1898 = vld [vmem:[%s1780 + $0x1a8] sm:%s1773]
                  %1899 = vst [vmem:[%s1781 + $0xe8] sm:%s1773] %v1898
                  %v1900 = vld [vmem:[%s1780 + $0x1ac] sm:%s1773]
                  %1901 = vst [vmem:[%s1781 + $0xec] sm:%s1773] %v1900
                  %v1902 = vld [vmem:[%s1780 + $0x1b0] sm:%s1773]
                  %1903 = vst [vmem:[%s1781 + $0xf0] sm:%s1773] %v1902
                  %v1904 = vld [vmem:[%s1780 + $0x1b4] sm:%s1773]
                  %1905 = vst [vmem:[%s1781 + $0xf4] sm:%s1773] %v1904
                  %v1906 = vld [vmem:[%s1780 + $0x1b8] sm:%s1773]
                  %1907 = vst [vmem:[%s1781 + $0xf8] sm:%s1773] %v1906
                  %v1908 = vld [vmem:[%s1780 + $0x1bc] sm:%s1773]
                  %1909 = vst [vmem:[%s1781 + $0xfc] sm:%s1773] %v1908
                  %v1910 = vld [vmem:[%s1780 + $0x200] sm:%s1773]
                  %1911 = vst [vmem:[%s1781 + $0x100] sm:%s1773] %v1910
                  %v1912 = vld [vmem:[%s1780 + $0x204] sm:%s1773]
                  %1913 = vst [vmem:[%s1781 + $0x104] sm:%s1773] %v1912
                  %v1914 = vld [vmem:[%s1780 + $0x208] sm:%s1773]
                  %1915 = vst [vmem:[%s1781 + $0x108] sm:%s1773] %v1914
                  %v1916 = vld [vmem:[%s1780 + $0x20c] sm:%s1773]
                  %1917 = vst [vmem:[%s1781 + $0x10c] sm:%s1773] %v1916
                  %v1918 = vld [vmem:[%s1780 + $0x210] sm:%s1773]
                  %1919 = vst [vmem:[%s1781 + $0x110] sm:%s1773] %v1918
                  %v1920 = vld [vmem:[%s1780 + $0x214] sm:%s1773]
                  %1921 = vst [vmem:[%s1781 + $0x114] sm:%s1773] %v1920
                  %v1922 = vld [vmem:[%s1780 + $0x218] sm:%s1773]
                  %1923 = vst [vmem:[%s1781 + $0x118] sm:%s1773] %v1922
                  %v1924 = vld [vmem:[%s1780 + $0x21c] sm:%s1773]
                  %1925 = vst [vmem:[%s1781 + $0x11c] sm:%s1773] %v1924
                  %v1926 = vld [vmem:[%s1780 + $0x220] sm:%s1773]
                  %1927 = vst [vmem:[%s1781 + $0x120] sm:%s1773] %v1926
                  %v1928 = vld [vmem:[%s1780 + $0x224] sm:%s1773]
                  %1929 = vst [vmem:[%s1781 + $0x124] sm:%s1773] %v1928
                  %v1930 = vld [vmem:[%s1780 + $0x228] sm:%s1773]
                  %1931 = vst [vmem:[%s1781 + $0x128] sm:%s1773] %v1930
                  %v1932 = vld [vmem:[%s1780 + $0x22c] sm:%s1773]
                  %1933 = vst [vmem:[%s1781 + $0x12c] sm:%s1773] %v1932
                  %v1934 = vld [vmem:[%s1780 + $0x230] sm:%s1773]
                  %1935 = vst [vmem:[%s1781 + $0x130] sm:%s1773] %v1934
                  %v1936 = vld [vmem:[%s1780 + $0x234] sm:%s1773]
                  %1937 = vst [vmem:[%s1781 + $0x134] sm:%s1773] %v1936
                  %v1938 = vld [vmem:[%s1780 + $0x238] sm:%s1773]
                  %1939 = vst [vmem:[%s1781 + $0x138] sm:%s1773] %v1938
                  %v1940 = vld [vmem:[%s1780 + $0x23c] sm:%s1773]
                  %1941 = vst [vmem:[%s1781 + $0x13c] sm:%s1773] %v1940
                  %v1942 = vld [vmem:[%s1780 + $0x280] sm:%s1773]
                  %1943 = vst [vmem:[%s1781 + $0x140] sm:%s1773] %v1942
                  %v1944 = vld [vmem:[%s1780 + $0x284] sm:%s1773]
                  %1945 = vst [vmem:[%s1781 + $0x144] sm:%s1773] %v1944
                  %v1946 = vld [vmem:[%s1780 + $0x288] sm:%s1773]
                  %1947 = vst [vmem:[%s1781 + $0x148] sm:%s1773] %v1946
                  %v1948 = vld [vmem:[%s1780 + $0x28c] sm:%s1773]
                  %1949 = vst [vmem:[%s1781 + $0x14c] sm:%s1773] %v1948
                  %v1950 = vld [vmem:[%s1780 + $0x290] sm:%s1773]
                  %1951 = vst [vmem:[%s1781 + $0x150] sm:%s1773] %v1950
                  %v1952 = vld [vmem:[%s1780 + $0x294] sm:%s1773]
                  %1953 = vst [vmem:[%s1781 + $0x154] sm:%s1773] %v1952
                  %v1954 = vld [vmem:[%s1780 + $0x298] sm:%s1773]
                  %1955 = vst [vmem:[%s1781 + $0x158] sm:%s1773] %v1954
                  %v1956 = vld [vmem:[%s1780 + $0x29c] sm:%s1773]
                  %1957 = vst [vmem:[%s1781 + $0x15c] sm:%s1773] %v1956
                  %v1958 = vld [vmem:[%s1780 + $0x2a0] sm:%s1773]
                  %1959 = vst [vmem:[%s1781 + $0x160] sm:%s1773] %v1958
                  %v1960 = vld [vmem:[%s1780 + $0x2a4] sm:%s1773]
                  %1961 = vst [vmem:[%s1781 + $0x164] sm:%s1773] %v1960
                  %v1962 = vld [vmem:[%s1780 + $0x2a8] sm:%s1773]
                  %1963 = vst [vmem:[%s1781 + $0x168] sm:%s1773] %v1962
                  %v1964 = vld [vmem:[%s1780 + $0x2ac] sm:%s1773]
                  %1965 = vst [vmem:[%s1781 + $0x16c] sm:%s1773] %v1964
                  %v1966 = vld [vmem:[%s1780 + $0x2b0] sm:%s1773]
                  %1967 = vst [vmem:[%s1781 + $0x170] sm:%s1773] %v1966
                  %v1968 = vld [vmem:[%s1780 + $0x2b4] sm:%s1773]
                  %1969 = vst [vmem:[%s1781 + $0x174] sm:%s1773] %v1968
                  %v1970 = vld [vmem:[%s1780 + $0x2b8] sm:%s1773]
                  %1971 = vst [vmem:[%s1781 + $0x178] sm:%s1773] %v1970
                  %v1972 = vld [vmem:[%s1780 + $0x2bc] sm:%s1773]
                  %1973 = vst [vmem:[%s1781 + $0x17c] sm:%s1773] %v1972
                  %v1974 = vld [vmem:[%s1780 + $0x300] sm:%s1773]
                  %1975 = vst [vmem:[%s1781 + $0x180] sm:%s1773] %v1974
                  %v1976 = vld [vmem:[%s1780 + $0x304] sm:%s1773]
                  %1977 = vst [vmem:[%s1781 + $0x184] sm:%s1773] %v1976
                  %v1978 = vld [vmem:[%s1780 + $0x308] sm:%s1773]
                  %1979 = vst [vmem:[%s1781 + $0x188] sm:%s1773] %v1978
                  %v1980 = vld [vmem:[%s1780 + $0x30c] sm:%s1773]
                  %1981 = vst [vmem:[%s1781 + $0x18c] sm:%s1773] %v1980
                  %v1982 = vld [vmem:[%s1780 + $0x310] sm:%s1773]
                  %1983 = vst [vmem:[%s1781 + $0x190] sm:%s1773] %v1982
                  %v1984 = vld [vmem:[%s1780 + $0x314] sm:%s1773]
                  %1985 = vst [vmem:[%s1781 + $0x194] sm:%s1773] %v1984
                  %v1986 = vld [vmem:[%s1780 + $0x318] sm:%s1773]
                  %1987 = vst [vmem:[%s1781 + $0x198] sm:%s1773] %v1986
                  %v1988 = vld [vmem:[%s1780 + $0x31c] sm:%s1773]
                  %1989 = vst [vmem:[%s1781 + $0x19c] sm:%s1773] %v1988
                  %v1990 = vld [vmem:[%s1780 + $0x320] sm:%s1773]
                  %1991 = vst [vmem:[%s1781 + $0x1a0] sm:%s1773] %v1990
                  %v1992 = vld [vmem:[%s1780 + $0x324] sm:%s1773]
                  %1993 = vst [vmem:[%s1781 + $0x1a4] sm:%s1773] %v1992
                  %v1994 = vld [vmem:[%s1780 + $0x328] sm:%s1773]
                  %1995 = vst [vmem:[%s1781 + $0x1a8] sm:%s1773] %v1994
                  %v1996 = vld [vmem:[%s1780 + $0x32c] sm:%s1773]
                  %1997 = vst [vmem:[%s1781 + $0x1ac] sm:%s1773] %v1996
                  %v1998 = vld [vmem:[%s1780 + $0x330] sm:%s1773]
                  %1999 = vst [vmem:[%s1781 + $0x1b0] sm:%s1773] %v1998
                  %v2000 = vld [vmem:[%s1780 + $0x334] sm:%s1773]
                  %2001 = vst [vmem:[%s1781 + $0x1b4] sm:%s1773] %v2000
                  %v2002 = vld [vmem:[%s1780 + $0x338] sm:%s1773]
                  %2003 = vst [vmem:[%s1781 + $0x1b8] sm:%s1773] %v2002
                  %v2004 = vld [vmem:[%s1780 + $0x33c] sm:%s1773]
                  %2005 = vst [vmem:[%s1781 + $0x1bc] sm:%s1773] %v2004
                  %v2006 = vld [vmem:[%s1780 + $0x380] sm:%s1773]
                  %2007 = vst [vmem:[%s1781 + $0x1c0] sm:%s1773] %v2006
                  %v2008 = vld [vmem:[%s1780 + $0x384] sm:%s1773]
                  %2009 = vst [vmem:[%s1781 + $0x1c4] sm:%s1773] %v2008
                  %v2010 = vld [vmem:[%s1780 + $0x388] sm:%s1773]
                  %2011 = vst [vmem:[%s1781 + $0x1c8] sm:%s1773] %v2010
                  %v2012 = vld [vmem:[%s1780 + $0x38c] sm:%s1773]
                  %2013 = vst [vmem:[%s1781 + $0x1cc] sm:%s1773] %v2012
                  %v2014 = vld [vmem:[%s1780 + $0x390] sm:%s1773]
                  %2015 = vst [vmem:[%s1781 + $0x1d0] sm:%s1773] %v2014
                  %v2016 = vld [vmem:[%s1780 + $0x394] sm:%s1773]
                  %2017 = vst [vmem:[%s1781 + $0x1d4] sm:%s1773] %v2016
                  %v2018 = vld [vmem:[%s1780 + $0x398] sm:%s1773]
                  %2019 = vst [vmem:[%s1781 + $0x1d8] sm:%s1773] %v2018
                  %v2020 = vld [vmem:[%s1780 + $0x39c] sm:%s1773]
                  %2021 = vst [vmem:[%s1781 + $0x1dc] sm:%s1773] %v2020
                  %v2022 = vld [vmem:[%s1780 + $0x3a0] sm:%s1773]
                  %2023 = vst [vmem:[%s1781 + $0x1e0] sm:%s1773] %v2022
                  %v2024 = vld [vmem:[%s1780 + $0x3a4] sm:%s1773]
                  %2025 = vst [vmem:[%s1781 + $0x1e4] sm:%s1773] %v2024
                  %v2026 = vld [vmem:[%s1780 + $0x3a8] sm:%s1773]
                  %2027 = vst [vmem:[%s1781 + $0x1e8] sm:%s1773] %v2026
                  %v2028 = vld [vmem:[%s1780 + $0x3ac] sm:%s1773]
                  %2029 = vst [vmem:[%s1781 + $0x1ec] sm:%s1773] %v2028
                  %v2030 = vld [vmem:[%s1780 + $0x3b0] sm:%s1773]
                  %2031 = vst [vmem:[%s1781 + $0x1f0] sm:%s1773] %v2030
                  %v2032 = vld [vmem:[%s1780 + $0x3b4] sm:%s1773]
                  %2033 = vst [vmem:[%s1781 + $0x1f4] sm:%s1773] %v2032
                  %v2034 = vld [vmem:[%s1780 + $0x3b8] sm:%s1773]
                  %2035 = vst [vmem:[%s1781 + $0x1f8] sm:%s1773] %v2034
                  %v2036 = vld [vmem:[%s1780 + $0x3bc] sm:%s1773]
                  %2037 = vst [vmem:[%s1781 + $0x1fc] sm:%s1773] %v2036
                  %v2038 = vld [vmem:[%s1780 + $0x400] sm:%s1773]
                  %2039 = vst [vmem:[%s1781 + $0x200] sm:%s1773] %v2038
                  %v2040 = vld [vmem:[%s1780 + $0x404] sm:%s1773]
                  %2041 = vst [vmem:[%s1781 + $0x204] sm:%s1773] %v2040
                  %v2042 = vld [vmem:[%s1780 + $0x408] sm:%s1773]
                  %2043 = vst [vmem:[%s1781 + $0x208] sm:%s1773] %v2042
                  %v2044 = vld [vmem:[%s1780 + $0x40c] sm:%s1773]
                  %2045 = vst [vmem:[%s1781 + $0x20c] sm:%s1773] %v2044
                  %v2046 = vld [vmem:[%s1780 + $0x410] sm:%s1773]
                  %2047 = vst [vmem:[%s1781 + $0x210] sm:%s1773] %v2046
                  %v2048 = vld [vmem:[%s1780 + $0x414] sm:%s1773]
                  %2049 = vst [vmem:[%s1781 + $0x214] sm:%s1773] %v2048
                  %v2050 = vld [vmem:[%s1780 + $0x418] sm:%s1773]
                  %2051 = vst [vmem:[%s1781 + $0x218] sm:%s1773] %v2050
                  %v2052 = vld [vmem:[%s1780 + $0x41c] sm:%s1773]
                  %2053 = vst [vmem:[%s1781 + $0x21c] sm:%s1773] %v2052
                  %v2054 = vld [vmem:[%s1780 + $0x420] sm:%s1773]
                  %2055 = vst [vmem:[%s1781 + $0x220] sm:%s1773] %v2054
                  %v2056 = vld [vmem:[%s1780 + $0x424] sm:%s1773]
                  %2057 = vst [vmem:[%s1781 + $0x224] sm:%s1773] %v2056
                  %v2058 = vld [vmem:[%s1780 + $0x428] sm:%s1773]
                  %2059 = vst [vmem:[%s1781 + $0x228] sm:%s1773] %v2058
                  %v2060 = vld [vmem:[%s1780 + $0x42c] sm:%s1773]
                  %2061 = vst [vmem:[%s1781 + $0x22c] sm:%s1773] %v2060
                  %v2062 = vld [vmem:[%s1780 + $0x430] sm:%s1773]
                  %2063 = vst [vmem:[%s1781 + $0x230] sm:%s1773] %v2062
                  %v2064 = vld [vmem:[%s1780 + $0x434] sm:%s1773]
                  %2065 = vst [vmem:[%s1781 + $0x234] sm:%s1773] %v2064
                  %v2066 = vld [vmem:[%s1780 + $0x438] sm:%s1773]
                  %2067 = vst [vmem:[%s1781 + $0x238] sm:%s1773] %v2066
                  %v2068 = vld [vmem:[%s1780 + $0x43c] sm:%s1773]
                  %2069 = vst [vmem:[%s1781 + $0x23c] sm:%s1773] %v2068
                  %v2070 = vld [vmem:[%s1780 + $0x480] sm:%s1773]
                  %2071 = vst [vmem:[%s1781 + $0x240] sm:%s1773] %v2070
                  %v2072 = vld [vmem:[%s1780 + $0x484] sm:%s1773]
                  %2073 = vst [vmem:[%s1781 + $0x244] sm:%s1773] %v2072
                  %v2074 = vld [vmem:[%s1780 + $0x488] sm:%s1773]
                  %2075 = vst [vmem:[%s1781 + $0x248] sm:%s1773] %v2074
                  %v2076 = vld [vmem:[%s1780 + $0x48c] sm:%s1773]
                  %2077 = vst [vmem:[%s1781 + $0x24c] sm:%s1773] %v2076
                  %v2078 = vld [vmem:[%s1780 + $0x490] sm:%s1773]
                  %2079 = vst [vmem:[%s1781 + $0x250] sm:%s1773] %v2078
                  %v2080 = vld [vmem:[%s1780 + $0x494] sm:%s1773]
                  %2081 = vst [vmem:[%s1781 + $0x254] sm:%s1773] %v2080
                  %v2082 = vld [vmem:[%s1780 + $0x498] sm:%s1773]
                  %2083 = vst [vmem:[%s1781 + $0x258] sm:%s1773] %v2082
                  %v2084 = vld [vmem:[%s1780 + $0x49c] sm:%s1773]
                  %2085 = vst [vmem:[%s1781 + $0x25c] sm:%s1773] %v2084
                  %v2086 = vld [vmem:[%s1780 + $0x4a0] sm:%s1773]
                  %2087 = vst [vmem:[%s1781 + $0x260] sm:%s1773] %v2086
                  %v2088 = vld [vmem:[%s1780 + $0x4a4] sm:%s1773]
                  %2089 = vst [vmem:[%s1781 + $0x264] sm:%s1773] %v2088
                  %v2090 = vld [vmem:[%s1780 + $0x4a8] sm:%s1773]
                  %2091 = vst [vmem:[%s1781 + $0x268] sm:%s1773] %v2090
                  %v2092 = vld [vmem:[%s1780 + $0x4ac] sm:%s1773]
                  %2093 = vst [vmem:[%s1781 + $0x26c] sm:%s1773] %v2092
                  %v2094 = vld [vmem:[%s1780 + $0x4b0] sm:%s1773]
                  %2095 = vst [vmem:[%s1781 + $0x270] sm:%s1773] %v2094
                  %v2096 = vld [vmem:[%s1780 + $0x4b4] sm:%s1773]
                  %2097 = vst [vmem:[%s1781 + $0x274] sm:%s1773] %v2096
                  %v2098 = vld [vmem:[%s1780 + $0x4b8] sm:%s1773]
                  %2099 = vst [vmem:[%s1781 + $0x278] sm:%s1773] %v2098
                  %v2100 = vld [vmem:[%s1780 + $0x4bc] sm:%s1773]
                  %2101 = vst [vmem:[%s1781 + $0x27c] sm:%s1773] %v2100
                  %v2102 = vld [vmem:[%s1780 + $0x500] sm:%s1773]
                  %2103 = vst [vmem:[%s1781 + $0x280] sm:%s1773] %v2102
                  %v2104 = vld [vmem:[%s1780 + $0x504] sm:%s1773]
                  %2105 = vst [vmem:[%s1781 + $0x284] sm:%s1773] %v2104
                  %v2106 = vld [vmem:[%s1780 + $0x508] sm:%s1773]
                  %2107 = vst [vmem:[%s1781 + $0x288] sm:%s1773] %v2106
                  %v2108 = vld [vmem:[%s1780 + $0x50c] sm:%s1773]
                  %2109 = vst [vmem:[%s1781 + $0x28c] sm:%s1773] %v2108
                  %v2110 = vld [vmem:[%s1780 + $0x510] sm:%s1773]
                  %2111 = vst [vmem:[%s1781 + $0x290] sm:%s1773] %v2110
                  %v2112 = vld [vmem:[%s1780 + $0x514] sm:%s1773]
                  %2113 = vst [vmem:[%s1781 + $0x294] sm:%s1773] %v2112
                  %v2114 = vld [vmem:[%s1780 + $0x518] sm:%s1773]
                  %2115 = vst [vmem:[%s1781 + $0x298] sm:%s1773] %v2114
                  %v2116 = vld [vmem:[%s1780 + $0x51c] sm:%s1773]
                  %2117 = vst [vmem:[%s1781 + $0x29c] sm:%s1773] %v2116
                  %v2118 = vld [vmem:[%s1780 + $0x520] sm:%s1773]
                  %2119 = vst [vmem:[%s1781 + $0x2a0] sm:%s1773] %v2118
                  %v2120 = vld [vmem:[%s1780 + $0x524] sm:%s1773]
                  %2121 = vst [vmem:[%s1781 + $0x2a4] sm:%s1773] %v2120
                  %v2122 = vld [vmem:[%s1780 + $0x528] sm:%s1773]
                  %2123 = vst [vmem:[%s1781 + $0x2a8] sm:%s1773] %v2122
                  %v2124 = vld [vmem:[%s1780 + $0x52c] sm:%s1773]
                  %2125 = vst [vmem:[%s1781 + $0x2ac] sm:%s1773] %v2124
                  %v2126 = vld [vmem:[%s1780 + $0x530] sm:%s1773]
                  %2127 = vst [vmem:[%s1781 + $0x2b0] sm:%s1773] %v2126
                  %v2128 = vld [vmem:[%s1780 + $0x534] sm:%s1773]
                  %2129 = vst [vmem:[%s1781 + $0x2b4] sm:%s1773] %v2128
                  %v2130 = vld [vmem:[%s1780 + $0x538] sm:%s1773]
                  %2131 = vst [vmem:[%s1781 + $0x2b8] sm:%s1773] %v2130
                  %v2132 = vld [vmem:[%s1780 + $0x53c] sm:%s1773]
                  %2133 = vst [vmem:[%s1781 + $0x2bc] sm:%s1773] %v2132
                  %v2134 = vld [vmem:[%s1780 + $0x580] sm:%s1773]
                  %2135 = vst [vmem:[%s1781 + $0x2c0] sm:%s1773] %v2134
                  %v2136 = vld [vmem:[%s1780 + $0x584] sm:%s1773]
                  %2137 = vst [vmem:[%s1781 + $0x2c4] sm:%s1773] %v2136
                  %v2138 = vld [vmem:[%s1780 + $0x588] sm:%s1773]
                  %2139 = vst [vmem:[%s1781 + $0x2c8] sm:%s1773] %v2138
                  %v2140 = vld [vmem:[%s1780 + $0x58c] sm:%s1773]
                  %2141 = vst [vmem:[%s1781 + $0x2cc] sm:%s1773] %v2140
                  %v2142 = vld [vmem:[%s1780 + $0x590] sm:%s1773]
                  %2143 = vst [vmem:[%s1781 + $0x2d0] sm:%s1773] %v2142
                  %v2144 = vld [vmem:[%s1780 + $0x594] sm:%s1773]
                  %2145 = vst [vmem:[%s1781 + $0x2d4] sm:%s1773] %v2144
                  %v2146 = vld [vmem:[%s1780 + $0x598] sm:%s1773]
                  %2147 = vst [vmem:[%s1781 + $0x2d8] sm:%s1773] %v2146
                  %v2148 = vld [vmem:[%s1780 + $0x59c] sm:%s1773]
                  %2149 = vst [vmem:[%s1781 + $0x2dc] sm:%s1773] %v2148
                  %v2150 = vld [vmem:[%s1780 + $0x5a0] sm:%s1773]
                  %2151 = vst [vmem:[%s1781 + $0x2e0] sm:%s1773] %v2150
                  %v2152 = vld [vmem:[%s1780 + $0x5a4] sm:%s1773]
                  %2153 = vst [vmem:[%s1781 + $0x2e4] sm:%s1773] %v2152
                  %v2154 = vld [vmem:[%s1780 + $0x5a8] sm:%s1773]
                  %2155 = vst [vmem:[%s1781 + $0x2e8] sm:%s1773] %v2154
                  %v2156 = vld [vmem:[%s1780 + $0x5ac] sm:%s1773]
                  %2157 = vst [vmem:[%s1781 + $0x2ec] sm:%s1773] %v2156
                  %v2158 = vld [vmem:[%s1780 + $0x5b0] sm:%s1773]
                  %2159 = vst [vmem:[%s1781 + $0x2f0] sm:%s1773] %v2158
                  %v2160 = vld [vmem:[%s1780 + $0x5b4] sm:%s1773]
                  %2161 = vst [vmem:[%s1781 + $0x2f4] sm:%s1773] %v2160
                  %v2162 = vld [vmem:[%s1780 + $0x5b8] sm:%s1773]
                  %2163 = vst [vmem:[%s1781 + $0x2f8] sm:%s1773] %v2162
                  %v2164 = vld [vmem:[%s1780 + $0x5bc] sm:%s1773]
                  %2165 = vst [vmem:[%s1781 + $0x2fc] sm:%s1773] %v2164
                  %v2166 = vld [vmem:[%s1780 + $0x600] sm:%s1773]
                  %2167 = vst [vmem:[%s1781 + $0x300] sm:%s1773] %v2166
                  %v2168 = vld [vmem:[%s1780 + $0x604] sm:%s1773]
                  %2169 = vst [vmem:[%s1781 + $0x304] sm:%s1773] %v2168
                  %v2170 = vld [vmem:[%s1780 + $0x608] sm:%s1773]
                  %2171 = vst [vmem:[%s1781 + $0x308] sm:%s1773] %v2170
                  %v2172 = vld [vmem:[%s1780 + $0x60c] sm:%s1773]
                  %2173 = vst [vmem:[%s1781 + $0x30c] sm:%s1773] %v2172
                  %v2174 = vld [vmem:[%s1780 + $0x610] sm:%s1773]
                  %2175 = vst [vmem:[%s1781 + $0x310] sm:%s1773] %v2174
                  %v2176 = vld [vmem:[%s1780 + $0x614] sm:%s1773]
                  %2177 = vst [vmem:[%s1781 + $0x314] sm:%s1773] %v2176
                  %v2178 = vld [vmem:[%s1780 + $0x618] sm:%s1773]
                  %2179 = vst [vmem:[%s1781 + $0x318] sm:%s1773] %v2178
                  %v2180 = vld [vmem:[%s1780 + $0x61c] sm:%s1773]
                  %2181 = vst [vmem:[%s1781 + $0x31c] sm:%s1773] %v2180
                  %v2182 = vld [vmem:[%s1780 + $0x620] sm:%s1773]
                  %2183 = vst [vmem:[%s1781 + $0x320] sm:%s1773] %v2182
                  %v2184 = vld [vmem:[%s1780 + $0x624] sm:%s1773]
                  %2185 = vst [vmem:[%s1781 + $0x324] sm:%s1773] %v2184
                  %v2186 = vld [vmem:[%s1780 + $0x628] sm:%s1773]
                  %2187 = vst [vmem:[%s1781 + $0x328] sm:%s1773] %v2186
                  %v2188 = vld [vmem:[%s1780 + $0x62c] sm:%s1773]
                  %2189 = vst [vmem:[%s1781 + $0x32c] sm:%s1773] %v2188
                  %v2190 = vld [vmem:[%s1780 + $0x630] sm:%s1773]
                  %2191 = vst [vmem:[%s1781 + $0x330] sm:%s1773] %v2190
                  %v2192 = vld [vmem:[%s1780 + $0x634] sm:%s1773]
                  %2193 = vst [vmem:[%s1781 + $0x334] sm:%s1773] %v2192
                  %v2194 = vld [vmem:[%s1780 + $0x638] sm:%s1773]
                  %2195 = vst [vmem:[%s1781 + $0x338] sm:%s1773] %v2194
                  %v2196 = vld [vmem:[%s1780 + $0x63c] sm:%s1773]
                  %2197 = vst [vmem:[%s1781 + $0x33c] sm:%s1773] %v2196
                  %v2198 = vld [vmem:[%s1780 + $0x680] sm:%s1773]
                  %2199 = vst [vmem:[%s1781 + $0x340] sm:%s1773] %v2198
                  %v2200 = vld [vmem:[%s1780 + $0x684] sm:%s1773]
                  %2201 = vst [vmem:[%s1781 + $0x344] sm:%s1773] %v2200
                  %v2202 = vld [vmem:[%s1780 + $0x688] sm:%s1773]
                  %2203 = vst [vmem:[%s1781 + $0x348] sm:%s1773] %v2202
                  %v2204 = vld [vmem:[%s1780 + $0x68c] sm:%s1773]
                  %2205 = vst [vmem:[%s1781 + $0x34c] sm:%s1773] %v2204
                  %v2206 = vld [vmem:[%s1780 + $0x690] sm:%s1773]
                  %2207 = vst [vmem:[%s1781 + $0x350] sm:%s1773] %v2206
                  %v2208 = vld [vmem:[%s1780 + $0x694] sm:%s1773]
                  %2209 = vst [vmem:[%s1781 + $0x354] sm:%s1773] %v2208
                  %v2210 = vld [vmem:[%s1780 + $0x698] sm:%s1773]
                  %2211 = vst [vmem:[%s1781 + $0x358] sm:%s1773] %v2210
                  %v2212 = vld [vmem:[%s1780 + $0x69c] sm:%s1773]
                  %2213 = vst [vmem:[%s1781 + $0x35c] sm:%s1773] %v2212
                  %v2214 = vld [vmem:[%s1780 + $0x6a0] sm:%s1773]
                  %2215 = vst [vmem:[%s1781 + $0x360] sm:%s1773] %v2214
                  %v2216 = vld [vmem:[%s1780 + $0x6a4] sm:%s1773]
                  %2217 = vst [vmem:[%s1781 + $0x364] sm:%s1773] %v2216
                  %v2218 = vld [vmem:[%s1780 + $0x6a8] sm:%s1773]
                  %2219 = vst [vmem:[%s1781 + $0x368] sm:%s1773] %v2218
                  %v2220 = vld [vmem:[%s1780 + $0x6ac] sm:%s1773]
                  %2221 = vst [vmem:[%s1781 + $0x36c] sm:%s1773] %v2220
                  %v2222 = vld [vmem:[%s1780 + $0x6b0] sm:%s1773]
                  %2223 = vst [vmem:[%s1781 + $0x370] sm:%s1773] %v2222
                  %v2224 = vld [vmem:[%s1780 + $0x6b4] sm:%s1773]
                  %2225 = vst [vmem:[%s1781 + $0x374] sm:%s1773] %v2224
                  %v2226 = vld [vmem:[%s1780 + $0x6b8] sm:%s1773]
                  %2227 = vst [vmem:[%s1781 + $0x378] sm:%s1773] %v2226
                  %v2228 = vld [vmem:[%s1780 + $0x6bc] sm:%s1773]
                  %2229 = vst [vmem:[%s1781 + $0x37c] sm:%s1773] %v2228
                  %v2230 = vld [vmem:[%s1780 + $0x700] sm:%s1773]
                  %2231 = vst [vmem:[%s1781 + $0x380] sm:%s1773] %v2230
                  %v2232 = vld [vmem:[%s1780 + $0x704] sm:%s1773]
                  %2233 = vst [vmem:[%s1781 + $0x384] sm:%s1773] %v2232
                  %v2234 = vld [vmem:[%s1780 + $0x708] sm:%s1773]
                  %2235 = vst [vmem:[%s1781 + $0x388] sm:%s1773] %v2234
                  %v2236 = vld [vmem:[%s1780 + $0x70c] sm:%s1773]
                  %2237 = vst [vmem:[%s1781 + $0x38c] sm:%s1773] %v2236
                  %v2238 = vld [vmem:[%s1780 + $0x710] sm:%s1773]
                  %2239 = vst [vmem:[%s1781 + $0x390] sm:%s1773] %v2238
                  %v2240 = vld [vmem:[%s1780 + $0x714] sm:%s1773]
                  %2241 = vst [vmem:[%s1781 + $0x394] sm:%s1773] %v2240
                  %v2242 = vld [vmem:[%s1780 + $0x718] sm:%s1773]
                  %2243 = vst [vmem:[%s1781 + $0x398] sm:%s1773] %v2242
                  %v2244 = vld [vmem:[%s1780 + $0x71c] sm:%s1773]
                  %2245 = vst [vmem:[%s1781 + $0x39c] sm:%s1773] %v2244
                  %v2246 = vld [vmem:[%s1780 + $0x720] sm:%s1773]
                  %2247 = vst [vmem:[%s1781 + $0x3a0] sm:%s1773] %v2246
                  %v2248 = vld [vmem:[%s1780 + $0x724] sm:%s1773]
                  %2249 = vst [vmem:[%s1781 + $0x3a4] sm:%s1773] %v2248
                  %v2250 = vld [vmem:[%s1780 + $0x728] sm:%s1773]
                  %2251 = vst [vmem:[%s1781 + $0x3a8] sm:%s1773] %v2250
                  %v2252 = vld [vmem:[%s1780 + $0x72c] sm:%s1773]
                  %2253 = vst [vmem:[%s1781 + $0x3ac] sm:%s1773] %v2252
                  %v2254 = vld [vmem:[%s1780 + $0x730] sm:%s1773]
                  %2255 = vst [vmem:[%s1781 + $0x3b0] sm:%s1773] %v2254
                  %v2256 = vld [vmem:[%s1780 + $0x734] sm:%s1773]
                  %2257 = vst [vmem:[%s1781 + $0x3b4] sm:%s1773] %v2256
                  %v2258 = vld [vmem:[%s1780 + $0x738] sm:%s1773]
                  %2259 = vst [vmem:[%s1781 + $0x3b8] sm:%s1773] %v2258
                  %v2260 = vld [vmem:[%s1780 + $0x73c] sm:%s1773]
                  %2261 = vst [vmem:[%s1781 + $0x3bc] sm:%s1773] %v2260
                  %v2262 = vld [vmem:[%s1780 + $0x780] sm:%s1773]
                  %2263 = vst [vmem:[%s1781 + $0x3c0] sm:%s1773] %v2262
                  %v2264 = vld [vmem:[%s1780 + $0x784] sm:%s1773]
                  %2265 = vst [vmem:[%s1781 + $0x3c4] sm:%s1773] %v2264
                  %v2266 = vld [vmem:[%s1780 + $0x788] sm:%s1773]
                  %2267 = vst [vmem:[%s1781 + $0x3c8] sm:%s1773] %v2266
                  %v2268 = vld [vmem:[%s1780 + $0x78c] sm:%s1773]
                  %2269 = vst [vmem:[%s1781 + $0x3cc] sm:%s1773] %v2268
                  %v2270 = vld [vmem:[%s1780 + $0x790] sm:%s1773]
                  %2271 = vst [vmem:[%s1781 + $0x3d0] sm:%s1773] %v2270
                  %v2272 = vld [vmem:[%s1780 + $0x794] sm:%s1773]
                  %2273 = vst [vmem:[%s1781 + $0x3d4] sm:%s1773] %v2272
                  %v2274 = vld [vmem:[%s1780 + $0x798] sm:%s1773]
                  %2275 = vst [vmem:[%s1781 + $0x3d8] sm:%s1773] %v2274
                  %v2276 = vld [vmem:[%s1780 + $0x79c] sm:%s1773]
                  %2277 = vst [vmem:[%s1781 + $0x3dc] sm:%s1773] %v2276
                  %v2278 = vld [vmem:[%s1780 + $0x7a0] sm:%s1773]
                  %2279 = vst [vmem:[%s1781 + $0x3e0] sm:%s1773] %v2278
                  %v2280 = vld [vmem:[%s1780 + $0x7a4] sm:%s1773]
                  %2281 = vst [vmem:[%s1781 + $0x3e4] sm:%s1773] %v2280
                  %v2282 = vld [vmem:[%s1780 + $0x7a8] sm:%s1773]
                  %2283 = vst [vmem:[%s1781 + $0x3e8] sm:%s1773] %v2282
                  %v2284 = vld [vmem:[%s1780 + $0x7ac] sm:%s1773]
                  %2285 = vst [vmem:[%s1781 + $0x3ec] sm:%s1773] %v2284
                  %v2286 = vld [vmem:[%s1780 + $0x7b0] sm:%s1773]
                  %2287 = vst [vmem:[%s1781 + $0x3f0] sm:%s1773] %v2286
                  %v2288 = vld [vmem:[%s1780 + $0x7b4] sm:%s1773]
                  %2289 = vst [vmem:[%s1781 + $0x3f4] sm:%s1773] %v2288
                  %v2290 = vld [vmem:[%s1780 + $0x7b8] sm:%s1773]
                  %2291 = vst [vmem:[%s1781 + $0x3f8] sm:%s1773] %v2290
                  %v2292 = vld [vmem:[%s1780 + $0x7bc] sm:%s1773]
                  %2293 = vst [vmem:[%s1781 + $0x3fc] sm:%s1773] %v2292
                $region74: #{matchsum_forward.1} parent=61 // loop_footer
                  %s1779 = sadd.s32 1, %s1775
                $region75: #{matchsum_forward.1} parent=61 // loop_footer_branch
                  %1774 = sbr.rel target = $region71
                $region76: #{matchsum_forward.1} parent=61 // loop_exit
                  _
              $region62: #{matchsum_forward.1} parent=35 // pred_fallthru
                _
            $region36: #{matchsum_forward.1} parent=31 // pred_fallthru
              _
            // Predicated region
            $region37: #{matchsum_forward.1} parent=31 // pred_check
              _
            $region38: #{matchsum_forward.1} parent=31 // pred_check_branch
              %189 = sbr.rel (0) target = $region40
            $region39: #{matchsum_forward.1} parent=31 // pred_region
              %s191 = ssub.s32 16, 1
              loop: start=0, step=1, limit=1
              $region41: #{matchsum_forward.1} parent=39 // loop_pre_header
                _
              $region42: #{matchsum_forward.1} parent=39 // loop_header
                %s193 = sphi 0, %s197
                %p194 = scmp.ge.s32.totalorder %s193, 1
                %s198 = sphi %s183, %s183
                %s199 = sphi %s177, %s177
              $region43: #{matchsum_forward.1} parent=39 // loop_header_branch
                %196 = sbr.rel (%p194) target = $region47
              $region44: #{matchsum_forward.1} parent=39 // loop_body
                %v200 = vld [vmem:[%s198] sm:%s191]
                %201 = vst [vmem:[%s199] sm:%s191] %v200
                %v202 = vld [vmem:[%s198 + $0x4] sm:%s191]
                %203 = vst [vmem:[%s199 + $0x4] sm:%s191] %v202
                %v204 = vld [vmem:[%s198 + $0x8] sm:%s191]
                %205 = vst [vmem:[%s199 + $0x8] sm:%s191] %v204
                %v206 = vld [vmem:[%s198 + $0xc] sm:%s191]
                %207 = vst [vmem:[%s199 + $0xc] sm:%s191] %v206
                %v208 = vld [vmem:[%s198 + $0x10] sm:%s191]
                %209 = vst [vmem:[%s199 + $0x10] sm:%s191] %v208
                %v210 = vld [vmem:[%s198 + $0x14] sm:%s191]
                %211 = vst [vmem:[%s199 + $0x14] sm:%s191] %v210
                %v212 = vld [vmem:[%s198 + $0x18] sm:%s191]
                %213 = vst [vmem:[%s199 + $0x18] sm:%s191] %v212
                %v214 = vld [vmem:[%s198 + $0x1c] sm:%s191]
                %215 = vst [vmem:[%s199 + $0x1c] sm:%s191] %v214
                %v216 = vld [vmem:[%s198 + $0x20] sm:%s191]
                %217 = vst [vmem:[%s199 + $0x20] sm:%s191] %v216
                %v218 = vld [vmem:[%s198 + $0x24] sm:%s191]
                %219 = vst [vmem:[%s199 + $0x24] sm:%s191] %v218
                %v220 = vld [vmem:[%s198 + $0x28] sm:%s191]
                %221 = vst [vmem:[%s199 + $0x28] sm:%s191] %v220
                %v222 = vld [vmem:[%s198 + $0x2c] sm:%s191]
                %223 = vst [vmem:[%s199 + $0x2c] sm:%s191] %v222
                %v224 = vld [vmem:[%s198 + $0x30] sm:%s191]
                %225 = vst [vmem:[%s199 + $0x30] sm:%s191] %v224
                %v226 = vld [vmem:[%s198 + $0x34] sm:%s191]
                %227 = vst [vmem:[%s199 + $0x34] sm:%s191] %v226
                %v228 = vld [vmem:[%s198 + $0x38] sm:%s191]
                %229 = vst [vmem:[%s199 + $0x38] sm:%s191] %v228
                %v230 = vld [vmem:[%s198 + $0x3c] sm:%s191]
                %231 = vst [vmem:[%s199 + $0x3c] sm:%s191] %v230
                %v232 = vld [vmem:[%s198 + $0x80] sm:%s191]
                %233 = vst [vmem:[%s199 + $0x40] sm:%s191] %v232
                %v234 = vld [vmem:[%s198 + $0x84] sm:%s191]
                %235 = vst [vmem:[%s199 + $0x44] sm:%s191] %v234
                %v236 = vld [vmem:[%s198 + $0x88] sm:%s191]
                %237 = vst [vmem:[%s199 + $0x48] sm:%s191] %v236
                %v238 = vld [vmem:[%s198 + $0x8c] sm:%s191]
                %239 = vst [vmem:[%s199 + $0x4c] sm:%s191] %v238
                %v240 = vld [vmem:[%s198 + $0x90] sm:%s191]
                %241 = vst [vmem:[%s199 + $0x50] sm:%s191] %v240
                %v242 = vld [vmem:[%s198 + $0x94] sm:%s191]
                %243 = vst [vmem:[%s199 + $0x54] sm:%s191] %v242
                %v244 = vld [vmem:[%s198 + $0x98] sm:%s191]
                %245 = vst [vmem:[%s199 + $0x58] sm:%s191] %v244
                %v246 = vld [vmem:[%s198 + $0x9c] sm:%s191]
                %247 = vst [vmem:[%s199 + $0x5c] sm:%s191] %v246
                %v248 = vld [vmem:[%s198 + $0xa0] sm:%s191]
                %249 = vst [vmem:[%s199 + $0x60] sm:%s191] %v248
                %v250 = vld [vmem:[%s198 + $0xa4] sm:%s191]
                %251 = vst [vmem:[%s199 + $0x64] sm:%s191] %v250
                %v252 = vld [vmem:[%s198 + $0xa8] sm:%s191]
                %253 = vst [vmem:[%s199 + $0x68] sm:%s191] %v252
                %v254 = vld [vmem:[%s198 + $0xac] sm:%s191]
                %255 = vst [vmem:[%s199 + $0x6c] sm:%s191] %v254
                %v256 = vld [vmem:[%s198 + $0xb0] sm:%s191]
                %257 = vst [vmem:[%s199 + $0x70] sm:%s191] %v256
                %v258 = vld [vmem:[%s198 + $0xb4] sm:%s191]
                %259 = vst [vmem:[%s199 + $0x74] sm:%s191] %v258
                %v260 = vld [vmem:[%s198 + $0xb8] sm:%s191]
                %261 = vst [vmem:[%s199 + $0x78] sm:%s191] %v260
                %v262 = vld [vmem:[%s198 + $0xbc] sm:%s191]
                %263 = vst [vmem:[%s199 + $0x7c] sm:%s191] %v262
                %v264 = vld [vmem:[%s198 + $0x100] sm:%s191]
                %265 = vst [vmem:[%s199 + $0x80] sm:%s191] %v264
                %v266 = vld [vmem:[%s198 + $0x104] sm:%s191]
                %267 = vst [vmem:[%s199 + $0x84] sm:%s191] %v266
                %v268 = vld [vmem:[%s198 + $0x108] sm:%s191]
                %269 = vst [vmem:[%s199 + $0x88] sm:%s191] %v268
                %v270 = vld [vmem:[%s198 + $0x10c] sm:%s191]
                %271 = vst [vmem:[%s199 + $0x8c] sm:%s191] %v270
                %v272 = vld [vmem:[%s198 + $0x110] sm:%s191]
                %273 = vst [vmem:[%s199 + $0x90] sm:%s191] %v272
                %v274 = vld [vmem:[%s198 + $0x114] sm:%s191]
                %275 = vst [vmem:[%s199 + $0x94] sm:%s191] %v274
                %v276 = vld [vmem:[%s198 + $0x118] sm:%s191]
                %277 = vst [vmem:[%s199 + $0x98] sm:%s191] %v276
                %v278 = vld [vmem:[%s198 + $0x11c] sm:%s191]
                %279 = vst [vmem:[%s199 + $0x9c] sm:%s191] %v278
                %v280 = vld [vmem:[%s198 + $0x120] sm:%s191]
                %281 = vst [vmem:[%s199 + $0xa0] sm:%s191] %v280
                %v282 = vld [vmem:[%s198 + $0x124] sm:%s191]
                %283 = vst [vmem:[%s199 + $0xa4] sm:%s191] %v282
                %v284 = vld [vmem:[%s198 + $0x128] sm:%s191]
                %285 = vst [vmem:[%s199 + $0xa8] sm:%s191] %v284
                %v286 = vld [vmem:[%s198 + $0x12c] sm:%s191]
                %287 = vst [vmem:[%s199 + $0xac] sm:%s191] %v286
                %v288 = vld [vmem:[%s198 + $0x130] sm:%s191]
                %289 = vst [vmem:[%s199 + $0xb0] sm:%s191] %v288
                %v290 = vld [vmem:[%s198 + $0x134] sm:%s191]
                %291 = vst [vmem:[%s199 + $0xb4] sm:%s191] %v290
                %v292 = vld [vmem:[%s198 + $0x138] sm:%s191]
                %293 = vst [vmem:[%s199 + $0xb8] sm:%s191] %v292
                %v294 = vld [vmem:[%s198 + $0x13c] sm:%s191]
                %295 = vst [vmem:[%s199 + $0xbc] sm:%s191] %v294
                %v296 = vld [vmem:[%s198 + $0x180] sm:%s191]
                %297 = vst [vmem:[%s199 + $0xc0] sm:%s191] %v296
                %v298 = vld [vmem:[%s198 + $0x184] sm:%s191]
                %299 = vst [vmem:[%s199 + $0xc4] sm:%s191] %v298
                %v300 = vld [vmem:[%s198 + $0x188] sm:%s191]
                %301 = vst [vmem:[%s199 + $0xc8] sm:%s191] %v300
                %v302 = vld [vmem:[%s198 + $0x18c] sm:%s191]
                %303 = vst [vmem:[%s199 + $0xcc] sm:%s191] %v302
                %v304 = vld [vmem:[%s198 + $0x190] sm:%s191]
                %305 = vst [vmem:[%s199 + $0xd0] sm:%s191] %v304
                %v306 = vld [vmem:[%s198 + $0x194] sm:%s191]
                %307 = vst [vmem:[%s199 + $0xd4] sm:%s191] %v306
                %v308 = vld [vmem:[%s198 + $0x198] sm:%s191]
                %309 = vst [vmem:[%s199 + $0xd8] sm:%s191] %v308
                %v310 = vld [vmem:[%s198 + $0x19c] sm:%s191]
                %311 = vst [vmem:[%s199 + $0xdc] sm:%s191] %v310
                %v312 = vld [vmem:[%s198 + $0x1a0] sm:%s191]
                %313 = vst [vmem:[%s199 + $0xe0] sm:%s191] %v312
                %v314 = vld [vmem:[%s198 + $0x1a4] sm:%s191]
                %315 = vst [vmem:[%s199 + $0xe4] sm:%s191] %v314
                %v316 = vld [vmem:[%s198 + $0x1a8] sm:%s191]
                %317 = vst [vmem:[%s199 + $0xe8] sm:%s191] %v316
                %v318 = vld [vmem:[%s198 + $0x1ac] sm:%s191]
                %319 = vst [vmem:[%s199 + $0xec] sm:%s191] %v318
                %v320 = vld [vmem:[%s198 + $0x1b0] sm:%s191]
                %321 = vst [vmem:[%s199 + $0xf0] sm:%s191] %v320
                %v322 = vld [vmem:[%s198 + $0x1b4] sm:%s191]
                %323 = vst [vmem:[%s199 + $0xf4] sm:%s191] %v322
                %v324 = vld [vmem:[%s198 + $0x1b8] sm:%s191]
                %325 = vst [vmem:[%s199 + $0xf8] sm:%s191] %v324
                %v326 = vld [vmem:[%s198 + $0x1bc] sm:%s191]
                %327 = vst [vmem:[%s199 + $0xfc] sm:%s191] %v326
                %v328 = vld [vmem:[%s198 + $0x200] sm:%s191]
                %329 = vst [vmem:[%s199 + $0x100] sm:%s191] %v328
                %v330 = vld [vmem:[%s198 + $0x204] sm:%s191]
                %331 = vst [vmem:[%s199 + $0x104] sm:%s191] %v330
                %v332 = vld [vmem:[%s198 + $0x208] sm:%s191]
                %333 = vst [vmem:[%s199 + $0x108] sm:%s191] %v332
                %v334 = vld [vmem:[%s198 + $0x20c] sm:%s191]
                %335 = vst [vmem:[%s199 + $0x10c] sm:%s191] %v334
                %v336 = vld [vmem:[%s198 + $0x210] sm:%s191]
                %337 = vst [vmem:[%s199 + $0x110] sm:%s191] %v336
                %v338 = vld [vmem:[%s198 + $0x214] sm:%s191]
                %339 = vst [vmem:[%s199 + $0x114] sm:%s191] %v338
                %v340 = vld [vmem:[%s198 + $0x218] sm:%s191]
                %341 = vst [vmem:[%s199 + $0x118] sm:%s191] %v340
                %v342 = vld [vmem:[%s198 + $0x21c] sm:%s191]
                %343 = vst [vmem:[%s199 + $0x11c] sm:%s191] %v342
                %v344 = vld [vmem:[%s198 + $0x220] sm:%s191]
                %345 = vst [vmem:[%s199 + $0x120] sm:%s191] %v344
                %v346 = vld [vmem:[%s198 + $0x224] sm:%s191]
                %347 = vst [vmem:[%s199 + $0x124] sm:%s191] %v346
                %v348 = vld [vmem:[%s198 + $0x228] sm:%s191]
                %349 = vst [vmem:[%s199 + $0x128] sm:%s191] %v348
                %v350 = vld [vmem:[%s198 + $0x22c] sm:%s191]
                %351 = vst [vmem:[%s199 + $0x12c] sm:%s191] %v350
                %v352 = vld [vmem:[%s198 + $0x230] sm:%s191]
                %353 = vst [vmem:[%s199 + $0x130] sm:%s191] %v352
                %v354 = vld [vmem:[%s198 + $0x234] sm:%s191]
                %355 = vst [vmem:[%s199 + $0x134] sm:%s191] %v354
                %v356 = vld [vmem:[%s198 + $0x238] sm:%s191]
                %357 = vst [vmem:[%s199 + $0x138] sm:%s191] %v356
                %v358 = vld [vmem:[%s198 + $0x23c] sm:%s191]
                %359 = vst [vmem:[%s199 + $0x13c] sm:%s191] %v358
                %v360 = vld [vmem:[%s198 + $0x280] sm:%s191]
                %361 = vst [vmem:[%s199 + $0x140] sm:%s191] %v360
                %v362 = vld [vmem:[%s198 + $0x284] sm:%s191]
                %363 = vst [vmem:[%s199 + $0x144] sm:%s191] %v362
                %v364 = vld [vmem:[%s198 + $0x288] sm:%s191]
                %365 = vst [vmem:[%s199 + $0x148] sm:%s191] %v364
                %v366 = vld [vmem:[%s198 + $0x28c] sm:%s191]
                %367 = vst [vmem:[%s199 + $0x14c] sm:%s191] %v366
                %v368 = vld [vmem:[%s198 + $0x290] sm:%s191]
                %369 = vst [vmem:[%s199 + $0x150] sm:%s191] %v368
                %v370 = vld [vmem:[%s198 + $0x294] sm:%s191]
                %371 = vst [vmem:[%s199 + $0x154] sm:%s191] %v370
                %v372 = vld [vmem:[%s198 + $0x298] sm:%s191]
                %373 = vst [vmem:[%s199 + $0x158] sm:%s191] %v372
                %v374 = vld [vmem:[%s198 + $0x29c] sm:%s191]
                %375 = vst [vmem:[%s199 + $0x15c] sm:%s191] %v374
                %v376 = vld [vmem:[%s198 + $0x2a0] sm:%s191]
                %377 = vst [vmem:[%s199 + $0x160] sm:%s191] %v376
                %v378 = vld [vmem:[%s198 + $0x2a4] sm:%s191]
                %379 = vst [vmem:[%s199 + $0x164] sm:%s191] %v378
                %v380 = vld [vmem:[%s198 + $0x2a8] sm:%s191]
                %381 = vst [vmem:[%s199 + $0x168] sm:%s191] %v380
                %v382 = vld [vmem:[%s198 + $0x2ac] sm:%s191]
                %383 = vst [vmem:[%s199 + $0x16c] sm:%s191] %v382
                %v384 = vld [vmem:[%s198 + $0x2b0] sm:%s191]
                %385 = vst [vmem:[%s199 + $0x170] sm:%s191] %v384
                %v386 = vld [vmem:[%s198 + $0x2b4] sm:%s191]
                %387 = vst [vmem:[%s199 + $0x174] sm:%s191] %v386
                %v388 = vld [vmem:[%s198 + $0x2b8] sm:%s191]
                %389 = vst [vmem:[%s199 + $0x178] sm:%s191] %v388
                %v390 = vld [vmem:[%s198 + $0x2bc] sm:%s191]
                %391 = vst [vmem:[%s199 + $0x17c] sm:%s191] %v390
                %v392 = vld [vmem:[%s198 + $0x300] sm:%s191]
                %393 = vst [vmem:[%s199 + $0x180] sm:%s191] %v392
                %v394 = vld [vmem:[%s198 + $0x304] sm:%s191]
                %395 = vst [vmem:[%s199 + $0x184] sm:%s191] %v394
                %v396 = vld [vmem:[%s198 + $0x308] sm:%s191]
                %397 = vst [vmem:[%s199 + $0x188] sm:%s191] %v396
                %v398 = vld [vmem:[%s198 + $0x30c] sm:%s191]
                %399 = vst [vmem:[%s199 + $0x18c] sm:%s191] %v398
                %v400 = vld [vmem:[%s198 + $0x310] sm:%s191]
                %401 = vst [vmem:[%s199 + $0x190] sm:%s191] %v400
                %v402 = vld [vmem:[%s198 + $0x314] sm:%s191]
                %403 = vst [vmem:[%s199 + $0x194] sm:%s191] %v402
                %v404 = vld [vmem:[%s198 + $0x318] sm:%s191]
                %405 = vst [vmem:[%s199 + $0x198] sm:%s191] %v404
                %v406 = vld [vmem:[%s198 + $0x31c] sm:%s191]
                %407 = vst [vmem:[%s199 + $0x19c] sm:%s191] %v406
                %v408 = vld [vmem:[%s198 + $0x320] sm:%s191]
                %409 = vst [vmem:[%s199 + $0x1a0] sm:%s191] %v408
                %v410 = vld [vmem:[%s198 + $0x324] sm:%s191]
                %411 = vst [vmem:[%s199 + $0x1a4] sm:%s191] %v410
                %v412 = vld [vmem:[%s198 + $0x328] sm:%s191]
                %413 = vst [vmem:[%s199 + $0x1a8] sm:%s191] %v412
                %v414 = vld [vmem:[%s198 + $0x32c] sm:%s191]
                %415 = vst [vmem:[%s199 + $0x1ac] sm:%s191] %v414
                %v416 = vld [vmem:[%s198 + $0x330] sm:%s191]
                %417 = vst [vmem:[%s199 + $0x1b0] sm:%s191] %v416
                %v418 = vld [vmem:[%s198 + $0x334] sm:%s191]
                %419 = vst [vmem:[%s199 + $0x1b4] sm:%s191] %v418
                %v420 = vld [vmem:[%s198 + $0x338] sm:%s191]
                %421 = vst [vmem:[%s199 + $0x1b8] sm:%s191] %v420
                %v422 = vld [vmem:[%s198 + $0x33c] sm:%s191]
                %423 = vst [vmem:[%s199 + $0x1bc] sm:%s191] %v422
                %v424 = vld [vmem:[%s198 + $0x380] sm:%s191]
                %425 = vst [vmem:[%s199 + $0x1c0] sm:%s191] %v424
                %v426 = vld [vmem:[%s198 + $0x384] sm:%s191]
                %427 = vst [vmem:[%s199 + $0x1c4] sm:%s191] %v426
                %v428 = vld [vmem:[%s198 + $0x388] sm:%s191]
                %429 = vst [vmem:[%s199 + $0x1c8] sm:%s191] %v428
                %v430 = vld [vmem:[%s198 + $0x38c] sm:%s191]
                %431 = vst [vmem:[%s199 + $0x1cc] sm:%s191] %v430
                %v432 = vld [vmem:[%s198 + $0x390] sm:%s191]
                %433 = vst [vmem:[%s199 + $0x1d0] sm:%s191] %v432
                %v434 = vld [vmem:[%s198 + $0x394] sm:%s191]
                %435 = vst [vmem:[%s199 + $0x1d4] sm:%s191] %v434
                %v436 = vld [vmem:[%s198 + $0x398] sm:%s191]
                %437 = vst [vmem:[%s199 + $0x1d8] sm:%s191] %v436
                %v438 = vld [vmem:[%s198 + $0x39c] sm:%s191]
                %439 = vst [vmem:[%s199 + $0x1dc] sm:%s191] %v438
                %v440 = vld [vmem:[%s198 + $0x3a0] sm:%s191]
                %441 = vst [vmem:[%s199 + $0x1e0] sm:%s191] %v440
                %v442 = vld [vmem:[%s198 + $0x3a4] sm:%s191]
                %443 = vst [vmem:[%s199 + $0x1e4] sm:%s191] %v442
                %v444 = vld [vmem:[%s198 + $0x3a8] sm:%s191]
                %445 = vst [vmem:[%s199 + $0x1e8] sm:%s191] %v444
                %v446 = vld [vmem:[%s198 + $0x3ac] sm:%s191]
                %447 = vst [vmem:[%s199 + $0x1ec] sm:%s191] %v446
                %v448 = vld [vmem:[%s198 + $0x3b0] sm:%s191]
                %449 = vst [vmem:[%s199 + $0x1f0] sm:%s191] %v448
                %v450 = vld [vmem:[%s198 + $0x3b4] sm:%s191]
                %451 = vst [vmem:[%s199 + $0x1f4] sm:%s191] %v450
                %v452 = vld [vmem:[%s198 + $0x3b8] sm:%s191]
                %453 = vst [vmem:[%s199 + $0x1f8] sm:%s191] %v452
                %v454 = vld [vmem:[%s198 + $0x3bc] sm:%s191]
                %455 = vst [vmem:[%s199 + $0x1fc] sm:%s191] %v454
                %v456 = vld [vmem:[%s198 + $0x400] sm:%s191]
                %457 = vst [vmem:[%s199 + $0x200] sm:%s191] %v456
                %v458 = vld [vmem:[%s198 + $0x404] sm:%s191]
                %459 = vst [vmem:[%s199 + $0x204] sm:%s191] %v458
                %v460 = vld [vmem:[%s198 + $0x408] sm:%s191]
                %461 = vst [vmem:[%s199 + $0x208] sm:%s191] %v460
                %v462 = vld [vmem:[%s198 + $0x40c] sm:%s191]
                %463 = vst [vmem:[%s199 + $0x20c] sm:%s191] %v462
                %v464 = vld [vmem:[%s198 + $0x410] sm:%s191]
                %465 = vst [vmem:[%s199 + $0x210] sm:%s191] %v464
                %v466 = vld [vmem:[%s198 + $0x414] sm:%s191]
                %467 = vst [vmem:[%s199 + $0x214] sm:%s191] %v466
                %v468 = vld [vmem:[%s198 + $0x418] sm:%s191]
                %469 = vst [vmem:[%s199 + $0x218] sm:%s191] %v468
                %v470 = vld [vmem:[%s198 + $0x41c] sm:%s191]
                %471 = vst [vmem:[%s199 + $0x21c] sm:%s191] %v470
                %v472 = vld [vmem:[%s198 + $0x420] sm:%s191]
                %473 = vst [vmem:[%s199 + $0x220] sm:%s191] %v472
                %v474 = vld [vmem:[%s198 + $0x424] sm:%s191]
                %475 = vst [vmem:[%s199 + $0x224] sm:%s191] %v474
                %v476 = vld [vmem:[%s198 + $0x428] sm:%s191]
                %477 = vst [vmem:[%s199 + $0x228] sm:%s191] %v476
                %v478 = vld [vmem:[%s198 + $0x42c] sm:%s191]
                %479 = vst [vmem:[%s199 + $0x22c] sm:%s191] %v478
                %v480 = vld [vmem:[%s198 + $0x430] sm:%s191]
                %481 = vst [vmem:[%s199 + $0x230] sm:%s191] %v480
                %v482 = vld [vmem:[%s198 + $0x434] sm:%s191]
                %483 = vst [vmem:[%s199 + $0x234] sm:%s191] %v482
                %v484 = vld [vmem:[%s198 + $0x438] sm:%s191]
                %485 = vst [vmem:[%s199 + $0x238] sm:%s191] %v484
                %v486 = vld [vmem:[%s198 + $0x43c] sm:%s191]
                %487 = vst [vmem:[%s199 + $0x23c] sm:%s191] %v486
                %v488 = vld [vmem:[%s198 + $0x480] sm:%s191]
                %489 = vst [vmem:[%s199 + $0x240] sm:%s191] %v488
                %v490 = vld [vmem:[%s198 + $0x484] sm:%s191]
                %491 = vst [vmem:[%s199 + $0x244] sm:%s191] %v490
                %v492 = vld [vmem:[%s198 + $0x488] sm:%s191]
                %493 = vst [vmem:[%s199 + $0x248] sm:%s191] %v492
                %v494 = vld [vmem:[%s198 + $0x48c] sm:%s191]
                %495 = vst [vmem:[%s199 + $0x24c] sm:%s191] %v494
                %v496 = vld [vmem:[%s198 + $0x490] sm:%s191]
                %497 = vst [vmem:[%s199 + $0x250] sm:%s191] %v496
                %v498 = vld [vmem:[%s198 + $0x494] sm:%s191]
                %499 = vst [vmem:[%s199 + $0x254] sm:%s191] %v498
                %v500 = vld [vmem:[%s198 + $0x498] sm:%s191]
                %501 = vst [vmem:[%s199 + $0x258] sm:%s191] %v500
                %v502 = vld [vmem:[%s198 + $0x49c] sm:%s191]
                %503 = vst [vmem:[%s199 + $0x25c] sm:%s191] %v502
                %v504 = vld [vmem:[%s198 + $0x4a0] sm:%s191]
                %505 = vst [vmem:[%s199 + $0x260] sm:%s191] %v504
                %v506 = vld [vmem:[%s198 + $0x4a4] sm:%s191]
                %507 = vst [vmem:[%s199 + $0x264] sm:%s191] %v506
                %v508 = vld [vmem:[%s198 + $0x4a8] sm:%s191]
                %509 = vst [vmem:[%s199 + $0x268] sm:%s191] %v508
                %v510 = vld [vmem:[%s198 + $0x4ac] sm:%s191]
                %511 = vst [vmem:[%s199 + $0x26c] sm:%s191] %v510
                %v512 = vld [vmem:[%s198 + $0x4b0] sm:%s191]
                %513 = vst [vmem:[%s199 + $0x270] sm:%s191] %v512
                %v514 = vld [vmem:[%s198 + $0x4b4] sm:%s191]
                %515 = vst [vmem:[%s199 + $0x274] sm:%s191] %v514
                %v516 = vld [vmem:[%s198 + $0x4b8] sm:%s191]
                %517 = vst [vmem:[%s199 + $0x278] sm:%s191] %v516
                %v518 = vld [vmem:[%s198 + $0x4bc] sm:%s191]
                %519 = vst [vmem:[%s199 + $0x27c] sm:%s191] %v518
                %v520 = vld [vmem:[%s198 + $0x500] sm:%s191]
                %521 = vst [vmem:[%s199 + $0x280] sm:%s191] %v520
                %v522 = vld [vmem:[%s198 + $0x504] sm:%s191]
                %523 = vst [vmem:[%s199 + $0x284] sm:%s191] %v522
                %v524 = vld [vmem:[%s198 + $0x508] sm:%s191]
                %525 = vst [vmem:[%s199 + $0x288] sm:%s191] %v524
                %v526 = vld [vmem:[%s198 + $0x50c] sm:%s191]
                %527 = vst [vmem:[%s199 + $0x28c] sm:%s191] %v526
                %v528 = vld [vmem:[%s198 + $0x510] sm:%s191]
                %529 = vst [vmem:[%s199 + $0x290] sm:%s191] %v528
                %v530 = vld [vmem:[%s198 + $0x514] sm:%s191]
                %531 = vst [vmem:[%s199 + $0x294] sm:%s191] %v530
                %v532 = vld [vmem:[%s198 + $0x518] sm:%s191]
                %533 = vst [vmem:[%s199 + $0x298] sm:%s191] %v532
                %v534 = vld [vmem:[%s198 + $0x51c] sm:%s191]
                %535 = vst [vmem:[%s199 + $0x29c] sm:%s191] %v534
                %v536 = vld [vmem:[%s198 + $0x520] sm:%s191]
                %537 = vst [vmem:[%s199 + $0x2a0] sm:%s191] %v536
                %v538 = vld [vmem:[%s198 + $0x524] sm:%s191]
                %539 = vst [vmem:[%s199 + $0x2a4] sm:%s191] %v538
                %v540 = vld [vmem:[%s198 + $0x528] sm:%s191]
                %541 = vst [vmem:[%s199 + $0x2a8] sm:%s191] %v540
                %v542 = vld [vmem:[%s198 + $0x52c] sm:%s191]
                %543 = vst [vmem:[%s199 + $0x2ac] sm:%s191] %v542
                %v544 = vld [vmem:[%s198 + $0x530] sm:%s191]
                %545 = vst [vmem:[%s199 + $0x2b0] sm:%s191] %v544
                %v546 = vld [vmem:[%s198 + $0x534] sm:%s191]
                %547 = vst [vmem:[%s199 + $0x2b4] sm:%s191] %v546
                %v548 = vld [vmem:[%s198 + $0x538] sm:%s191]
                %549 = vst [vmem:[%s199 + $0x2b8] sm:%s191] %v548
                %v550 = vld [vmem:[%s198 + $0x53c] sm:%s191]
                %551 = vst [vmem:[%s199 + $0x2bc] sm:%s191] %v550
                %v552 = vld [vmem:[%s198 + $0x580] sm:%s191]
                %553 = vst [vmem:[%s199 + $0x2c0] sm:%s191] %v552
                %v554 = vld [vmem:[%s198 + $0x584] sm:%s191]
                %555 = vst [vmem:[%s199 + $0x2c4] sm:%s191] %v554
                %v556 = vld [vmem:[%s198 + $0x588] sm:%s191]
                %557 = vst [vmem:[%s199 + $0x2c8] sm:%s191] %v556
                %v558 = vld [vmem:[%s198 + $0x58c] sm:%s191]
                %559 = vst [vmem:[%s199 + $0x2cc] sm:%s191] %v558
                %v560 = vld [vmem:[%s198 + $0x590] sm:%s191]
                %561 = vst [vmem:[%s199 + $0x2d0] sm:%s191] %v560
                %v562 = vld [vmem:[%s198 + $0x594] sm:%s191]
                %563 = vst [vmem:[%s199 + $0x2d4] sm:%s191] %v562
                %v564 = vld [vmem:[%s198 + $0x598] sm:%s191]
                %565 = vst [vmem:[%s199 + $0x2d8] sm:%s191] %v564
                %v566 = vld [vmem:[%s198 + $0x59c] sm:%s191]
                %567 = vst [vmem:[%s199 + $0x2dc] sm:%s191] %v566
                %v568 = vld [vmem:[%s198 + $0x5a0] sm:%s191]
                %569 = vst [vmem:[%s199 + $0x2e0] sm:%s191] %v568
                %v570 = vld [vmem:[%s198 + $0x5a4] sm:%s191]
                %571 = vst [vmem:[%s199 + $0x2e4] sm:%s191] %v570
                %v572 = vld [vmem:[%s198 + $0x5a8] sm:%s191]
                %573 = vst [vmem:[%s199 + $0x2e8] sm:%s191] %v572
                %v574 = vld [vmem:[%s198 + $0x5ac] sm:%s191]
                %575 = vst [vmem:[%s199 + $0x2ec] sm:%s191] %v574
                %v576 = vld [vmem:[%s198 + $0x5b0] sm:%s191]
                %577 = vst [vmem:[%s199 + $0x2f0] sm:%s191] %v576
                %v578 = vld [vmem:[%s198 + $0x5b4] sm:%s191]
                %579 = vst [vmem:[%s199 + $0x2f4] sm:%s191] %v578
                %v580 = vld [vmem:[%s198 + $0x5b8] sm:%s191]
                %581 = vst [vmem:[%s199 + $0x2f8] sm:%s191] %v580
                %v582 = vld [vmem:[%s198 + $0x5bc] sm:%s191]
                %583 = vst [vmem:[%s199 + $0x2fc] sm:%s191] %v582
                %v584 = vld [vmem:[%s198 + $0x600] sm:%s191]
                %585 = vst [vmem:[%s199 + $0x300] sm:%s191] %v584
                %v586 = vld [vmem:[%s198 + $0x604] sm:%s191]
                %587 = vst [vmem:[%s199 + $0x304] sm:%s191] %v586
                %v588 = vld [vmem:[%s198 + $0x608] sm:%s191]
                %589 = vst [vmem:[%s199 + $0x308] sm:%s191] %v588
                %v590 = vld [vmem:[%s198 + $0x60c] sm:%s191]
                %591 = vst [vmem:[%s199 + $0x30c] sm:%s191] %v590
                %v592 = vld [vmem:[%s198 + $0x610] sm:%s191]
                %593 = vst [vmem:[%s199 + $0x310] sm:%s191] %v592
                %v594 = vld [vmem:[%s198 + $0x614] sm:%s191]
                %595 = vst [vmem:[%s199 + $0x314] sm:%s191] %v594
                %v596 = vld [vmem:[%s198 + $0x618] sm:%s191]
                %597 = vst [vmem:[%s199 + $0x318] sm:%s191] %v596
                %v598 = vld [vmem:[%s198 + $0x61c] sm:%s191]
                %599 = vst [vmem:[%s199 + $0x31c] sm:%s191] %v598
                %v600 = vld [vmem:[%s198 + $0x620] sm:%s191]
                %601 = vst [vmem:[%s199 + $0x320] sm:%s191] %v600
                %v602 = vld [vmem:[%s198 + $0x624] sm:%s191]
                %603 = vst [vmem:[%s199 + $0x324] sm:%s191] %v602
                %v604 = vld [vmem:[%s198 + $0x628] sm:%s191]
                %605 = vst [vmem:[%s199 + $0x328] sm:%s191] %v604
                %v606 = vld [vmem:[%s198 + $0x62c] sm:%s191]
                %607 = vst [vmem:[%s199 + $0x32c] sm:%s191] %v606
                %v608 = vld [vmem:[%s198 + $0x630] sm:%s191]
                %609 = vst [vmem:[%s199 + $0x330] sm:%s191] %v608
                %v610 = vld [vmem:[%s198 + $0x634] sm:%s191]
                %611 = vst [vmem:[%s199 + $0x334] sm:%s191] %v610
                %v612 = vld [vmem:[%s198 + $0x638] sm:%s191]
                %613 = vst [vmem:[%s199 + $0x338] sm:%s191] %v612
                %v614 = vld [vmem:[%s198 + $0x63c] sm:%s191]
                %615 = vst [vmem:[%s199 + $0x33c] sm:%s191] %v614
                %v616 = vld [vmem:[%s198 + $0x680] sm:%s191]
                %617 = vst [vmem:[%s199 + $0x340] sm:%s191] %v616
                %v618 = vld [vmem:[%s198 + $0x684] sm:%s191]
                %619 = vst [vmem:[%s199 + $0x344] sm:%s191] %v618
                %v620 = vld [vmem:[%s198 + $0x688] sm:%s191]
                %621 = vst [vmem:[%s199 + $0x348] sm:%s191] %v620
                %v622 = vld [vmem:[%s198 + $0x68c] sm:%s191]
                %623 = vst [vmem:[%s199 + $0x34c] sm:%s191] %v622
                %v624 = vld [vmem:[%s198 + $0x690] sm:%s191]
                %625 = vst [vmem:[%s199 + $0x350] sm:%s191] %v624
                %v626 = vld [vmem:[%s198 + $0x694] sm:%s191]
                %627 = vst [vmem:[%s199 + $0x354] sm:%s191] %v626
                %v628 = vld [vmem:[%s198 + $0x698] sm:%s191]
                %629 = vst [vmem:[%s199 + $0x358] sm:%s191] %v628
                %v630 = vld [vmem:[%s198 + $0x69c] sm:%s191]
                %631 = vst [vmem:[%s199 + $0x35c] sm:%s191] %v630
                %v632 = vld [vmem:[%s198 + $0x6a0] sm:%s191]
                %633 = vst [vmem:[%s199 + $0x360] sm:%s191] %v632
                %v634 = vld [vmem:[%s198 + $0x6a4] sm:%s191]
                %635 = vst [vmem:[%s199 + $0x364] sm:%s191] %v634
                %v636 = vld [vmem:[%s198 + $0x6a8] sm:%s191]
                %637 = vst [vmem:[%s199 + $0x368] sm:%s191] %v636
                %v638 = vld [vmem:[%s198 + $0x6ac] sm:%s191]
                %639 = vst [vmem:[%s199 + $0x36c] sm:%s191] %v638
                %v640 = vld [vmem:[%s198 + $0x6b0] sm:%s191]
                %641 = vst [vmem:[%s199 + $0x370] sm:%s191] %v640
                %v642 = vld [vmem:[%s198 + $0x6b4] sm:%s191]
                %643 = vst [vmem:[%s199 + $0x374] sm:%s191] %v642
                %v644 = vld [vmem:[%s198 + $0x6b8] sm:%s191]
                %645 = vst [vmem:[%s199 + $0x378] sm:%s191] %v644
                %v646 = vld [vmem:[%s198 + $0x6bc] sm:%s191]
                %647 = vst [vmem:[%s199 + $0x37c] sm:%s191] %v646
                %v648 = vld [vmem:[%s198 + $0x700] sm:%s191]
                %649 = vst [vmem:[%s199 + $0x380] sm:%s191] %v648
                %v650 = vld [vmem:[%s198 + $0x704] sm:%s191]
                %651 = vst [vmem:[%s199 + $0x384] sm:%s191] %v650
                %v652 = vld [vmem:[%s198 + $0x708] sm:%s191]
                %653 = vst [vmem:[%s199 + $0x388] sm:%s191] %v652
                %v654 = vld [vmem:[%s198 + $0x70c] sm:%s191]
                %655 = vst [vmem:[%s199 + $0x38c] sm:%s191] %v654
                %v656 = vld [vmem:[%s198 + $0x710] sm:%s191]
                %657 = vst [vmem:[%s199 + $0x390] sm:%s191] %v656
                %v658 = vld [vmem:[%s198 + $0x714] sm:%s191]
                %659 = vst [vmem:[%s199 + $0x394] sm:%s191] %v658
                %v660 = vld [vmem:[%s198 + $0x718] sm:%s191]
                %661 = vst [vmem:[%s199 + $0x398] sm:%s191] %v660
                %v662 = vld [vmem:[%s198 + $0x71c] sm:%s191]
                %663 = vst [vmem:[%s199 + $0x39c] sm:%s191] %v662
                %v664 = vld [vmem:[%s198 + $0x720] sm:%s191]
                %665 = vst [vmem:[%s199 + $0x3a0] sm:%s191] %v664
                %v666 = vld [vmem:[%s198 + $0x724] sm:%s191]
                %667 = vst [vmem:[%s199 + $0x3a4] sm:%s191] %v666
                %v668 = vld [vmem:[%s198 + $0x728] sm:%s191]
                %669 = vst [vmem:[%s199 + $0x3a8] sm:%s191] %v668
                %v670 = vld [vmem:[%s198 + $0x72c] sm:%s191]
                %671 = vst [vmem:[%s199 + $0x3ac] sm:%s191] %v670
                %v672 = vld [vmem:[%s198 + $0x730] sm:%s191]
                %673 = vst [vmem:[%s199 + $0x3b0] sm:%s191] %v672
                %v674 = vld [vmem:[%s198 + $0x734] sm:%s191]
                %675 = vst [vmem:[%s199 + $0x3b4] sm:%s191] %v674
                %v676 = vld [vmem:[%s198 + $0x738] sm:%s191]
                %677 = vst [vmem:[%s199 + $0x3b8] sm:%s191] %v676
                %v678 = vld [vmem:[%s198 + $0x73c] sm:%s191]
                %679 = vst [vmem:[%s199 + $0x3bc] sm:%s191] %v678
                %v680 = vld [vmem:[%s198 + $0x780] sm:%s191]
                %681 = vst [vmem:[%s199 + $0x3c0] sm:%s191] %v680
                %v682 = vld [vmem:[%s198 + $0x784] sm:%s191]
                %683 = vst [vmem:[%s199 + $0x3c4] sm:%s191] %v682
                %v684 = vld [vmem:[%s198 + $0x788] sm:%s191]
                %685 = vst [vmem:[%s199 + $0x3c8] sm:%s191] %v684
                %v686 = vld [vmem:[%s198 + $0x78c] sm:%s191]
                %687 = vst [vmem:[%s199 + $0x3cc] sm:%s191] %v686
                %v688 = vld [vmem:[%s198 + $0x790] sm:%s191]
                %689 = vst [vmem:[%s199 + $0x3d0] sm:%s191] %v688
                %v690 = vld [vmem:[%s198 + $0x794] sm:%s191]
                %691 = vst [vmem:[%s199 + $0x3d4] sm:%s191] %v690
                %v692 = vld [vmem:[%s198 + $0x798] sm:%s191]
                %693 = vst [vmem:[%s199 + $0x3d8] sm:%s191] %v692
                %v694 = vld [vmem:[%s198 + $0x79c] sm:%s191]
                %695 = vst [vmem:[%s199 + $0x3dc] sm:%s191] %v694
                %v696 = vld [vmem:[%s198 + $0x7a0] sm:%s191]
                %697 = vst [vmem:[%s199 + $0x3e0] sm:%s191] %v696
                %v698 = vld [vmem:[%s198 + $0x7a4] sm:%s191]
                %699 = vst [vmem:[%s199 + $0x3e4] sm:%s191] %v698
                %v700 = vld [vmem:[%s198 + $0x7a8] sm:%s191]
                %701 = vst [vmem:[%s199 + $0x3e8] sm:%s191] %v700
                %v702 = vld [vmem:[%s198 + $0x7ac] sm:%s191]
                %703 = vst [vmem:[%s199 + $0x3ec] sm:%s191] %v702
                %v704 = vld [vmem:[%s198 + $0x7b0] sm:%s191]
                %705 = vst [vmem:[%s199 + $0x3f0] sm:%s191] %v704
                %v706 = vld [vmem:[%s198 + $0x7b4] sm:%s191]
                %707 = vst [vmem:[%s199 + $0x3f4] sm:%s191] %v706
                %v708 = vld [vmem:[%s198 + $0x7b8] sm:%s191]
                %709 = vst [vmem:[%s199 + $0x3f8] sm:%s191] %v708
                %v710 = vld [vmem:[%s198 + $0x7bc] sm:%s191]
                %711 = vst [vmem:[%s199 + $0x3fc] sm:%s191] %v710
              $region45: #{matchsum_forward.1} parent=39 // loop_footer
                %s197 = sadd.s32 1, %s193
              $region46: #{matchsum_forward.1} parent=39 // loop_footer_branch
                %192 = sbr.rel target = $region42
              $region47: #{matchsum_forward.1} parent=39 // loop_exit
                _
            $region40: #{matchsum_forward.1} parent=31 // pred_fallthru
              _
          $region32: #{matchsum_forward.1} parent=27 // pred_fallthru
            _
          %2294 = vnop
        $region28: #{matchsum_forward.1} parent=23 // pred_fallthru
          _
        // Predicated region
        $region77: #{matchsum_forward.1} parent=23 // pred_check
          %p2295 = pneg %p72
        $region78: #{matchsum_forward.1} parent=23 // pred_check_branch
          %2297 = sbr.rel (%p2295) target = $region80
        $region79: #{matchsum_forward.1} parent=23 // pred_region
          %s2298 = sand.u32 %s62, 1
          %s2299 = sand.u32 %s62, 1
          %s2300 = smul.addr %s2299, 16
          %s2301 = scalar_lea.vmem [#allocation5], %s2300
          %s2302 = smul.u32 16, %s17
          %s2303 = smul.addr %s2302, 2
          %s2304 = sadd.s32 %s18, %s2303
          %s2305 = scalar_lea.vmem %s1, %s2304
          // Predicated region
          $region81: #{matchsum_forward.1} parent=79 // pred_check
            _
          $region82: #{matchsum_forward.1} parent=79 // pred_check_branch
            %2307 = sbr.rel (0) target = $region84
          $region83: #{matchsum_forward.1} parent=79 // pred_region
            // Predicated region
            $region85: #{matchsum_forward.1} parent=83 // pred_check
              _
            $region86: #{matchsum_forward.1} parent=83 // pred_check_branch
              %2309 = sbr.rel target = $region88
            $region87: #{matchsum_forward.1} parent=83 // pred_region
              // Predicated region
              $region100: #{matchsum_forward.1} parent=87 // pred_check
                _
              $region101: #{matchsum_forward.1} parent=87 // pred_check_branch
                %2355 = sbr.rel (0) target = $region103
              $region102: #{matchsum_forward.1} parent=87 // pred_region
                loop: start=0, step=1, limit=1
                $region104: #{matchsum_forward.1} parent=102 // loop_pre_header
                  _
                $region105: #{matchsum_forward.1} parent=102 // loop_header
                  %s2357 = sphi 0, %s2361
                  %p2358 = scmp.ge.s32.totalorder %s2357, 1
                  %s2362 = sphi %s2305, %s2305
                  %s2363 = sphi %s2301, %s2301
                $region106: #{matchsum_forward.1} parent=102 // loop_header_branch
                  %2360 = sbr.rel (%p2358) target = $region110
                $region107: #{matchsum_forward.1} parent=102 // loop_body
                  _
                $region108: #{matchsum_forward.1} parent=102 // loop_footer
                  %s2361 = sadd.s32 1, %s2357
                $region109: #{matchsum_forward.1} parent=102 // loop_footer_branch
                  %2356 = sbr.rel target = $region105
                $region110: #{matchsum_forward.1} parent=102 // loop_exit
                  _
                %s2365 = ssub.s32 2, 1
                loop: start=0, step=1, limit=1
                $region111: #{matchsum_forward.1} parent=102 // loop_pre_header
                  _
                $region112: #{matchsum_forward.1} parent=102 // loop_header
                  %s2367 = sphi 0, %s2371
                  %p2368 = scmp.ge.s32.totalorder %s2367, 1
                  %s2372 = sphi %s2305, %s2305
                  %s2373 = sphi %s2301, %s2301
                $region113: #{matchsum_forward.1} parent=102 // loop_header_branch
                  %2370 = sbr.rel (%p2368) target = $region117
                $region114: #{matchsum_forward.1} parent=102 // loop_body
                  %v2374 = vld [vmem:[%s2372] sm:%s2365]
                  %2375 = vst [vmem:[%s2373] sm:%s2365] %v2374
                  %v2376 = vld [vmem:[%s2372 + $0x2] sm:%s2365]
                  %2377 = vst [vmem:[%s2373 + $0x1] sm:%s2365] %v2376
                  %v2378 = vld [vmem:[%s2372 + $0x4] sm:%s2365]
                  %2379 = vst [vmem:[%s2373 + $0x2] sm:%s2365] %v2378
                  %v2380 = vld [vmem:[%s2372 + $0x6] sm:%s2365]
                  %2381 = vst [vmem:[%s2373 + $0x3] sm:%s2365] %v2380
                  %v2382 = vld [vmem:[%s2372 + $0x8] sm:%s2365]
                  %2383 = vst [vmem:[%s2373 + $0x4] sm:%s2365] %v2382
                  %v2384 = vld [vmem:[%s2372 + $0xa] sm:%s2365]
                  %2385 = vst [vmem:[%s2373 + $0x5] sm:%s2365] %v2384
                  %v2386 = vld [vmem:[%s2372 + $0xc] sm:%s2365]
                  %2387 = vst [vmem:[%s2373 + $0x6] sm:%s2365] %v2386
                  %v2388 = vld [vmem:[%s2372 + $0xe] sm:%s2365]
                  %2389 = vst [vmem:[%s2373 + $0x7] sm:%s2365] %v2388
                  %v2390 = vld [vmem:[%s2372 + $0x10] sm:%s2365]
                  %2391 = vst [vmem:[%s2373 + $0x8] sm:%s2365] %v2390
                  %v2392 = vld [vmem:[%s2372 + $0x12] sm:%s2365]
                  %2393 = vst [vmem:[%s2373 + $0x9] sm:%s2365] %v2392
                  %v2394 = vld [vmem:[%s2372 + $0x14] sm:%s2365]
                  %2395 = vst [vmem:[%s2373 + $0xa] sm:%s2365] %v2394
                  %v2396 = vld [vmem:[%s2372 + $0x16] sm:%s2365]
                  %2397 = vst [vmem:[%s2373 + $0xb] sm:%s2365] %v2396
                  %v2398 = vld [vmem:[%s2372 + $0x18] sm:%s2365]
                  %2399 = vst [vmem:[%s2373 + $0xc] sm:%s2365] %v2398
                  %v2400 = vld [vmem:[%s2372 + $0x1a] sm:%s2365]
                  %2401 = vst [vmem:[%s2373 + $0xd] sm:%s2365] %v2400
                  %v2402 = vld [vmem:[%s2372 + $0x1c] sm:%s2365]
                  %2403 = vst [vmem:[%s2373 + $0xe] sm:%s2365] %v2402
                  %v2404 = vld [vmem:[%s2372 + $0x1e] sm:%s2365]
                  %2405 = vst [vmem:[%s2373 + $0xf] sm:%s2365] %v2404
                $region115: #{matchsum_forward.1} parent=102 // loop_footer
                  %s2371 = sadd.s32 1, %s2367
                $region116: #{matchsum_forward.1} parent=102 // loop_footer_branch
                  %2366 = sbr.rel target = $region112
                $region117: #{matchsum_forward.1} parent=102 // loop_exit
                  _
              $region103: #{matchsum_forward.1} parent=87 // pred_fallthru
                _
            $region88: #{matchsum_forward.1} parent=83 // pred_fallthru
              _
            // Predicated region
            $region89: #{matchsum_forward.1} parent=83 // pred_check
              _
            $region90: #{matchsum_forward.1} parent=83 // pred_check_branch
              %2311 = sbr.rel (0) target = $region92
            $region91: #{matchsum_forward.1} parent=83 // pred_region
              %s2313 = ssub.s32 2, 1
              loop: start=0, step=1, limit=1
              $region93: #{matchsum_forward.1} parent=91 // loop_pre_header
                _
              $region94: #{matchsum_forward.1} parent=91 // loop_header
                %s2315 = sphi 0, %s2319
                %p2316 = scmp.ge.s32.totalorder %s2315, 1
                %s2320 = sphi %s2305, %s2305
                %s2321 = sphi %s2301, %s2301
              $region95: #{matchsum_forward.1} parent=91 // loop_header_branch
                %2318 = sbr.rel (%p2316) target = $region99
              $region96: #{matchsum_forward.1} parent=91 // loop_body
                %v2322 = vld [vmem:[%s2320] sm:%s2313]
                %2323 = vst [vmem:[%s2321] sm:%s2313] %v2322
                %v2324 = vld [vmem:[%s2320 + $0x2] sm:%s2313]
                %2325 = vst [vmem:[%s2321 + $0x1] sm:%s2313] %v2324
                %v2326 = vld [vmem:[%s2320 + $0x4] sm:%s2313]
                %2327 = vst [vmem:[%s2321 + $0x2] sm:%s2313] %v2326
                %v2328 = vld [vmem:[%s2320 + $0x6] sm:%s2313]
                %2329 = vst [vmem:[%s2321 + $0x3] sm:%s2313] %v2328
                %v2330 = vld [vmem:[%s2320 + $0x8] sm:%s2313]
                %2331 = vst [vmem:[%s2321 + $0x4] sm:%s2313] %v2330
                %v2332 = vld [vmem:[%s2320 + $0xa] sm:%s2313]
                %2333 = vst [vmem:[%s2321 + $0x5] sm:%s2313] %v2332
                %v2334 = vld [vmem:[%s2320 + $0xc] sm:%s2313]
                %2335 = vst [vmem:[%s2321 + $0x6] sm:%s2313] %v2334
                %v2336 = vld [vmem:[%s2320 + $0xe] sm:%s2313]
                %2337 = vst [vmem:[%s2321 + $0x7] sm:%s2313] %v2336
                %v2338 = vld [vmem:[%s2320 + $0x10] sm:%s2313]
                %2339 = vst [vmem:[%s2321 + $0x8] sm:%s2313] %v2338
                %v2340 = vld [vmem:[%s2320 + $0x12] sm:%s2313]
                %2341 = vst [vmem:[%s2321 + $0x9] sm:%s2313] %v2340
                %v2342 = vld [vmem:[%s2320 + $0x14] sm:%s2313]
                %2343 = vst [vmem:[%s2321 + $0xa] sm:%s2313] %v2342
                %v2344 = vld [vmem:[%s2320 + $0x16] sm:%s2313]
                %2345 = vst [vmem:[%s2321 + $0xb] sm:%s2313] %v2344
                %v2346 = vld [vmem:[%s2320 + $0x18] sm:%s2313]
                %2347 = vst [vmem:[%s2321 + $0xc] sm:%s2313] %v2346
                %v2348 = vld [vmem:[%s2320 + $0x1a] sm:%s2313]
                %2349 = vst [vmem:[%s2321 + $0xd] sm:%s2313] %v2348
                %v2350 = vld [vmem:[%s2320 + $0x1c] sm:%s2313]
                %2351 = vst [vmem:[%s2321 + $0xe] sm:%s2313] %v2350
                %v2352 = vld [vmem:[%s2320 + $0x1e] sm:%s2313]
                %2353 = vst [vmem:[%s2321 + $0xf] sm:%s2313] %v2352
              $region97: #{matchsum_forward.1} parent=91 // loop_footer
                %s2319 = sadd.s32 1, %s2315
              $region98: #{matchsum_forward.1} parent=91 // loop_footer_branch
                %2314 = sbr.rel target = $region94
              $region99: #{matchsum_forward.1} parent=91 // loop_exit
                _
            $region92: #{matchsum_forward.1} parent=83 // pred_fallthru
              _
          $region84: #{matchsum_forward.1} parent=79 // pred_fallthru
            _
          %2406 = vnop
        $region80: #{matchsum_forward.1} parent=23 // pred_fallthru
          _
      $region24: #{matchsum_forward.1} parent=5 // pred_fallthru
        _
      %p2407 = scmp.le.s32.totalorder 1, %s10
      %p2408 = scmp.lt.s32.totalorder %s10, 5
      %p2409 = pnand %p2407, %p2408
      %p2410 = pneg %p2409
      // Predicated region
      $region118: #{matchsum_forward.1} parent=5 // pred_check
        _
      $region119: #{matchsum_forward.1} parent=5 // pred_check_branch
        %2412 = sbr.rel (%p2409) target = $region121
      $region120: #{matchsum_forward.1} parent=5 // pred_region
        %s2413 = ssub.s32 %s10, 1
        %s2414 = sand.u32 %s37, 1
        %s2415 = sand.u32 %s37, 1
        %s2416 = smul.addr %s2415, 1024
        %s2417 = scalar_lea.vmem [#allocation4], %s2416
        // Predicated region
        $region122: #{matchsum_forward.1} parent=120 // pred_check
          %p2418 = pneg %p50
        $region123: #{matchsum_forward.1} parent=120 // pred_check_branch
          %2420 = sbr.rel (%p2418) target = $region125
        $region124: #{matchsum_forward.1} parent=120 // pred_region
          _
        $region125: #{matchsum_forward.1} parent=120 // pred_fallthru
          _
        %s2421 = sand.u32 %s65, 1
        %s2422 = sand.u32 %s65, 1
        %s2423 = smul.addr %s2422, 16
        %s2424 = scalar_lea.vmem [#allocation5], %s2423
        // Predicated region
        $region126: #{matchsum_forward.1} parent=120 // pred_check
          %p2425 = pneg %p78
        $region127: #{matchsum_forward.1} parent=120 // pred_check_branch
          %2427 = sbr.rel (%p2425) target = $region129
        $region128: #{matchsum_forward.1} parent=120 // pred_region
          _
        $region129: #{matchsum_forward.1} parent=120 // pred_fallthru
          _
        %s2428 = sand.u32 %s37, 1
        %s2429 = sand.u32 %s37, 1
        %s2430 = smul.addr %s2429, 1024
        %s2431 = scalar_lea.vmem [#allocation4], %s2430
        %p2432 = pneg %p50
        %p2433 = pneg %p47
        %s2434 = sand.u32 %s65, 1
        %s2435 = sand.u32 %s65, 1
        %s2436 = smul.addr %s2435, 16
        %s2437 = scalar_lea.vmem [#allocation5], %s2436
        %p2438 = pneg %p78
        %p2439 = pneg %p75
        %p2440 = pneg %p99
        %p2441 = pneg %p96
        %p2442 = pneg %p120
        %p2443 = pneg %p117
        %p2444 = pneg %p146
        %p2445 = pneg %p143
        %p2446 = scmp.lt.s32.totalorder %s19, 1
        %s2447 = scalar_select %p2446, %s19, 1
        %s2448 = smul.addr %s2447, 2
        %s2449 = scalar_lea.vmem %s4, %s2448
        %s2450 = smul.u32 16, %s19
        %s2451 = smul.u32 16, %s20
        %s2452 = smul.u32 16, %s19
        %p2453 = scmp.lt.s32.totalorder %s19, 1
        %s2454 = scalar_select %p2453, %s19, 1
        %s2455 = smul.addr %s2454, 2
        %s2456 = scalar_lea.vmem %s4, %s2455
        %p2457 = scmp.eq.s32.totalorder %s20, 0
        // Predicated region
        $region130: #{matchsum_forward.1} parent=120 // pred_check
          %p2458 = pneg %p2457
        $region131: #{matchsum_forward.1} parent=120 // pred_check_branch
          %2460 = sbr.rel (%p2458) target = $region133
        $region132: #{matchsum_forward.1} parent=120 // pred_region
          %2461 = vst [vmem:[#allocation2] sm:$0xff] 0.0
          %2462 = vst [vmem:[#allocation2 + $0x8] sm:$0xff] 0.0
          %vm2463 = vcmask 7168
          %2464 = vst.msk [vmem:[#allocation3] sm:$0xff] %vm2463, 0.0
          %2465 = vst.msk [vmem:[#allocation3 + $0x8] sm:$0xff] %vm2463, 0.0
        $region133: #{matchsum_forward.1} parent=120 // pred_fallthru
          _
        %v2466 = vld [vmem:[%s2417] sm:$0xf]
        %v2467 = vld [vmem:[%s2417 + $0x4] sm:$0xf]
        %v2468 = vld [vmem:[%s2417 + $0x8] sm:$0xf]
        %v2469 = vld [vmem:[%s2417 + $0xc] sm:$0xf]
        %v2470 = vld [vmem:[%s2417 + $0x10] sm:$0xf]
        %v2471 = vld [vmem:[%s2417 + $0x14] sm:$0xf]
        %v2472 = vld [vmem:[%s2417 + $0x18] sm:$0xf]
        %v2473 = vld [vmem:[%s2417 + $0x1c] sm:$0xf]
        %v2474 = vld [vmem:[%s2417 + $0x20] sm:$0xf]
        %v2475 = vld [vmem:[%s2417 + $0x24] sm:$0xf]
        %v2476 = vld [vmem:[%s2417 + $0x28] sm:$0xf]
        %v2477 = vld [vmem:[%s2417 + $0x2c] sm:$0xf]
        %v2478 = vld [vmem:[%s2417 + $0x30] sm:$0xf]
        %v2479 = vld [vmem:[%s2417 + $0x34] sm:$0xf]
        %v2480 = vld [vmem:[%s2417 + $0x38] sm:$0xf]
        %v2481 = vld [vmem:[%s2417 + $0x3c] sm:$0xf]
        %v2482 = vld [vmem:[%s2417 + $0x40] sm:$0xf]
        %v2483 = vld [vmem:[%s2417 + $0x44] sm:$0xf]
        %v2484 = vld [vmem:[%s2417 + $0x48] sm:$0xf]
        %v2485 = vld [vmem:[%s2417 + $0x4c] sm:$0xf]
        %v2486 = vld [vmem:[%s2417 + $0x50] sm:$0xf]
        %v2487 = vld [vmem:[%s2417 + $0x54] sm:$0xf]
        %v2488 = vld [vmem:[%s2417 + $0x58] sm:$0xf]
        %v2489 = vld [vmem:[%s2417 + $0x5c] sm:$0xf]
        %v2490 = vld [vmem:[%s2417 + $0x60] sm:$0xf]
        %v2491 = vld [vmem:[%s2417 + $0x64] sm:$0xf]
        %v2492 = vld [vmem:[%s2417 + $0x68] sm:$0xf]
        %v2493 = vld [vmem:[%s2417 + $0x6c] sm:$0xf]
        %v2494 = vld [vmem:[%s2417 + $0x70] sm:$0xf]
        %v2495 = vld [vmem:[%s2417 + $0x74] sm:$0xf]
        %v2496 = vld [vmem:[%s2417 + $0x78] sm:$0xf]
        %v2497 = vld [vmem:[%s2417 + $0x7c] sm:$0xf]
        %v2498 = vld [vmem:[%s2417 + $0x80] sm:$0xf]
        %v2499 = vld [vmem:[%s2417 + $0x84] sm:$0xf]
        %v2500 = vld [vmem:[%s2417 + $0x88] sm:$0xf]
        %v2501 = vld [vmem:[%s2417 + $0x8c] sm:$0xf]
        %v2502 = vld [vmem:[%s2417 + $0x90] sm:$0xf]
        %v2503 = vld [vmem:[%s2417 + $0x94] sm:$0xf]
        %v2504 = vld [vmem:[%s2417 + $0x98] sm:$0xf]
        %v2505 = vld [vmem:[%s2417 + $0x9c] sm:$0xf]
        %v2506 = vld [vmem:[%s2417 + $0xa0] sm:$0xf]
        %v2507 = vld [vmem:[%s2417 + $0xa4] sm:$0xf]
        %v2508 = vld [vmem:[%s2417 + $0xa8] sm:$0xf]
        %v2509 = vld [vmem:[%s2417 + $0xac] sm:$0xf]
        %v2510 = vld [vmem:[%s2417 + $0xb0] sm:$0xf]
        %v2511 = vld [vmem:[%s2417 + $0xb4] sm:$0xf]
        %v2512 = vld [vmem:[%s2417 + $0xb8] sm:$0xf]
        %v2513 = vld [vmem:[%s2417 + $0xbc] sm:$0xf]
        %v2514 = vld [vmem:[%s2417 + $0xc0] sm:$0xf]
        %v2515 = vld [vmem:[%s2417 + $0xc4] sm:$0xf]
        %v2516 = vld [vmem:[%s2417 + $0xc8] sm:$0xf]
        %v2517 = vld [vmem:[%s2417 + $0xcc] sm:$0xf]
        %v2518 = vld [vmem:[%s2417 + $0xd0] sm:$0xf]
        %v2519 = vld [vmem:[%s2417 + $0xd4] sm:$0xf]
        %v2520 = vld [vmem:[%s2417 + $0xd8] sm:$0xf]
        %v2521 = vld [vmem:[%s2417 + $0xdc] sm:$0xf]
        %v2522 = vld [vmem:[%s2417 + $0xe0] sm:$0xf]
        %v2523 = vld [vmem:[%s2417 + $0xe4] sm:$0xf]
        %v2524 = vld [vmem:[%s2417 + $0xe8] sm:$0xf]
        %v2525 = vld [vmem:[%s2417 + $0xec] sm:$0xf]
        %v2526 = vld [vmem:[%s2417 + $0xf0] sm:$0xf]
        %v2527 = vld [vmem:[%s2417 + $0xf4] sm:$0xf]
        %v2528 = vld [vmem:[%s2417 + $0xf8] sm:$0xf]
        %v2529 = vld [vmem:[%s2417 + $0xfc] sm:$0xf]
        %v2530 = vld [vmem:[%s2417 + $0x100] sm:$0xf]
        %v2531 = vld [vmem:[%s2417 + $0x104] sm:$0xf]
        %v2532 = vld [vmem:[%s2417 + $0x108] sm:$0xf]
        %v2533 = vld [vmem:[%s2417 + $0x10c] sm:$0xf]
        %v2534 = vld [vmem:[%s2417 + $0x110] sm:$0xf]
        %v2535 = vld [vmem:[%s2417 + $0x114] sm:$0xf]
        %v2536 = vld [vmem:[%s2417 + $0x118] sm:$0xf]
        %v2537 = vld [vmem:[%s2417 + $0x11c] sm:$0xf]
        %v2538 = vld [vmem:[%s2417 + $0x120] sm:$0xf]
        %v2539 = vld [vmem:[%s2417 + $0x124] sm:$0xf]
        %v2540 = vld [vmem:[%s2417 + $0x128] sm:$0xf]
        %v2541 = vld [vmem:[%s2417 + $0x12c] sm:$0xf]
        %v2542 = vld [vmem:[%s2417 + $0x130] sm:$0xf]
        %v2543 = vld [vmem:[%s2417 + $0x134] sm:$0xf]
        %v2544 = vld [vmem:[%s2417 + $0x138] sm:$0xf]
        %v2545 = vld [vmem:[%s2417 + $0x13c] sm:$0xf]
        %v2546 = vld [vmem:[%s2417 + $0x140] sm:$0xf]
        %v2547 = vld [vmem:[%s2417 + $0x144] sm:$0xf]
        %v2548 = vld [vmem:[%s2417 + $0x148] sm:$0xf]
        %v2549 = vld [vmem:[%s2417 + $0x14c] sm:$0xf]
        %v2550 = vld [vmem:[%s2417 + $0x150] sm:$0xf]
        %v2551 = vld [vmem:[%s2417 + $0x154] sm:$0xf]
        %v2552 = vld [vmem:[%s2417 + $0x158] sm:$0xf]
        %v2553 = vld [vmem:[%s2417 + $0x15c] sm:$0xf]
        %v2554 = vld [vmem:[%s2417 + $0x160] sm:$0xf]
        %v2555 = vld [vmem:[%s2417 + $0x164] sm:$0xf]
        %v2556 = vld [vmem:[%s2417 + $0x168] sm:$0xf]
        %v2557 = vld [vmem:[%s2417 + $0x16c] sm:$0xf]
        %v2558 = vld [vmem:[%s2417 + $0x170] sm:$0xf]
        %v2559 = vld [vmem:[%s2417 + $0x174] sm:$0xf]
        %v2560 = vld [vmem:[%s2417 + $0x178] sm:$0xf]
        %v2561 = vld [vmem:[%s2417 + $0x17c] sm:$0xf]
        %v2562 = vld [vmem:[%s2417 + $0x180] sm:$0xf]
        %v2563 = vld [vmem:[%s2417 + $0x184] sm:$0xf]
        %v2564 = vld [vmem:[%s2417 + $0x188] sm:$0xf]
        %v2565 = vld [vmem:[%s2417 + $0x18c] sm:$0xf]
        %v2566 = vld [vmem:[%s2417 + $0x190] sm:$0xf]
        %v2567 = vld [vmem:[%s2417 + $0x194] sm:$0xf]
        %v2568 = vld [vmem:[%s2417 + $0x198] sm:$0xf]
        %v2569 = vld [vmem:[%s2417 + $0x19c] sm:$0xf]
        %v2570 = vld [vmem:[%s2417 + $0x1a0] sm:$0xf]
        %v2571 = vld [vmem:[%s2417 + $0x1a4] sm:$0xf]
        %v2572 = vld [vmem:[%s2417 + $0x1a8] sm:$0xf]
        %v2573 = vld [vmem:[%s2417 + $0x1ac] sm:$0xf]
        %v2574 = vld [vmem:[%s2417 + $0x1b0] sm:$0xf]
        %v2575 = vld [vmem:[%s2417 + $0x1b4] sm:$0xf]
        %v2576 = vld [vmem:[%s2417 + $0x1b8] sm:$0xf]
        %v2577 = vld [vmem:[%s2417 + $0x1bc] sm:$0xf]
        %v2578 = vld [vmem:[%s2417 + $0x1c0] sm:$0xf]
        %v2579 = vld [vmem:[%s2417 + $0x1c4] sm:$0xf]
        %v2580 = vld [vmem:[%s2417 + $0x1c8] sm:$0xf]
        %v2581 = vld [vmem:[%s2417 + $0x1cc] sm:$0xf]
        %v2582 = vld [vmem:[%s2417 + $0x1d0] sm:$0xf]
        %v2583 = vld [vmem:[%s2417 + $0x1d4] sm:$0xf]
        %v2584 = vld [vmem:[%s2417 + $0x1d8] sm:$0xf]
        %v2585 = vld [vmem:[%s2417 + $0x1dc] sm:$0xf]
        %v2586 = vld [vmem:[%s2417 + $0x1e0] sm:$0xf]
        %v2587 = vld [vmem:[%s2417 + $0x1e4] sm:$0xf]
        %v2588 = vld [vmem:[%s2417 + $0x1e8] sm:$0xf]
        %v2589 = vld [vmem:[%s2417 + $0x1ec] sm:$0xf]
        %v2590 = vld [vmem:[%s2417 + $0x1f0] sm:$0xf]
        %v2591 = vld [vmem:[%s2417 + $0x1f4] sm:$0xf]
        %v2592 = vld [vmem:[%s2417 + $0x1f8] sm:$0xf]
        %v2593 = vld [vmem:[%s2417 + $0x1fc] sm:$0xf]
        %v2594 = vld [vmem:[%s2417 + $0x200] sm:$0xf]
        %v2595 = vld [vmem:[%s2417 + $0x204] sm:$0xf]
        %v2596 = vld [vmem:[%s2417 + $0x208] sm:$0xf]
        %v2597 = vld [vmem:[%s2417 + $0x20c] sm:$0xf]
        %v2598 = vld [vmem:[%s2417 + $0x210] sm:$0xf]
        %v2599 = vld [vmem:[%s2417 + $0x214] sm:$0xf]
        %v2600 = vld [vmem:[%s2417 + $0x218] sm:$0xf]
        %v2601 = vld [vmem:[%s2417 + $0x21c] sm:$0xf]
        %v2602 = vld [vmem:[%s2417 + $0x220] sm:$0xf]
        %v2603 = vld [vmem:[%s2417 + $0x224] sm:$0xf]
        %v2604 = vld [vmem:[%s2417 + $0x228] sm:$0xf]
        %v2605 = vld [vmem:[%s2417 + $0x22c] sm:$0xf]
        %v2606 = vld [vmem:[%s2417 + $0x230] sm:$0xf]
        %v2607 = vld [vmem:[%s2417 + $0x234] sm:$0xf]
        %v2608 = vld [vmem:[%s2417 + $0x238] sm:$0xf]
        %v2609 = vld [vmem:[%s2417 + $0x23c] sm:$0xf]
        %v2610 = vld [vmem:[%s2417 + $0x240] sm:$0xf]
        %v2611 = vld [vmem:[%s2417 + $0x244] sm:$0xf]
        %v2612 = vld [vmem:[%s2417 + $0x248] sm:$0xf]
        %v2613 = vld [vmem:[%s2417 + $0x24c] sm:$0xf]
        %v2614 = vld [vmem:[%s2417 + $0x250] sm:$0xf]
        %v2615 = vld [vmem:[%s2417 + $0x254] sm:$0xf]
        %v2616 = vld [vmem:[%s2417 + $0x258] sm:$0xf]
        %v2617 = vld [vmem:[%s2417 + $0x25c] sm:$0xf]
        %v2618 = vld [vmem:[%s2417 + $0x260] sm:$0xf]
        %v2619 = vld [vmem:[%s2417 + $0x264] sm:$0xf]
        %v2620 = vld [vmem:[%s2417 + $0x268] sm:$0xf]
        %v2621 = vld [vmem:[%s2417 + $0x26c] sm:$0xf]
        %v2622 = vld [vmem:[%s2417 + $0x270] sm:$0xf]
        %v2623 = vld [vmem:[%s2417 + $0x274] sm:$0xf]
        %v2624 = vld [vmem:[%s2417 + $0x278] sm:$0xf]
        %v2625 = vld [vmem:[%s2417 + $0x27c] sm:$0xf]
        %v2626 = vld [vmem:[%s2417 + $0x280] sm:$0xf]
        %v2627 = vld [vmem:[%s2417 + $0x284] sm:$0xf]
        %v2628 = vld [vmem:[%s2417 + $0x288] sm:$0xf]
        %v2629 = vld [vmem:[%s2417 + $0x28c] sm:$0xf]
        %v2630 = vld [vmem:[%s2417 + $0x290] sm:$0xf]
        %v2631 = vld [vmem:[%s2417 + $0x294] sm:$0xf]
        %v2632 = vld [vmem:[%s2417 + $0x298] sm:$0xf]
        %v2633 = vld [vmem:[%s2417 + $0x29c] sm:$0xf]
        %v2634 = vld [vmem:[%s2417 + $0x2a0] sm:$0xf]
        %v2635 = vld [vmem:[%s2417 + $0x2a4] sm:$0xf]
        %v2636 = vld [vmem:[%s2417 + $0x2a8] sm:$0xf]
        %v2637 = vld [vmem:[%s2417 + $0x2ac] sm:$0xf]
        %v2638 = vld [vmem:[%s2417 + $0x2b0] sm:$0xf]
        %v2639 = vld [vmem:[%s2417 + $0x2b4] sm:$0xf]
        %v2640 = vld [vmem:[%s2417 + $0x2b8] sm:$0xf]
        %v2641 = vld [vmem:[%s2417 + $0x2bc] sm:$0xf]
        %v2642 = vld [vmem:[%s2417 + $0x2c0] sm:$0xf]
        %v2643 = vld [vmem:[%s2417 + $0x2c4] sm:$0xf]
        %v2644 = vld [vmem:[%s2417 + $0x2c8] sm:$0xf]
        %v2645 = vld [vmem:[%s2417 + $0x2cc] sm:$0xf]
        %v2646 = vld [vmem:[%s2417 + $0x2d0] sm:$0xf]
        %v2647 = vld [vmem:[%s2417 + $0x2d4] sm:$0xf]
        %v2648 = vld [vmem:[%s2417 + $0x2d8] sm:$0xf]
        %v2649 = vld [vmem:[%s2417 + $0x2dc] sm:$0xf]
        %v2650 = vld [vmem:[%s2417 + $0x2e0] sm:$0xf]
        %v2651 = vld [vmem:[%s2417 + $0x2e4] sm:$0xf]
        %v2652 = vld [vmem:[%s2417 + $0x2e8] sm:$0xf]
        %v2653 = vld [vmem:[%s2417 + $0x2ec] sm:$0xf]
        %v2654 = vld [vmem:[%s2417 + $0x2f0] sm:$0xf]
        %v2655 = vld [vmem:[%s2417 + $0x2f4] sm:$0xf]
        %v2656 = vld [vmem:[%s2417 + $0x2f8] sm:$0xf]
        %v2657 = vld [vmem:[%s2417 + $0x2fc] sm:$0xf]
        %v2658 = vld [vmem:[%s2417 + $0x300] sm:$0xf]
        %v2659 = vld [vmem:[%s2417 + $0x304] sm:$0xf]
        %v2660 = vld [vmem:[%s2417 + $0x308] sm:$0xf]
        %v2661 = vld [vmem:[%s2417 + $0x30c] sm:$0xf]
        %v2662 = vld [vmem:[%s2417 + $0x310] sm:$0xf]
        %v2663 = vld [vmem:[%s2417 + $0x314] sm:$0xf]
        %v2664 = vld [vmem:[%s2417 + $0x318] sm:$0xf]
        %v2665 = vld [vmem:[%s2417 + $0x31c] sm:$0xf]
        %v2666 = vld [vmem:[%s2417 + $0x320] sm:$0xf]
        %v2667 = vld [vmem:[%s2417 + $0x324] sm:$0xf]
        %v2668 = vld [vmem:[%s2417 + $0x328] sm:$0xf]
        %v2669 = vld [vmem:[%s2417 + $0x32c] sm:$0xf]
        %v2670 = vld [vmem:[%s2417 + $0x330] sm:$0xf]
        %v2671 = vld [vmem:[%s2417 + $0x334] sm:$0xf]
        %v2672 = vld [vmem:[%s2417 + $0x338] sm:$0xf]
        %v2673 = vld [vmem:[%s2417 + $0x33c] sm:$0xf]
        %v2674 = vld [vmem:[%s2417 + $0x340] sm:$0xf]
        %v2675 = vld [vmem:[%s2417 + $0x344] sm:$0xf]
        %v2676 = vld [vmem:[%s2417 + $0x348] sm:$0xf]
        %v2677 = vld [vmem:[%s2417 + $0x34c] sm:$0xf]
        %v2678 = vld [vmem:[%s2417 + $0x350] sm:$0xf]
        %v2679 = vld [vmem:[%s2417 + $0x354] sm:$0xf]
        %v2680 = vld [vmem:[%s2417 + $0x358] sm:$0xf]
        %v2681 = vld [vmem:[%s2417 + $0x35c] sm:$0xf]
        %v2682 = vld [vmem:[%s2417 + $0x360] sm:$0xf]
        %v2683 = vld [vmem:[%s2417 + $0x364] sm:$0xf]
        %v2684 = vld [vmem:[%s2417 + $0x368] sm:$0xf]
        %v2685 = vld [vmem:[%s2417 + $0x36c] sm:$0xf]
        %v2686 = vld [vmem:[%s2417 + $0x370] sm:$0xf]
        %v2687 = vld [vmem:[%s2417 + $0x374] sm:$0xf]
        %v2688 = vld [vmem:[%s2417 + $0x378] sm:$0xf]
        %v2689 = vld [vmem:[%s2417 + $0x37c] sm:$0xf]
        %v2690 = vld [vmem:[%s2417 + $0x380] sm:$0xf]
        %v2691 = vld [vmem:[%s2417 + $0x384] sm:$0xf]
        %v2692 = vld [vmem:[%s2417 + $0x388] sm:$0xf]
        %v2693 = vld [vmem:[%s2417 + $0x38c] sm:$0xf]
        %v2694 = vld [vmem:[%s2417 + $0x390] sm:$0xf]
        %v2695 = vld [vmem:[%s2417 + $0x394] sm:$0xf]
        %v2696 = vld [vmem:[%s2417 + $0x398] sm:$0xf]
        %v2697 = vld [vmem:[%s2417 + $0x39c] sm:$0xf]
        %v2698 = vld [vmem:[%s2417 + $0x3a0] sm:$0xf]
        %v2699 = vld [vmem:[%s2417 + $0x3a4] sm:$0xf]
        %v2700 = vld [vmem:[%s2417 + $0x3a8] sm:$0xf]
        %v2701 = vld [vmem:[%s2417 + $0x3ac] sm:$0xf]
        %v2702 = vld [vmem:[%s2417 + $0x3b0] sm:$0xf]
        %v2703 = vld [vmem:[%s2417 + $0x3b4] sm:$0xf]
        %v2704 = vld [vmem:[%s2417 + $0x3b8] sm:$0xf]
        %v2705 = vld [vmem:[%s2417 + $0x3bc] sm:$0xf]
        %v2706 = vld [vmem:[%s2417 + $0x3c0] sm:$0xf]
        %v2707 = vld [vmem:[%s2417 + $0x3c4] sm:$0xf]
        %v2708 = vld [vmem:[%s2417 + $0x3c8] sm:$0xf]
        %v2709 = vld [vmem:[%s2417 + $0x3cc] sm:$0xf]
        %v2710 = vld [vmem:[%s2417 + $0x3d0] sm:$0xf]
        %v2711 = vld [vmem:[%s2417 + $0x3d4] sm:$0xf]
        %v2712 = vld [vmem:[%s2417 + $0x3d8] sm:$0xf]
        %v2713 = vld [vmem:[%s2417 + $0x3dc] sm:$0xf]
        %v2714 = vld [vmem:[%s2417 + $0x3e0] sm:$0xf]
        %v2715 = vld [vmem:[%s2417 + $0x3e4] sm:$0xf]
        %v2716 = vld [vmem:[%s2417 + $0x3e8] sm:$0xf]
        %v2717 = vld [vmem:[%s2417 + $0x3ec] sm:$0xf]
        %v2718 = vld [vmem:[%s2417 + $0x3f0] sm:$0xf]
        %v2719 = vld [vmem:[%s2417 + $0x3f4] sm:$0xf]
        %v2720 = vld [vmem:[%s2417 + $0x3f8] sm:$0xf]
        %v2721 = vld [vmem:[%s2417 + $0x3fc] sm:$0xf]
        %v2722 = vld [vmem:[%s2424] sm:$0x1]
        %v2723 = vld [vmem:[%s2424 + $0x1] sm:$0x1]
        %v2724 = vld [vmem:[%s2424 + $0x2] sm:$0x1]
        %v2725 = vld [vmem:[%s2424 + $0x3] sm:$0x1]
        %v2726 = vld [vmem:[%s2424 + $0x4] sm:$0x1]
        %v2727 = vld [vmem:[%s2424 + $0x5] sm:$0x1]
        %v2728 = vld [vmem:[%s2424 + $0x6] sm:$0x1]
        %v2729 = vld [vmem:[%s2424 + $0x7] sm:$0x1]
        %v2730 = vld [vmem:[%s2424 + $0x8] sm:$0x1]
        %v2731 = vld [vmem:[%s2424 + $0x9] sm:$0x1]
        %v2732 = vld [vmem:[%s2424 + $0xa] sm:$0x1]
        %v2733 = vld [vmem:[%s2424 + $0xb] sm:$0x1]
        %v2734 = vld [vmem:[%s2424 + $0xc] sm:$0x1]
        %v2735 = vld [vmem:[%s2424 + $0xd] sm:$0x1]
        %v2736 = vld [vmem:[%s2424 + $0xe] sm:$0x1]
        %v2737 = vld [vmem:[%s2424 + $0xf] sm:$0x1]
        %v2738 = vld [vmem:[#allocation2] sm:$0xff]
        %v2739 = vld [vmem:[#allocation2 + $0x8] sm:$0xff]
        %v2756 = vunpack.c.l.b16 %v2466
        %v2757 = vunpack.c.l.b16 %v2467
        %v2758 = vunpack.c.l.b16 %v2468
        %v2759 = vunpack.c.l.b16 %v2469
        %v2760 = vunpack.c.l.b16 %v2470
        %v2761 = vunpack.c.l.b16 %v2471
        %v2762 = vunpack.c.l.b16 %v2472
        %v2763 = vunpack.c.l.b16 %v2473
        %v2764 = vunpack.c.l.b16 %v2474
        %v2765 = vunpack.c.l.b16 %v2475
        %v2766 = vunpack.c.l.b16 %v2476
        %v2767 = vunpack.c.l.b16 %v2477
        %v2768 = vunpack.c.l.b16 %v2478
        %v2769 = vunpack.c.l.b16 %v2479
        %v2770 = vunpack.c.l.b16 %v2480
        %v2771 = vunpack.c.l.b16 %v2481
        %v2772 = vpack.c.b16 %v2757, %v2756
        %v2773 = vpack.c.b16 %v2759, %v2758
        %v2774 = vpack.c.b16 %v2761, %v2760
        %v2775 = vpack.c.b16 %v2763, %v2762
        %v2776 = vpack.c.b16 %v2765, %v2764
        %v2777 = vpack.c.b16 %v2767, %v2766
        %v2778 = vpack.c.b16 %v2769, %v2768
        %v2779 = vpack.c.b16 %v2771, %v2770
        %2788 = vmatpush.bf16.msra.mxu0 %v2779
        %2789 = vmatpush.bf16.msra.mxu0 %v2778
        %2790 = vmatpush.bf16.msra.mxu0 %v2777
        %2791 = vmatpush.bf16.msra.mxu0 %v2776
        %2792 = vmatpush.bf16.msra.mxu0 %v2775
        %2793 = vmatpush.bf16.msra.mxu0 %v2774
        %2794 = vmatpush.bf16.msra.mxu0 %v2773
        %2795 = vmatpush.bf16.msra.mxu0 %v2772
        %2796 = vmatmul.bf16.gmra.mxu0 %v2722
        %v2797 = vpop.f32.mrf.mxu0
        %v2798 = vadd.f32 0.0, %v2797
        %v2799 = vpop.f32.mrf.mxu0
        %2800 = vdwg.mxu0
        %v2817 = vunpack.c.l.b16 %v2482
        %v2818 = vunpack.c.l.b16 %v2483
        %v2819 = vunpack.c.l.b16 %v2484
        %v2820 = vunpack.c.l.b16 %v2485
        %v2821 = vunpack.c.l.b16 %v2486
        %v2822 = vunpack.c.l.b16 %v2487
        %v2823 = vunpack.c.l.b16 %v2488
        %v2824 = vunpack.c.l.b16 %v2489
        %v2825 = vunpack.c.l.b16 %v2490
        %v2826 = vunpack.c.l.b16 %v2491
        %v2827 = vunpack.c.l.b16 %v2492
        %v2828 = vunpack.c.l.b16 %v2493
        %v2829 = vunpack.c.l.b16 %v2494
        %v2830 = vunpack.c.l.b16 %v2495
        %v2831 = vunpack.c.l.b16 %v2496
        %v2832 = vunpack.c.l.b16 %v2497
        %v2833 = vpack.c.b16 %v2818, %v2817
        %v2834 = vpack.c.b16 %v2820, %v2819
        %v2835 = vpack.c.b16 %v2822, %v2821
        %v2836 = vpack.c.b16 %v2824, %v2823
        %v2837 = vpack.c.b16 %v2826, %v2825
        %v2838 = vpack.c.b16 %v2828, %v2827
        %v2839 = vpack.c.b16 %v2830, %v2829
        %v2840 = vpack.c.b16 %v2832, %v2831
        %2849 = vmatpush.bf16.msra.mxu0 %v2840
        %2850 = vmatpush.bf16.msra.mxu0 %v2839
        %2851 = vmatpush.bf16.msra.mxu0 %v2838
        %2852 = vmatpush.bf16.msra.mxu0 %v2837
        %2853 = vmatpush.bf16.msra.mxu0 %v2836
        %2854 = vmatpush.bf16.msra.mxu0 %v2835
        %2855 = vmatpush.bf16.msra.mxu0 %v2834
        %2856 = vmatpush.bf16.msra.mxu0 %v2833
        %2857 = vmatmul.bf16.gmra.mxu0 %v2723
        %v2858 = vpop.f32.mrf.mxu0
        %v2859 = vadd.f32 0.0, %v2858
        %v2860 = vpop.f32.mrf.mxu0
        %2861 = vdwg.mxu0
        %v2878 = vunpack.c.l.b16 %v2498
        %v2879 = vunpack.c.l.b16 %v2499
        %v2880 = vunpack.c.l.b16 %v2500
        %v2881 = vunpack.c.l.b16 %v2501
        %v2882 = vunpack.c.l.b16 %v2502
        %v2883 = vunpack.c.l.b16 %v2503
        %v2884 = vunpack.c.l.b16 %v2504
        %v2885 = vunpack.c.l.b16 %v2505
        %v2886 = vunpack.c.l.b16 %v2506
        %v2887 = vunpack.c.l.b16 %v2507
        %v2888 = vunpack.c.l.b16 %v2508
        %v2889 = vunpack.c.l.b16 %v2509
        %v2890 = vunpack.c.l.b16 %v2510
        %v2891 = vunpack.c.l.b16 %v2511
        %v2892 = vunpack.c.l.b16 %v2512
        %v2893 = vunpack.c.l.b16 %v2513
        %v2894 = vpack.c.b16 %v2879, %v2878
        %v2895 = vpack.c.b16 %v2881, %v2880
        %v2896 = vpack.c.b16 %v2883, %v2882
        %v2897 = vpack.c.b16 %v2885, %v2884
        %v2898 = vpack.c.b16 %v2887, %v2886
        %v2899 = vpack.c.b16 %v2889, %v2888
        %v2900 = vpack.c.b16 %v2891, %v2890
        %v2901 = vpack.c.b16 %v2893, %v2892
        %2910 = vmatpush.bf16.msra.mxu0 %v2901
        %2911 = vmatpush.bf16.msra.mxu0 %v2900
        %2912 = vmatpush.bf16.msra.mxu0 %v2899
        %2913 = vmatpush.bf16.msra.mxu0 %v2898
        %2914 = vmatpush.bf16.msra.mxu0 %v2897
        %2915 = vmatpush.bf16.msra.mxu0 %v2896
        %2916 = vmatpush.bf16.msra.mxu0 %v2895
        %2917 = vmatpush.bf16.msra.mxu0 %v2894
        %2918 = vmatmul.bf16.gmra.mxu0 %v2724
        %v2919 = vpop.f32.mrf.mxu0
        %v2920 = vadd.f32 0.0, %v2919
        %v2921 = vpop.f32.mrf.mxu0
        %2922 = vdwg.mxu0
        %v2939 = vunpack.c.l.b16 %v2514
        %v2940 = vunpack.c.l.b16 %v2515
        %v2941 = vunpack.c.l.b16 %v2516
        %v2942 = vunpack.c.l.b16 %v2517
        %v2943 = vunpack.c.l.b16 %v2518
        %v2944 = vunpack.c.l.b16 %v2519
        %v2945 = vunpack.c.l.b16 %v2520
        %v2946 = vunpack.c.l.b16 %v2521
        %v2947 = vunpack.c.l.b16 %v2522
        %v2948 = vunpack.c.l.b16 %v2523
        %v2949 = vunpack.c.l.b16 %v2524
        %v2950 = vunpack.c.l.b16 %v2525
        %v2951 = vunpack.c.l.b16 %v2526
        %v2952 = vunpack.c.l.b16 %v2527
        %v2953 = vunpack.c.l.b16 %v2528
        %v2954 = vunpack.c.l.b16 %v2529
        %v2955 = vpack.c.b16 %v2940, %v2939
        %v2956 = vpack.c.b16 %v2942, %v2941
        %v2957 = vpack.c.b16 %v2944, %v2943
        %v2958 = vpack.c.b16 %v2946, %v2945
        %v2959 = vpack.c.b16 %v2948, %v2947
        %v2960 = vpack.c.b16 %v2950, %v2949
        %v2961 = vpack.c.b16 %v2952, %v2951
        %v2962 = vpack.c.b16 %v2954, %v2953
        %2971 = vmatpush.bf16.msra.mxu0 %v2962
        %2972 = vmatpush.bf16.msra.mxu0 %v2961
        %2973 = vmatpush.bf16.msra.mxu0 %v2960
        %2974 = vmatpush.bf16.msra.mxu0 %v2959
        %2975 = vmatpush.bf16.msra.mxu0 %v2958
        %2976 = vmatpush.bf16.msra.mxu0 %v2957
        %2977 = vmatpush.bf16.msra.mxu0 %v2956
        %2978 = vmatpush.bf16.msra.mxu0 %v2955
        %2979 = vmatmul.bf16.gmra.mxu0 %v2725
        %v2980 = vpop.f32.mrf.mxu0
        %v2981 = vadd.f32 0.0, %v2980
        %v2982 = vpop.f32.mrf.mxu0
        %2983 = vdwg.mxu0
        %v3000 = vunpack.c.l.b16 %v2530
        %v3001 = vunpack.c.l.b16 %v2531
        %v3002 = vunpack.c.l.b16 %v2532
        %v3003 = vunpack.c.l.b16 %v2533
        %v3004 = vunpack.c.l.b16 %v2534
        %v3005 = vunpack.c.l.b16 %v2535
        %v3006 = vunpack.c.l.b16 %v2536
        %v3007 = vunpack.c.l.b16 %v2537
        %v3008 = vunpack.c.l.b16 %v2538
        %v3009 = vunpack.c.l.b16 %v2539
        %v3010 = vunpack.c.l.b16 %v2540
        %v3011 = vunpack.c.l.b16 %v2541
        %v3012 = vunpack.c.l.b16 %v2542
        %v3013 = vunpack.c.l.b16 %v2543
        %v3014 = vunpack.c.l.b16 %v2544
        %v3015 = vunpack.c.l.b16 %v2545
        %v3016 = vpack.c.b16 %v3001, %v3000
        %v3017 = vpack.c.b16 %v3003, %v3002
        %v3018 = vpack.c.b16 %v3005, %v3004
        %v3019 = vpack.c.b16 %v3007, %v3006
        %v3020 = vpack.c.b16 %v3009, %v3008
        %v3021 = vpack.c.b16 %v3011, %v3010
        %v3022 = vpack.c.b16 %v3013, %v3012
        %v3023 = vpack.c.b16 %v3015, %v3014
        %3032 = vmatpush.bf16.msra.mxu0 %v3023
        %3033 = vmatpush.bf16.msra.mxu0 %v3022
        %3034 = vmatpush.bf16.msra.mxu0 %v3021
        %3035 = vmatpush.bf16.msra.mxu0 %v3020
        %3036 = vmatpush.bf16.msra.mxu0 %v3019
        %3037 = vmatpush.bf16.msra.mxu0 %v3018
        %3038 = vmatpush.bf16.msra.mxu0 %v3017
        %3039 = vmatpush.bf16.msra.mxu0 %v3016
        %3040 = vmatmul.bf16.gmra.mxu0 %v2726
        %v3041 = vpop.f32.mrf.mxu0
        %v3042 = vadd.f32 0.0, %v3041
        %v3043 = vpop.f32.mrf.mxu0
        %3044 = vdwg.mxu0
        %v3061 = vunpack.c.l.b16 %v2546
        %v3062 = vunpack.c.l.b16 %v2547
        %v3063 = vunpack.c.l.b16 %v2548
        %v3064 = vunpack.c.l.b16 %v2549
        %v3065 = vunpack.c.l.b16 %v2550
        %v3066 = vunpack.c.l.b16 %v2551
        %v3067 = vunpack.c.l.b16 %v2552
        %v3068 = vunpack.c.l.b16 %v2553
        %v3069 = vunpack.c.l.b16 %v2554
        %v3070 = vunpack.c.l.b16 %v2555
        %v3071 = vunpack.c.l.b16 %v2556
        %v3072 = vunpack.c.l.b16 %v2557
        %v3073 = vunpack.c.l.b16 %v2558
        %v3074 = vunpack.c.l.b16 %v2559
        %v3075 = vunpack.c.l.b16 %v2560
        %v3076 = vunpack.c.l.b16 %v2561
        %v3077 = vpack.c.b16 %v3062, %v3061
        %v3078 = vpack.c.b16 %v3064, %v3063
        %v3079 = vpack.c.b16 %v3066, %v3065
        %v3080 = vpack.c.b16 %v3068, %v3067
        %v3081 = vpack.c.b16 %v3070, %v3069
        %v3082 = vpack.c.b16 %v3072, %v3071
        %v3083 = vpack.c.b16 %v3074, %v3073
        %v3084 = vpack.c.b16 %v3076, %v3075
        %3093 = vmatpush.bf16.msra.mxu0 %v3084
        %3094 = vmatpush.bf16.msra.mxu0 %v3083
        %3095 = vmatpush.bf16.msra.mxu0 %v3082
        %3096 = vmatpush.bf16.msra.mxu0 %v3081
        %3097 = vmatpush.bf16.msra.mxu0 %v3080
        %3098 = vmatpush.bf16.msra.mxu0 %v3079
        %3099 = vmatpush.bf16.msra.mxu0 %v3078
        %3100 = vmatpush.bf16.msra.mxu0 %v3077
        %3101 = vmatmul.bf16.gmra.mxu0 %v2727
        %v3102 = vpop.f32.mrf.mxu0
        %v3103 = vadd.f32 0.0, %v3102
        %v3104 = vpop.f32.mrf.mxu0
        %3105 = vdwg.mxu0
        %v3122 = vunpack.c.l.b16 %v2562
        %v3123 = vunpack.c.l.b16 %v2563
        %v3124 = vunpack.c.l.b16 %v2564
        %v3125 = vunpack.c.l.b16 %v2565
        %v3126 = vunpack.c.l.b16 %v2566
        %v3127 = vunpack.c.l.b16 %v2567
        %v3128 = vunpack.c.l.b16 %v2568
        %v3129 = vunpack.c.l.b16 %v2569
        %v3130 = vunpack.c.l.b16 %v2570
        %v3131 = vunpack.c.l.b16 %v2571
        %v3132 = vunpack.c.l.b16 %v2572
        %v3133 = vunpack.c.l.b16 %v2573
        %v3134 = vunpack.c.l.b16 %v2574
        %v3135 = vunpack.c.l.b16 %v2575
        %v3136 = vunpack.c.l.b16 %v2576
        %v3137 = vunpack.c.l.b16 %v2577
        %v3138 = vpack.c.b16 %v3123, %v3122
        %v3139 = vpack.c.b16 %v3125, %v3124
        %v3140 = vpack.c.b16 %v3127, %v3126
        %v3141 = vpack.c.b16 %v3129, %v3128
        %v3142 = vpack.c.b16 %v3131, %v3130
        %v3143 = vpack.c.b16 %v3133, %v3132
        %v3144 = vpack.c.b16 %v3135, %v3134
        %v3145 = vpack.c.b16 %v3137, %v3136
        %3154 = vmatpush.bf16.msra.mxu0 %v3145
        %3155 = vmatpush.bf16.msra.mxu0 %v3144
        %3156 = vmatpush.bf16.msra.mxu0 %v3143
        %3157 = vmatpush.bf16.msra.mxu0 %v3142
        %3158 = vmatpush.bf16.msra.mxu0 %v3141
        %3159 = vmatpush.bf16.msra.mxu0 %v3140
        %3160 = vmatpush.bf16.msra.mxu0 %v3139
        %3161 = vmatpush.bf16.msra.mxu0 %v3138
        %3162 = vmatmul.bf16.gmra.mxu0 %v2728
        %v3163 = vpop.f32.mrf.mxu0
        %v3164 = vadd.f32 0.0, %v3163
        %v3165 = vpop.f32.mrf.mxu0
        %3166 = vdwg.mxu0
        %v3183 = vunpack.c.l.b16 %v2578
        %v3184 = vunpack.c.l.b16 %v2579
        %v3185 = vunpack.c.l.b16 %v2580
        %v3186 = vunpack.c.l.b16 %v2581
        %v3187 = vunpack.c.l.b16 %v2582
        %v3188 = vunpack.c.l.b16 %v2583
        %v3189 = vunpack.c.l.b16 %v2584
        %v3190 = vunpack.c.l.b16 %v2585
        %v3191 = vunpack.c.l.b16 %v2586
        %v3192 = vunpack.c.l.b16 %v2587
        %v3193 = vunpack.c.l.b16 %v2588
        %v3194 = vunpack.c.l.b16 %v2589
        %v3195 = vunpack.c.l.b16 %v2590
        %v3196 = vunpack.c.l.b16 %v2591
        %v3197 = vunpack.c.l.b16 %v2592
        %v3198 = vunpack.c.l.b16 %v2593
        %v3199 = vpack.c.b16 %v3184, %v3183
        %v3200 = vpack.c.b16 %v3186, %v3185
        %v3201 = vpack.c.b16 %v3188, %v3187
        %v3202 = vpack.c.b16 %v3190, %v3189
        %v3203 = vpack.c.b16 %v3192, %v3191
        %v3204 = vpack.c.b16 %v3194, %v3193
        %v3205 = vpack.c.b16 %v3196, %v3195
        %v3206 = vpack.c.b16 %v3198, %v3197
        %3215 = vmatpush.bf16.msra.mxu0 %v3206
        %3216 = vmatpush.bf16.msra.mxu0 %v3205
        %3217 = vmatpush.bf16.msra.mxu0 %v3204
        %3218 = vmatpush.bf16.msra.mxu0 %v3203
        %3219 = vmatpush.bf16.msra.mxu0 %v3202
        %3220 = vmatpush.bf16.msra.mxu0 %v3201
        %3221 = vmatpush.bf16.msra.mxu0 %v3200
        %3222 = vmatpush.bf16.msra.mxu0 %v3199
        %3223 = vmatmul.bf16.gmra.mxu0 %v2729
        %v3224 = vpop.f32.mrf.mxu0
        %v3225 = vadd.f32 0.0, %v3224
        %v3226 = vpop.f32.mrf.mxu0
        %3227 = vdwg.mxu0
        %v3244 = vunpack.c.l.b16 %v2594
        %v3245 = vunpack.c.l.b16 %v2595
        %v3246 = vunpack.c.l.b16 %v2596
        %v3247 = vunpack.c.l.b16 %v2597
        %v3248 = vunpack.c.l.b16 %v2598
        %v3249 = vunpack.c.l.b16 %v2599
        %v3250 = vunpack.c.l.b16 %v2600
        %v3251 = vunpack.c.l.b16 %v2601
        %v3252 = vunpack.c.l.b16 %v2602
        %v3253 = vunpack.c.l.b16 %v2603
        %v3254 = vunpack.c.l.b16 %v2604
        %v3255 = vunpack.c.l.b16 %v2605
        %v3256 = vunpack.c.l.b16 %v2606
        %v3257 = vunpack.c.l.b16 %v2607
        %v3258 = vunpack.c.l.b16 %v2608
        %v3259 = vunpack.c.l.b16 %v2609
        %v3260 = vpack.c.b16 %v3245, %v3244
        %v3261 = vpack.c.b16 %v3247, %v3246
        %v3262 = vpack.c.b16 %v3249, %v3248
        %v3263 = vpack.c.b16 %v3251, %v3250
        %v3264 = vpack.c.b16 %v3253, %v3252
        %v3265 = vpack.c.b16 %v3255, %v3254
        %v3266 = vpack.c.b16 %v3257, %v3256
        %v3267 = vpack.c.b16 %v3259, %v3258
        %3276 = vmatpush.bf16.msra.mxu0 %v3267
        %3277 = vmatpush.bf16.msra.mxu0 %v3266
        %3278 = vmatpush.bf16.msra.mxu0 %v3265
        %3279 = vmatpush.bf16.msra.mxu0 %v3264
        %3280 = vmatpush.bf16.msra.mxu0 %v3263
        %3281 = vmatpush.bf16.msra.mxu0 %v3262
        %3282 = vmatpush.bf16.msra.mxu0 %v3261
        %3283 = vmatpush.bf16.msra.mxu0 %v3260
        %3284 = vmatmul.bf16.gmra.mxu0 %v2730
        %v3285 = vpop.f32.mrf.mxu0
        %v3286 = vadd.f32 0.0, %v3285
        %v3287 = vpop.f32.mrf.mxu0
        %3288 = vdwg.mxu0
        %v3305 = vunpack.c.l.b16 %v2610
        %v3306 = vunpack.c.l.b16 %v2611
        %v3307 = vunpack.c.l.b16 %v2612
        %v3308 = vunpack.c.l.b16 %v2613
        %v3309 = vunpack.c.l.b16 %v2614
        %v3310 = vunpack.c.l.b16 %v2615
        %v3311 = vunpack.c.l.b16 %v2616
        %v3312 = vunpack.c.l.b16 %v2617
        %v3313 = vunpack.c.l.b16 %v2618
        %v3314 = vunpack.c.l.b16 %v2619
        %v3315 = vunpack.c.l.b16 %v2620
        %v3316 = vunpack.c.l.b16 %v2621
        %v3317 = vunpack.c.l.b16 %v2622
        %v3318 = vunpack.c.l.b16 %v2623
        %v3319 = vunpack.c.l.b16 %v2624
        %v3320 = vunpack.c.l.b16 %v2625
        %v3321 = vpack.c.b16 %v3306, %v3305
        %v3322 = vpack.c.b16 %v3308, %v3307
        %v3323 = vpack.c.b16 %v3310, %v3309
        %v3324 = vpack.c.b16 %v3312, %v3311
        %v3325 = vpack.c.b16 %v3314, %v3313
        %v3326 = vpack.c.b16 %v3316, %v3315
        %v3327 = vpack.c.b16 %v3318, %v3317
        %v3328 = vpack.c.b16 %v3320, %v3319
        %3337 = vmatpush.bf16.msra.mxu0 %v3328
        %3338 = vmatpush.bf16.msra.mxu0 %v3327
        %3339 = vmatpush.bf16.msra.mxu0 %v3326
        %3340 = vmatpush.bf16.msra.mxu0 %v3325
        %3341 = vmatpush.bf16.msra.mxu0 %v3324
        %3342 = vmatpush.bf16.msra.mxu0 %v3323
        %3343 = vmatpush.bf16.msra.mxu0 %v3322
        %3344 = vmatpush.bf16.msra.mxu0 %v3321
        %3345 = vmatmul.bf16.gmra.mxu0 %v2731
        %v3346 = vpop.f32.mrf.mxu0
        %v3347 = vadd.f32 0.0, %v3346
        %v3348 = vpop.f32.mrf.mxu0
        %3349 = vdwg.mxu0
        %v3366 = vunpack.c.l.b16 %v2626
        %v3367 = vunpack.c.l.b16 %v2627
        %v3368 = vunpack.c.l.b16 %v2628
        %v3369 = vunpack.c.l.b16 %v2629
        %v3370 = vunpack.c.l.b16 %v2630
        %v3371 = vunpack.c.l.b16 %v2631
        %v3372 = vunpack.c.l.b16 %v2632
        %v3373 = vunpack.c.l.b16 %v2633
        %v3374 = vunpack.c.l.b16 %v2634
        %v3375 = vunpack.c.l.b16 %v2635
        %v3376 = vunpack.c.l.b16 %v2636
        %v3377 = vunpack.c.l.b16 %v2637
        %v3378 = vunpack.c.l.b16 %v2638
        %v3379 = vunpack.c.l.b16 %v2639
        %v3380 = vunpack.c.l.b16 %v2640
        %v3381 = vunpack.c.l.b16 %v2641
        %v3382 = vpack.c.b16 %v3367, %v3366
        %v3383 = vpack.c.b16 %v3369, %v3368
        %v3384 = vpack.c.b16 %v3371, %v3370
        %v3385 = vpack.c.b16 %v3373, %v3372
        %v3386 = vpack.c.b16 %v3375, %v3374
        %v3387 = vpack.c.b16 %v3377, %v3376
        %v3388 = vpack.c.b16 %v3379, %v3378
        %v3389 = vpack.c.b16 %v3381, %v3380
        %3398 = vmatpush.bf16.msra.mxu0 %v3389
        %3399 = vmatpush.bf16.msra.mxu0 %v3388
        %3400 = vmatpush.bf16.msra.mxu0 %v3387
        %3401 = vmatpush.bf16.msra.mxu0 %v3386
        %3402 = vmatpush.bf16.msra.mxu0 %v3385
        %3403 = vmatpush.bf16.msra.mxu0 %v3384
        %3404 = vmatpush.bf16.msra.mxu0 %v3383
        %3405 = vmatpush.bf16.msra.mxu0 %v3382
        %3406 = vmatmul.bf16.gmra.mxu0 %v2732
        %v3407 = vpop.f32.mrf.mxu0
        %v3408 = vadd.f32 0.0, %v3407
        %v3409 = vpop.f32.mrf.mxu0
        %3410 = vdwg.mxu0
        %v3427 = vunpack.c.l.b16 %v2642
        %v3428 = vunpack.c.l.b16 %v2643
        %v3429 = vunpack.c.l.b16 %v2644
        %v3430 = vunpack.c.l.b16 %v2645
        %v3431 = vunpack.c.l.b16 %v2646
        %v3432 = vunpack.c.l.b16 %v2647
        %v3433 = vunpack.c.l.b16 %v2648
        %v3434 = vunpack.c.l.b16 %v2649
        %v3435 = vunpack.c.l.b16 %v2650
        %v3436 = vunpack.c.l.b16 %v2651
        %v3437 = vunpack.c.l.b16 %v2652
        %v3438 = vunpack.c.l.b16 %v2653
        %v3439 = vunpack.c.l.b16 %v2654
        %v3440 = vunpack.c.l.b16 %v2655
        %v3441 = vunpack.c.l.b16 %v2656
        %v3442 = vunpack.c.l.b16 %v2657
        %v3443 = vpack.c.b16 %v3428, %v3427
        %v3444 = vpack.c.b16 %v3430, %v3429
        %v3445 = vpack.c.b16 %v3432, %v3431
        %v3446 = vpack.c.b16 %v3434, %v3433
        %v3447 = vpack.c.b16 %v3436, %v3435
        %v3448 = vpack.c.b16 %v3438, %v3437
        %v3449 = vpack.c.b16 %v3440, %v3439
        %v3450 = vpack.c.b16 %v3442, %v3441
        %3459 = vmatpush.bf16.msra.mxu0 %v3450
        %3460 = vmatpush.bf16.msra.mxu0 %v3449
        %3461 = vmatpush.bf16.msra.mxu0 %v3448
        %3462 = vmatpush.bf16.msra.mxu0 %v3447
        %3463 = vmatpush.bf16.msra.mxu0 %v3446
        %3464 = vmatpush.bf16.msra.mxu0 %v3445
        %3465 = vmatpush.bf16.msra.mxu0 %v3444
        %3466 = vmatpush.bf16.msra.mxu0 %v3443
        %3467 = vmatmul.bf16.gmra.mxu0 %v2733
        %v3468 = vpop.f32.mrf.mxu0
        %v3469 = vadd.f32 0.0, %v3468
        %v3470 = vpop.f32.mrf.mxu0
        %3471 = vdwg.mxu0
        %v3488 = vunpack.c.l.b16 %v2658
        %v3489 = vunpack.c.l.b16 %v2659
        %v3490 = vunpack.c.l.b16 %v2660
        %v3491 = vunpack.c.l.b16 %v2661
        %v3492 = vunpack.c.l.b16 %v2662
        %v3493 = vunpack.c.l.b16 %v2663
        %v3494 = vunpack.c.l.b16 %v2664
        %v3495 = vunpack.c.l.b16 %v2665
        %v3496 = vunpack.c.l.b16 %v2666
        %v3497 = vunpack.c.l.b16 %v2667
        %v3498 = vunpack.c.l.b16 %v2668
        %v3499 = vunpack.c.l.b16 %v2669
        %v3500 = vunpack.c.l.b16 %v2670
        %v3501 = vunpack.c.l.b16 %v2671
        %v3502 = vunpack.c.l.b16 %v2672
        %v3503 = vunpack.c.l.b16 %v2673
        %v3504 = vpack.c.b16 %v3489, %v3488
        %v3505 = vpack.c.b16 %v3491, %v3490
        %v3506 = vpack.c.b16 %v3493, %v3492
        %v3507 = vpack.c.b16 %v3495, %v3494
        %v3508 = vpack.c.b16 %v3497, %v3496
        %v3509 = vpack.c.b16 %v3499, %v3498
        %v3510 = vpack.c.b16 %v3501, %v3500
        %v3511 = vpack.c.b16 %v3503, %v3502
        %3520 = vmatpush.bf16.msra.mxu0 %v3511
        %3521 = vmatpush.bf16.msra.mxu0 %v3510
        %3522 = vmatpush.bf16.msra.mxu0 %v3509
        %3523 = vmatpush.bf16.msra.mxu0 %v3508
        %3524 = vmatpush.bf16.msra.mxu0 %v3507
        %3525 = vmatpush.bf16.msra.mxu0 %v3506
        %3526 = vmatpush.bf16.msra.mxu0 %v3505
        %3527 = vmatpush.bf16.msra.mxu0 %v3504
        %3528 = vmatmul.bf16.gmra.mxu0 %v2734
        %v3529 = vpop.f32.mrf.mxu0
        %v3530 = vadd.f32 0.0, %v3529
        %v3531 = vpop.f32.mrf.mxu0
        %3532 = vdwg.mxu0
        %v3549 = vunpack.c.l.b16 %v2674
        %v3550 = vunpack.c.l.b16 %v2675
        %v3551 = vunpack.c.l.b16 %v2676
        %v3552 = vunpack.c.l.b16 %v2677
        %v3553 = vunpack.c.l.b16 %v2678
        %v3554 = vunpack.c.l.b16 %v2679
        %v3555 = vunpack.c.l.b16 %v2680
        %v3556 = vunpack.c.l.b16 %v2681
        %v3557 = vunpack.c.l.b16 %v2682
        %v3558 = vunpack.c.l.b16 %v2683
        %v3559 = vunpack.c.l.b16 %v2684
        %v3560 = vunpack.c.l.b16 %v2685
        %v3561 = vunpack.c.l.b16 %v2686
        %v3562 = vunpack.c.l.b16 %v2687
        %v3563 = vunpack.c.l.b16 %v2688
        %v3564 = vunpack.c.l.b16 %v2689
        %v3565 = vpack.c.b16 %v3550, %v3549
        %v3566 = vpack.c.b16 %v3552, %v3551
        %v3567 = vpack.c.b16 %v3554, %v3553
        %v3568 = vpack.c.b16 %v3556, %v3555
        %v3569 = vpack.c.b16 %v3558, %v3557
        %v3570 = vpack.c.b16 %v3560, %v3559
        %v3571 = vpack.c.b16 %v3562, %v3561
        %v3572 = vpack.c.b16 %v3564, %v3563
        %3581 = vmatpush.bf16.msra.mxu0 %v3572
        %3582 = vmatpush.bf16.msra.mxu0 %v3571
        %3583 = vmatpush.bf16.msra.mxu0 %v3570
        %3584 = vmatpush.bf16.msra.mxu0 %v3569
        %3585 = vmatpush.bf16.msra.mxu0 %v3568
        %3586 = vmatpush.bf16.msra.mxu0 %v3567
        %3587 = vmatpush.bf16.msra.mxu0 %v3566
        %3588 = vmatpush.bf16.msra.mxu0 %v3565
        %3589 = vmatmul.bf16.gmra.mxu0 %v2735
        %v3590 = vpop.f32.mrf.mxu0
        %v3591 = vadd.f32 0.0, %v3590
        %v3592 = vpop.f32.mrf.mxu0
        %3593 = vdwg.mxu0
        %v3610 = vunpack.c.l.b16 %v2690
        %v3611 = vunpack.c.l.b16 %v2691
        %v3612 = vunpack.c.l.b16 %v2692
        %v3613 = vunpack.c.l.b16 %v2693
        %v3614 = vunpack.c.l.b16 %v2694
        %v3615 = vunpack.c.l.b16 %v2695
        %v3616 = vunpack.c.l.b16 %v2696
        %v3617 = vunpack.c.l.b16 %v2697
        %v3618 = vunpack.c.l.b16 %v2698
        %v3619 = vunpack.c.l.b16 %v2699
        %v3620 = vunpack.c.l.b16 %v2700
        %v3621 = vunpack.c.l.b16 %v2701
        %v3622 = vunpack.c.l.b16 %v2702
        %v3623 = vunpack.c.l.b16 %v2703
        %v3624 = vunpack.c.l.b16 %v2704
        %v3625 = vunpack.c.l.b16 %v2705
        %v3626 = vpack.c.b16 %v3611, %v3610
        %v3627 = vpack.c.b16 %v3613, %v3612
        %v3628 = vpack.c.b16 %v3615, %v3614
        %v3629 = vpack.c.b16 %v3617, %v3616
        %v3630 = vpack.c.b16 %v3619, %v3618
        %v3631 = vpack.c.b16 %v3621, %v3620
        %v3632 = vpack.c.b16 %v3623, %v3622
        %v3633 = vpack.c.b16 %v3625, %v3624
        %3642 = vmatpush.bf16.msra.mxu0 %v3633
        %3643 = vmatpush.bf16.msra.mxu0 %v3632
        %3644 = vmatpush.bf16.msra.mxu0 %v3631
        %3645 = vmatpush.bf16.msra.mxu0 %v3630
        %3646 = vmatpush.bf16.msra.mxu0 %v3629
        %3647 = vmatpush.bf16.msra.mxu0 %v3628
        %3648 = vmatpush.bf16.msra.mxu0 %v3627
        %3649 = vmatpush.bf16.msra.mxu0 %v3626
        %3650 = vmatmul.bf16.gmra.mxu0 %v2736
        %v3651 = vpop.f32.mrf.mxu0
        %v3652 = vadd.f32 0.0, %v3651
        %v3653 = vpop.f32.mrf.mxu0
        %3654 = vdwg.mxu0
        %v3671 = vunpack.c.l.b16 %v2706
        %v3672 = vunpack.c.l.b16 %v2707
        %v3673 = vunpack.c.l.b16 %v2708
        %v3674 = vunpack.c.l.b16 %v2709
        %v3675 = vunpack.c.l.b16 %v2710
        %v3676 = vunpack.c.l.b16 %v2711
        %v3677 = vunpack.c.l.b16 %v2712
        %v3678 = vunpack.c.l.b16 %v2713
        %v3679 = vunpack.c.l.b16 %v2714
        %v3680 = vunpack.c.l.b16 %v2715
        %v3681 = vunpack.c.l.b16 %v2716
        %v3682 = vunpack.c.l.b16 %v2717
        %v3683 = vunpack.c.l.b16 %v2718
        %v3684 = vunpack.c.l.b16 %v2719
        %v3685 = vunpack.c.l.b16 %v2720
        %v3686 = vunpack.c.l.b16 %v2721
        %v3687 = vpack.c.b16 %v3672, %v3671
        %v3688 = vpack.c.b16 %v3674, %v3673
        %v3689 = vpack.c.b16 %v3676, %v3675
        %v3690 = vpack.c.b16 %v3678, %v3677
        %v3691 = vpack.c.b16 %v3680, %v3679
        %v3692 = vpack.c.b16 %v3682, %v3681
        %v3693 = vpack.c.b16 %v3684, %v3683
        %v3694 = vpack.c.b16 %v3686, %v3685
        %3703 = vmatpush.bf16.msra.mxu0 %v3694
        %3704 = vmatpush.bf16.msra.mxu0 %v3693
        %3705 = vmatpush.bf16.msra.mxu0 %v3692
        %3706 = vmatpush.bf16.msra.mxu0 %v3691
        %3707 = vmatpush.bf16.msra.mxu0 %v3690
        %3708 = vmatpush.bf16.msra.mxu0 %v3689
        %3709 = vmatpush.bf16.msra.mxu0 %v3688
        %3710 = vmatpush.bf16.msra.mxu0 %v3687
        %3711 = vmatmul.bf16.gmra.mxu0 %v2737
        %v3712 = vpop.f32.mrf.mxu0
        %v3713 = vadd.f32 0.0, %v3712
        %v3714 = vpop.f32.mrf.mxu0
        %3715 = vdwg.mxu0
        %v3732 = vrot.slane %v2859, 7
        %vm3733 = vcmask 1041409
        %v3734 = vsel %vm3733, %v3732, %v2798
        %v3735 = vrot.slane %v2920, 6
        %vm3736 = vcmask 1042434
        %v3737 = vsel %vm3736, %v3735, %v3734
        %v3738 = vrot.slane %v2981, 5
        %vm3739 = vcmask 1043459
        %v3740 = vsel %vm3739, %v3738, %v3737
        %v3741 = vrot.slane %v3042, 4
        %vm3742 = vcmask 1044484
        %v3743 = vsel %vm3742, %v3741, %v3740
        %v3744 = vrot.slane %v3103, 3
        %vm3745 = vcmask 1045509
        %v3746 = vsel %vm3745, %v3744, %v3743
        %v3747 = vrot.slane %v3164, 2
        %vm3748 = vcmask 1046534
        %v3749 = vsel %vm3748, %v3747, %v3746
        %v3750 = vrot.slane %v3225, 1
        %vm3751 = vcmask 1047559
        %v3752 = vsel %vm3751, %v3750, %v3749
        %v3753 = vrot.slane %v3347, 7
        %v3754 = vsel %vm3733, %v3753, %v3286
        %v3755 = vrot.slane %v3408, 6
        %v3756 = vsel %vm3736, %v3755, %v3754
        %v3757 = vrot.slane %v3469, 5
        %v3758 = vsel %vm3739, %v3757, %v3756
        %v3759 = vrot.slane %v3530, 4
        %v3760 = vsel %vm3742, %v3759, %v3758
        %v3761 = vrot.slane %v3591, 3
        %v3762 = vsel %vm3745, %v3761, %v3760
        %v3763 = vrot.slane %v3652, 2
        %v3764 = vsel %vm3748, %v3763, %v3762
        %v3765 = vrot.slane %v3713, 1
        %v3766 = vsel %vm3751, %v3765, %v3764
        %v3769 = vadd.f32 %v2738, %v3752
        %v3770 = vadd.f32 %v2739, %v3766
        %3771 = vst [vmem:[#allocation2] sm:$0xff] %v3769
        %3772 = vst [vmem:[#allocation2 + $0x8] sm:$0xff] %v3770
        %v3773 = vld [vmem:[#allocation3] sm:$0xff]
        %v3774 = vld [vmem:[#allocation3 + $0x8] sm:$0xff]
        %v3775 = vunpack.c.l.bf16 %v2722
        %v3776 = vunpack.c.l.bf16 %v2723
        %v3777 = vunpack.c.l.bf16 %v2724
        %v3778 = vunpack.c.l.bf16 %v2725
        %v3779 = vunpack.c.l.bf16 %v2726
        %v3780 = vunpack.c.l.bf16 %v2727
        %v3781 = vunpack.c.l.bf16 %v2728
        %v3782 = vunpack.c.l.bf16 %v2729
        %v3783 = vunpack.c.l.bf16 %v2730
        %v3784 = vunpack.c.l.bf16 %v2731
        %v3785 = vunpack.c.l.bf16 %v2732
        %v3786 = vunpack.c.l.bf16 %v2733
        %v3787 = vunpack.c.l.bf16 %v2734
        %v3788 = vunpack.c.l.bf16 %v2735
        %v3789 = vunpack.c.l.bf16 %v2736
        %v3790 = vunpack.c.l.bf16 %v2737
        %v3807 = vperm.slane %v3775, 0
        %v3808 = vperm.slane %v3776, 0
        %v3809 = vperm.slane %v3777, 0
        %v3810 = vperm.slane %v3778, 0
        %v3811 = vperm.slane %v3779, 0
        %v3812 = vperm.slane %v3780, 0
        %v3813 = vperm.slane %v3781, 0
        %v3814 = vperm.slane %v3782, 0
        %v3815 = vperm.slane %v3783, 0
        %v3816 = vperm.slane %v3784, 0
        %v3817 = vperm.slane %v3785, 0
        %v3818 = vperm.slane %v3786, 0
        %v3819 = vperm.slane %v3787, 0
        %v3820 = vperm.slane %v3788, 0
        %v3821 = vperm.slane %v3789, 0
        %v3822 = vperm.slane %v3790, 0
        %v3823 = vsel %vm3733, %v3808, %v3807
        %v3824 = vsel %vm3736, %v3809, %v3823
        %v3825 = vsel %vm3739, %v3810, %v3824
        %v3826 = vsel %vm3742, %v3811, %v3825
        %v3827 = vsel %vm3745, %v3812, %v3826
        %v3828 = vsel %vm3748, %v3813, %v3827
        %v3829 = vsel %vm3751, %v3814, %v3828
        %v3830 = vsel %vm3733, %v3816, %v3815
        %v3831 = vsel %vm3736, %v3817, %v3830
        %v3832 = vsel %vm3739, %v3818, %v3831
        %v3833 = vsel %vm3742, %v3819, %v3832
        %v3834 = vsel %vm3745, %v3820, %v3833
        %v3835 = vsel %vm3748, %v3821, %v3834
        %v3836 = vsel %vm3751, %v3822, %v3835
        %3839 = vadd.xlane.f32.xlu0 %v3829
        %v3840 = vpop.xlane.xlu0 %3839
        %3841 = vadd.xlane.f32.xlu0 %v3836
        %v3842 = vpop.xlane.xlu0 %3841
        %v3843 = vadd.f32 %v3773, %v3840
        %v3844 = vadd.f32 %v3774, %v3842
        %vm3845 = vcmask 7168
        %3846 = vst.msk [vmem:[#allocation3] sm:$0xff] %vm3845, %v3843
        %3847 = vst.msk [vmem:[#allocation3 + $0x8] sm:$0xff] %vm3845, %v3844
        %p3848 = scmp.eq.s32.totalorder %s20, 1
        // Predicated region
        $region134: #{matchsum_forward.1} parent=120 // pred_check
          %p3849 = pneg %p3848
        $region135: #{matchsum_forward.1} parent=120 // pred_check_branch
          %3851 = sbr.rel (%p3849) target = $region137
        $region136: #{matchsum_forward.1} parent=120 // pred_region
          %v3852 = vld [vmem:[#allocation3] sm:$0xff]
          %v3853 = vld [vmem:[#allocation3 + $0x8] sm:$0xff]
          %v3854 = vmax.f32 %v3852, 1.0
          %v3855 = vmax.f32 %v3853, 1.0
          %v3856 = vrcp.pop %v3854
          %v3857 = vrcp.pop %v3855
          %v3858 = vld [vmem:[#allocation2] sm:$0xff]
          %v3859 = vld [vmem:[#allocation2 + $0x8] sm:$0xff]
          %3861 = vset.pattern.permute.xlu0 0
          %3862 = vperm.xlu0 %3861, %v3856
          %v3863 = vpop.permute.xlu0 %3862
          %3866 = vset.pattern.permute.xlu0 0
          %3867 = vperm.xlu0 %3866, %v3857
          %v3868 = vpop.permute.xlu0 %3867
          %v3870 = vmul.f32 %v3858, %v3863
          %v3871 = vmul.f32 %v3859, %v3868
          %v3872 = vpack.c.bf16 %v3871, %v3870
          %v3873 = vld [vmem:[%s2] sm:$0xf]
          %v3874 = vld [vmem:[%s2 + $0x4] sm:$0xf]
          %v3875 = vld [vmem:[%s2 + $0x8] sm:$0xf]
          %v3876 = vld [vmem:[%s2 + $0xc] sm:$0xf]
          %v3877 = vld [vmem:[%s2 + $0x10] sm:$0xf]
          %v3878 = vld [vmem:[%s2 + $0x14] sm:$0xf]
          %v3879 = vld [vmem:[%s2 + $0x18] sm:$0xf]
          %v3880 = vld [vmem:[%s2 + $0x1c] sm:$0xf]
          %v3881 = vld [vmem:[%s2 + $0x20] sm:$0xf]
          %v3882 = vld [vmem:[%s2 + $0x24] sm:$0xf]
          %v3883 = vld [vmem:[%s2 + $0x28] sm:$0xf]
          %v3884 = vld [vmem:[%s2 + $0x2c] sm:$0xf]
          %v3885 = vld [vmem:[%s2 + $0x30] sm:$0xf]
          %v3886 = vld [vmem:[%s2 + $0x34] sm:$0xf]
          %v3887 = vld [vmem:[%s2 + $0x38] sm:$0xf]
          %v3888 = vld [vmem:[%s2 + $0x3c] sm:$0xf]
          %v3889 = vld [vmem:[%s3] sm:$0x1]
          %v3891 = vperm.slane %v3889, 0
          %v3909 = vunpack.c.l.b16 %v3873
          %v3910 = vunpack.c.l.b16 %v3874
          %v3911 = vunpack.c.l.b16 %v3875
          %v3912 = vunpack.c.l.b16 %v3876
          %v3913 = vunpack.c.l.b16 %v3877
          %v3914 = vunpack.c.l.b16 %v3878
          %v3915 = vunpack.c.l.b16 %v3879
          %v3916 = vunpack.c.l.b16 %v3880
          %v3917 = vunpack.c.l.b16 %v3881
          %v3918 = vunpack.c.l.b16 %v3882
          %v3919 = vunpack.c.l.b16 %v3883
          %v3920 = vunpack.c.l.b16 %v3884
          %v3921 = vunpack.c.l.b16 %v3885
          %v3922 = vunpack.c.l.b16 %v3886
          %v3923 = vunpack.c.l.b16 %v3887
          %v3924 = vunpack.c.l.b16 %v3888
          %v3925 = vpack.c.b16 %v3910, %v3909
          %v3926 = vpack.c.b16 %v3912, %v3911
          %v3927 = vpack.c.b16 %v3914, %v3913
          %v3928 = vpack.c.b16 %v3916, %v3915
          %v3929 = vpack.c.b16 %v3918, %v3917
          %v3930 = vpack.c.b16 %v3920, %v3919
          %v3931 = vpack.c.b16 %v3922, %v3921
          %v3932 = vpack.c.b16 %v3924, %v3923
          %3941 = vmatpush.bf16.msra.mxu0 %v3932
          %3942 = vmatpush.bf16.msra.mxu0 %v3931
          %3943 = vmatpush.bf16.msra.mxu0 %v3930
          %3944 = vmatpush.bf16.msra.mxu0 %v3929
          %3945 = vmatpush.bf16.msra.mxu0 %v3928
          %3946 = vmatpush.bf16.msra.mxu0 %v3927
          %3947 = vmatpush.bf16.msra.mxu0 %v3926
          %3948 = vmatpush.bf16.msra.mxu0 %v3925
          %3949 = vmatmul.bf16.gmra.mxu0 %v3872
          %v3950 = vpop.f32.mrf.mxu0
          %v3951 = vadd.f32 %v3891, %v3950
          %v3952 = vpop.f32.mrf.mxu0
          %v3953 = vadd.f32 %v3891, %v3952
          %3954 = vdwg.mxu0
          %v3955 = vtanh.pop %v3951
          %v3956 = vtanh.pop %v3953
          %3957 = vmatpush.xpose.msra.mxu0 0.0
          %3958 = vmatpush.xpose.msra.mxu0 0.0
          %3959 = vmatpush.xpose.msra.mxu0 0.0
          %3960 = vmatpush.xpose.msra.mxu0 0.0
          %3961 = vmatpush.xpose.msra.mxu0 0.0
          %3962 = vmatpush.xpose.msra.mxu0 0.0
          %3963 = vmatpush.xpose.msra.mxu0 0.0
          %3964 = vmatpush.xpose.msra.mxu0 0.0
          %3965 = vmatpush.xpose.msra.mxu0 0.0
          %3966 = vmatpush.xpose.msra.mxu0 0.0
          %3967 = vmatpush.xpose.msra.mxu0 0.0
          %3968 = vmatpush.xpose.msra.mxu0 0.0
          %3969 = vmatpush.xpose.msra.mxu0 0.0
          %3970 = vmatpush.xpose.msra.mxu0 0.0
          %3971 = vmatpush.xpose.msra.mxu0 0.0
          %3972 = vmatpush.xpose.msra.mxu0 %v3955
          %3973 = vmatmul.f32.gmra.mxu0 %v3955
          %v3974 = vpop.f32.mrf.mxu0
          %v3975 = vadd.f32 0.0, %v3974
          %3976 = vdwg.mxu0
          %3977 = vmatpush.xpose.msra.mxu0 0.0
          %3978 = vmatpush.xpose.msra.mxu0 0.0
          %3979 = vmatpush.xpose.msra.mxu0 0.0
          %3980 = vmatpush.xpose.msra.mxu0 0.0
          %3981 = vmatpush.xpose.msra.mxu0 0.0
          %3982 = vmatpush.xpose.msra.mxu0 0.0
          %3983 = vmatpush.xpose.msra.mxu0 0.0
          %3984 = vmatpush.xpose.msra.mxu0 0.0
          %3985 = vmatpush.xpose.msra.mxu0 0.0
          %3986 = vmatpush.xpose.msra.mxu0 0.0
          %3987 = vmatpush.xpose.msra.mxu0 0.0
          %3988 = vmatpush.xpose.msra.mxu0 0.0
          %3989 = vmatpush.xpose.msra.mxu0 0.0
          %3990 = vmatpush.xpose.msra.mxu0 0.0
          %3991 = vmatpush.xpose.msra.mxu0 0.0
          %3992 = vmatpush.xpose.msra.mxu0 %v3956
          %3993 = vmatmul.f32.gmra.mxu0 %v3956
          %v3994 = vpop.f32.mrf.mxu0
          %v3995 = vadd.f32 0.0, %v3994
          %3996 = vdwg.mxu0
          %v3997 = vlaneseq
          %v3998 = vshrl.u32 %v3997, 7
          %v3999 = vlaneseq
          %v4000 = vand.u32 %v3999, 127
          %vm4001 = vcmp.eq.s32.totalorder %v3998, %v4000
          %v4002 = vsel %vm4001, 1, 0
          %v4003 = vcvt.s32.f32 %v4002
          %v4004 = vmul.f32 %v3975, %v4003
          %v4005 = vmul.f32 %v3995, %v4003
          %vm4006 = vcmask 64512
          %v4007 = vsel %vm4006, %v4004, 0.0
          %4008 = vadd.xlane.f32.xlu0 %v4007
          %v4009 = vpop.xlane.xlu0 %4008
          %v4010 = vsel %vm4006, %v4005, 0.0
          %4011 = vadd.xlane.f32.xlu0 %v4010
          %v4012 = vpop.xlane.xlu0 %4011
          %4014 = vset.pattern.permute.xlu0 0
          %4015 = vperm.xlu0 %4014, %v3975
          %v4016 = vpop.permute.xlu0 %4015
          %4019 = vset.pattern.permute.xlu0 0
          %4020 = vperm.xlu0 %4019, %v3995
          %v4021 = vpop.permute.xlu0 %4020
          %v4025 = vperm.slane %v4009, %v4000
          %v4026 = vperm.slane %v4012, %v4000
          %v4029 = vmul.f32 %v4016, %v4025
          %v4030 = vmul.f32 %v4021, %v4026
          %v4031 = vmax.f32 %v4029, 1e-16
          %v4032 = vmax.f32 %v4030, 1e-16
          %v4033 = vrsqrt.pop %v4031
          %v4034 = vmul.f32 %v4033, %v4031
          %v4035 = vmul.f32 %v4034, %v4033
          %v4036 = vmul.f32 0.5, %v4035
          %v4037 = vsub.f32 1.5, %v4036
          %v4038 = vmul.f32 %v4033, %v4037
          %vm4039 = vweird.f32 %v4031
          %vm4040 = vweird.f32 %v4033
          %vm4041 = vmor %vm4039, %vm4040
          %v4042 = vsel %vm4041, %v4033, %v4038
          %v4043 = vrsqrt.pop %v4032
          %v4044 = vmul.f32 %v4043, %v4032
          %v4045 = vmul.f32 %v4044, %v4043
          %v4046 = vmul.f32 0.5, %v4045
          %v4047 = vsub.f32 1.5, %v4046
          %v4048 = vmul.f32 %v4043, %v4047
          %vm4049 = vweird.f32 %v4032
          %vm4050 = vweird.f32 %v4043
          %vm4051 = vmor %vm4049, %vm4050
          %v4052 = vsel %vm4051, %v4043, %v4048
          %v4053 = vmul.f32 %v3975, %v4042
          %v4054 = vmul.f32 %v3995, %v4052
          %v4057 = vrot.slane %v4054, 7
          %v4058 = vsel %vm3733, %v4057, %v4053
          %v4060 = vsel %vm4006, %v4058, 0.0
          %4061 = vst [vmem:[%s2456] sm:$0x3] %v4060
        $region137: #{matchsum_forward.1} parent=120 // pred_fallthru
          _
        %p4062 = scmp.lt.s32.totalorder %s19, 1
        %s4063 = scalar_select %p4062, %s19, 1
        %s4064 = smul.addr %s4063, 2
        %s4065 = scalar_lea.vmem %s4, %s4064
        // Predicated region
        $region138: #{matchsum_forward.1} parent=120 // pred_check
          %p4066 = pneg %p143
        $region139: #{matchsum_forward.1} parent=120 // pred_check_branch
          %4068 = sbr.rel (%p4066) target = $region141
        $region140: #{matchsum_forward.1} parent=120 // pred_region
          _
        $region141: #{matchsum_forward.1} parent=120 // pred_fallthru
          _
      $region121: #{matchsum_forward.1} parent=5 // pred_fallthru
        _
      %p4069 = scmp.le.s32.totalorder 2, %s10
      // Predicated region
      $region142: #{matchsum_forward.1} parent=5 // pred_check
        %p4070 = pneg %p4069
      $region143: #{matchsum_forward.1} parent=5 // pred_check_branch
        %4072 = sbr.rel (%p4070) target = $region145
      $region144: #{matchsum_forward.1} parent=5 // pred_region
        %s4073 = ssub.s32 %s10, 2
        // Predicated region
        $region146: #{matchsum_forward.1} parent=144 // pred_check
          %p4074 = pneg %p149
        $region147: #{matchsum_forward.1} parent=144 // pred_check_branch
          %4076 = sbr.rel (%p4074) target = $region149
        $region148: #{matchsum_forward.1} parent=144 // pred_region
          %p4077 = scmp.lt.s32.totalorder %s21, 1
          %s4078 = scalar_select %p4077, %s21, 1
          %s4079 = smul.addr %s4078, 2
          %s4080 = scalar_lea.vmem %s4, %s4079
        $region149: #{matchsum_forward.1} parent=144 // pred_fallthru
          _
      $region145: #{matchsum_forward.1} parent=5 // pred_fallthru
        _
    $region6: #{matchsum_forward.1} parent=1 // loop_footer
      %s14 = sadd.s32 1, %s10
    $region7: #{matchsum_forward.1} parent=1 // loop_footer_branch
      %9 = sbr.rel target = $region3
    $region8: #{matchsum_forward.1} parent=1 // loop_exit
      _

</llo_original>
